<compile_context>
chip_gen: v7x
topology: tpu7x:2x2x1
jax: 0.10.0
libtpu: 0.0.40
codegen_flags: <defaults>
</compile_context>

<pallas_src>
import math
import functools

import jax
import jax.numpy as jnp
from jax.experimental import pallas as pl
from jax.experimental.pallas import tpu as pltpu


def _gcn_conv_kernel(x_ref, w_ref, b_ref, o_ref, patch_ref, *,
                     ks, Wp, cols, N, Cin_p):
    """Fused im2col + one MXU matmul for the whole batch.

    x_ref     : (N, Cin_p, Hp*Wp + ks - 1) zero-padded input, spatial flattened
    w_ref     : (Cout, K)                  K = ks*ks*Cin_p, rows ordered (kh, kw, ci)
    b_ref     : (Cout, 1)                  bias
    o_ref     : (Cout, N*cols)             cols = H_pad*Wp, cols % 128 == 0
    patch_ref : (K, N*cols) VMEM scratch   im2col patch matrix for all images
    """
    for n in range(N):                       # N tiny & static -> unrolled
        base = n * cols                      # multiple of 128 -> lane-aligned
        for kh in range(ks):
            # One shifted strip load per (image, kh): 7 vlds/image instead of 49.
            strip = x_ref[n, :, pl.ds(kh * Wp, cols + ks - 1)]   # (Cin_p, cols+ks-1)
            for kw in range(ks):
                t = kh * ks + kw
                # Full (8, cols)-tile, lane-aligned destination -> unmasked vst.
                patch_ref[t * Cin_p:(t + 1) * Cin_p, base:base + cols] = (
                    strip[:, kw:kw + cols])

    # Single MXU matmul over the whole batch: (Cout, K) @ (K, N*cols), f32 acc.
    acc = jnp.dot(w_ref[...], patch_ref[...], preferred_element_type=jnp.float32)
    # Per-sublane bias add, then one lane-dense output store.
    o_ref[...] = (acc + b_ref[...]).astype(o_ref.dtype)


def gcn_forward(x_nchw, weight_oihw, bias, *, ks):
    """Conv2d(inplanes, planes, kernel_size=ks, padding=ks//2) forward.

    x_nchw      : (N, Cin, H, W) float32
    weight_oihw : (Cout, Cin, ks, ks) float32
    bias        : (Cout,) float32
    returns     : (N, Cout, H, W) float32
    """
    assert ks % 2 == 1, "flat-slice im2col / 'same' padding math assumes odd ks"
    N, Cin, H, W = x_nchw.shape
    Cout = weight_oihw.shape[0]
    p = ks // 2

    # Pad channels up to a full sublane tile so every im2col store is unmasked.
    Cin_p = -(-Cin // 8) * 8

    # Unconditional lane density: pad H to a multiple of 8 (garbage output rows
    # sliced off), then round Wp up so cols = H_pad*Wp is a multiple of 128.
    H_pad = -(-H // 8) * 8
    lane_q = 128 // math.gcd(H_pad, 128)
    Wp = -(-(W + 2 * p) // lane_q) * lane_q          # >= W + 2*p
    Hp = H_pad + 2 * p
    cols = H_pad * Wp
    K = ks * ks * Cin_p

    # ---- layout glue (pure XLA, done once) ----
    # NCHW with spatial flattened is already channels-in-sublanes /
    # spatial-in-lanes; no NHWC transpose needed anywhere.
    x_pad = jnp.pad(
        x_nchw,
        ((0, 0), (0, Cin_p - Cin), (p, p + H_pad - H), (p, Wp - W - p)))
    x_flat = x_pad.reshape(N, Cin_p, Hp * Wp)
    # Tail pad of ks-1 keeps the last tap's lane window in bounds (wrapped
    # reads only land in discarded garbage columns w >= W).
    x_flat = jnp.pad(x_flat, ((0, 0), (0, 0), (0, ks - 1)))

    # Weight (Cout, Cin, kh, kw) -> (Cout, K), K ordered (kh, kw, ci_padded) to
    # match the patch-row ordering built in the kernel.
    w_khwc = jnp.transpose(weight_oihw, (0, 2, 3, 1))            # (Cout, kh, kw, Cin)
    w_khwc = jnp.pad(w_khwc, ((0, 0), (0, 0), (0, 0), (0, Cin_p - Cin)))
    w_mat = w_khwc.reshape(Cout, K)
    b2 = bias.reshape(Cout, 1)

    kernel = functools.partial(_gcn_conv_kernel, ks=ks, Wp=Wp, cols=cols,
                               N=N, Cin_p=Cin_p)

    # Cost estimate + VMEM budget derived from actual buffer sizes.
    itemsize = 4
    x_bytes = N * Cin_p * (Hp * Wp + ks - 1) * itemsize
    w_bytes = Cout * K * itemsize
    b_bytes = Cout * 1 * itemsize
    out_bytes = Cout * N * cols * itemsize
    patch_bytes = K * N * cols * itemsize
    cost = pl.CostEstimate(
        flops=2 * Cout * K * N * cols,
        transcendentals=0,
        bytes_accessed=x_bytes + w_bytes + b_bytes + out_bytes)
    vmem_need = x_bytes + w_bytes + b_bytes + out_bytes + patch_bytes
    vmem_limit = min(64 * 1024 * 1024, max(16 * 1024 * 1024, 4 * vmem_need))

    out_flat = pl.pallas_call(
        kernel,
        out_shape=jax.ShapeDtypeStruct((Cout, N * cols), x_nchw.dtype),
        scratch_shapes=[pltpu.VMEM((K, N * cols), jnp.float32)],
        cost_estimate=cost,
        compiler_params=pltpu.CompilerParams(vmem_limit_bytes=vmem_limit),
    )(x_flat, w_mat, b2)

    # (Cout, N*cols) -> (Cout, N, H_pad, Wp): free reshape; then a tiny
    # leading-axis transpose in XLA and drop the garbage rows/columns.
    out = out_flat.reshape(Cout, N, H_pad, Wp)
    out = jnp.transpose(out, (1, 0, 2, 3))[:, :, :H, :W]
    return out


gcn_forward = jax.jit(gcn_forward, static_argnames=("ks",))


def _reference_conv(x_nchw, weight_oihw, bias, *, ks):
    """Pure-JAX reference (lax conv) for validation."""
    p = ks // 2
    out = jax.lax.conv_general_dilated(
        x_nchw, weight_oihw,
        window_strides=(1, 1),
        padding=((p, p), (p, p)),
        dimension_numbers=("NCHW", "OIHW", "NCHW"),
    )
    return out + bias.reshape(1, -1, 1, 1)


if __name__ == "__main__":
    # GCN(inplanes=4, planes=8, ks=7) at small shapes.
    inplanes, planes, ks = 4, 8, 7
    N, H, W = 2, 16, 16

    key = jax.random.PRNGKey(0)
    kx, kw_, kb = jax.random.split(key, 3)

    x = jax.random.normal(kx, (N, inplanes, H, W), dtype=jnp.float32)

    # Deterministic "PyTorch-like" init: uniform(-bound, bound),
    # bound = 1/sqrt(fan_in), fan_in = inplanes * ks * ks.
    fan_in = inplanes * ks * ks
    bound = 1.0 / math.sqrt(fan_in)
    weight = jax.random.uniform(kw_, (planes, inplanes, ks, ks),
                                minval=-bound, maxval=bound, dtype=jnp.float32)
    bias = jax.random.uniform(kb, (planes,),
                              minval=-bound, maxval=bound, dtype=jnp.float32)

    out = jax.block_until_ready(gcn_forward(x, weight, bias, ks=ks))
    ref = jax.block_until_ready(_reference_conv(x, weight, bias, ks=ks))

    assert out.shape == (N, planes, H, W), out.shape
    max_err = float(jnp.max(jnp.abs(out - ref)))
    assert jnp.allclose(out, ref, atol=1e-4, rtol=1e-4), max_err

    print("KERNEL_OK")
</pallas_src>

<mosaic_0001>
module attributes {stable_mosaic.version = 11 : i64} {
  func.func @_gcn_conv_kernel(%arg0: memref<2x8x534xf32, #tpu.memory_space<vmem>>, %arg1: memref<8x392xf32, #tpu.memory_space<vmem>>, %arg2: memref<8x1xf32, #tpu.memory_space<vmem>>, %arg3: memref<8x768xf32, #tpu.memory_space<vmem>>, %arg4: memref<392x768xf32, #tpu.memory_space<vmem>>) attributes {dimension_semantics = [], scalar_prefetch = 0 : i64, scratch_operands = 1 : i64, tpu.core_type = #tpu.core_type<tc>} {
    %c0 = arith.constant 0 : index
    %c0_0 = arith.constant 0 : index
    %c0_1 = arith.constant 0 : index
    %0 = vector.load %arg0[%c0, %c0_0, %c0_1] : memref<2x8x534xf32, #tpu.memory_space<vmem>>, vector<1x8x390xf32>
    %1 = vector.shape_cast %0 : vector<1x8x390xf32> to vector<8x390xf32>
    %2 = vector.extract_strided_slice %1 {offsets = [0, 0], sizes = [8, 384], strides = [1, 1]} : vector<8x390xf32> to vector<8x384xf32>
    %c0_2 = arith.constant 0 : index
    %c0_3 = arith.constant 0 : index
    %3 = vector.load %arg4[%c0_2, %c0_3] : memref<392x768xf32, #tpu.memory_space<vmem>>, vector<8x384xf32>
    tpu.vector_store %arg4[%c0_2, %c0_3], %2 {strides = array<i32>} : memref<392x768xf32, #tpu.memory_space<vmem>>, vector<8x384xf32>,
    %4 = vector.extract_strided_slice %1 {offsets = [0, 1], sizes = [8, 384], strides = [1, 1]} : vector<8x390xf32> to vector<8x384xf32>
    %c8 = arith.constant 8 : index
    %c0_4 = arith.constant 0 : index
    %5 = vector.load %arg4[%c8, %c0_4] : memref<392x768xf32, #tpu.memory_space<vmem>>, vector<8x384xf32>
    tpu.vector_store %arg4[%c8, %c0_4], %4 {strides = array<i32>} : memref<392x768xf32, #tpu.memory_space<vmem>>, vector<8x384xf32>,
    %6 = vector.extract_strided_slice %1 {offsets = [0, 2], sizes = [8, 384], strides = [1, 1]} : vector<8x390xf32> to vector<8x384xf32>
    %c16 = arith.constant 16 : index
    %c0_5 = arith.constant 0 : index
    %7 = vector.load %arg4[%c16, %c0_5] : memref<392x768xf32, #tpu.memory_space<vmem>>, vector<8x384xf32>
    tpu.vector_store %arg4[%c16, %c0_5], %6 {strides = array<i32>} : memref<392x768xf32, #tpu.memory_space<vmem>>, vector<8x384xf32>,
    %8 = vector.extract_strided_slice %1 {offsets = [0, 3], sizes = [8, 384], strides = [1, 1]} : vector<8x390xf32> to vector<8x384xf32>
    %c24 = arith.constant 24 : index
    %c0_6 = arith.constant 0 : index
    %9 = vector.load %arg4[%c24, %c0_6] : memref<392x768xf32, #tpu.memory_space<vmem>>, vector<8x384xf32>
    tpu.vector_store %arg4[%c24, %c0_6], %8 {strides = array<i32>} : memref<392x768xf32, #tpu.memory_space<vmem>>, vector<8x384xf32>,
    %10 = vector.extract_strided_slice %1 {offsets = [0, 4], sizes = [8, 384], strides = [1, 1]} : vector<8x390xf32> to vector<8x384xf32>
    %c32 = arith.constant 32 : index
    %c0_7 = arith.constant 0 : index
    %11 = vector.load %arg4[%c32, %c0_7] : memref<392x768xf32, #tpu.memory_space<vmem>>, vector<8x384xf32>
    tpu.vector_store %arg4[%c32, %c0_7], %10 {strides = array<i32>} : memref<392x768xf32, #tpu.memory_space<vmem>>, vector<8x384xf32>,
    %12 = vector.extract_strided_slice %1 {offsets = [0, 5], sizes = [8, 384], strides = [1, 1]} : vector<8x390xf32> to vector<8x384xf32>
    %c40 = arith.constant 40 : index
    %c0_8 = arith.constant 0 : index
    %13 = vector.load %arg4[%c40, %c0_8] : memref<392x768xf32, #tpu.memory_space<vmem>>, vector<8x384xf32>
    tpu.vector_store %arg4[%c40, %c0_8], %12 {strides = array<i32>} : memref<392x768xf32, #tpu.memory_space<vmem>>, vector<8x384xf32>,
    %14 = vector.extract_strided_slice %1 {offsets = [0, 6], sizes = [8, 384], strides = [1, 1]} : vector<8x390xf32> to vector<8x384xf32>
    %c48 = arith.constant 48 : index
    %c0_9 = arith.constant 0 : index
    %15 = vector.load %arg4[%c48, %c0_9] : memref<392x768xf32, #tpu.memory_space<vmem>>, vector<8x384xf32>
    tpu.vector_store %arg4[%c48, %c0_9], %14 {strides = array<i32>} : memref<392x768xf32, #tpu.memory_space<vmem>>, vector<8x384xf32>,
    %c0_10 = arith.constant 0 : index
    %c0_11 = arith.constant 0 : index
    %c24_12 = arith.constant 24 : index
    %16 = vector.load %arg0[%c0_10, %c0_11, %c24_12] : memref<2x8x534xf32, #tpu.memory_space<vmem>>, vector<1x8x390xf32>
    %17 = vector.shape_cast %16 : vector<1x8x390xf32> to vector<8x390xf32>
    %18 = vector.extract_strided_slice %17 {offsets = [0, 0], sizes = [8, 384], strides = [1, 1]} : vector<8x390xf32> to vector<8x384xf32>
    %c56 = arith.constant 56 : index
    %c0_13 = arith.constant 0 : index
    %19 = vector.load %arg4[%c56, %c0_13] : memref<392x768xf32, #tpu.memory_space<vmem>>, vector<8x384xf32>
    tpu.vector_store %arg4[%c56, %c0_13], %18 {strides = array<i32>} : memref<392x768xf32, #tpu.memory_space<vmem>>, vector<8x384xf32>,
    %20 = vector.extract_strided_slice %17 {offsets = [0, 1], sizes = [8, 384], strides = [1, 1]} : vector<8x390xf32> to vector<8x384xf32>
    %c64 = arith.constant 64 : index
    %c0_14 = arith.constant 0 : index
    %21 = vector.load %arg4[%c64, %c0_14] : memref<392x768xf32, #tpu.memory_space<vmem>>, vector<8x384xf32>
    tpu.vector_store %arg4[%c64, %c0_14], %20 {strides = array<i32>} : memref<392x768xf32, #tpu.memory_space<vmem>>, vector<8x384xf32>,
    %22 = vector.extract_strided_slice %17 {offsets = [0, 2], sizes = [8, 384], strides = [1, 1]} : vector<8x390xf32> to vector<8x384xf32>
    %c72 = arith.constant 72 : index
    %c0_15 = arith.constant 0 : index
    %23 = vector.load %arg4[%c72, %c0_15] : memref<392x768xf32, #tpu.memory_space<vmem>>, vector<8x384xf32>
    tpu.vector_store %arg4[%c72, %c0_15], %22 {strides = array<i32>} : memref<392x768xf32, #tpu.memory_space<vmem>>, vector<8x384xf32>,
    %24 = vector.extract_strided_slice %17 {offsets = [0, 3], sizes = [8, 384], strides = [1, 1]} : vector<8x390xf32> to vector<8x384xf32>
    %c80 = arith.constant 80 : index
    %c0_16 = arith.constant 0 : index
    %25 = vector.load %arg4[%c80, %c0_16] : memref<392x768xf32, #tpu.memory_space<vmem>>, vector<8x384xf32>
    tpu.vector_store %arg4[%c80, %c0_16], %24 {strides = array<i32>} : memref<392x768xf32, #tpu.memory_space<vmem>>, vector<8x384xf32>,
    %26 = vector.extract_strided_slice %17 {offsets = [0, 4], sizes = [8, 384], strides = [1, 1]} : vector<8x390xf32> to vector<8x384xf32>
    %c88 = arith.constant 88 : index
    %c0_17 = arith.constant 0 : index
    %27 = vector.load %arg4[%c88, %c0_17] : memref<392x768xf32, #tpu.memory_space<vmem>>, vector<8x384xf32>
    tpu.vector_store %arg4[%c88, %c0_17], %26 {strides = array<i32>} : memref<392x768xf32, #tpu.memory_space<vmem>>, vector<8x384xf32>,
    %28 = vector.extract_strided_slice %17 {offsets = [0, 5], sizes = [8, 384], strides = [1, 1]} : vector<8x390xf32> to vector<8x384xf32>
    %c96 = arith.constant 96 : index
    %c0_18 = arith.constant 0 : index
    %29 = vector.load %arg4[%c96, %c0_18] : memref<392x768xf32, #tpu.memory_space<vmem>>, vector<8x384xf32>
    tpu.vector_store %arg4[%c96, %c0_18], %28 {strides = array<i32>} : memref<392x768xf32, #tpu.memory_space<vmem>>, vector<8x384xf32>,
    %30 = vector.extract_strided_slice %17 {offsets = [0, 6], sizes = [8, 384], strides = [1, 1]} : vector<8x390xf32> to vector<8x384xf32>
    %c104 = arith.constant 104 : index
    %c0_19 = arith.constant 0 : index
    %31 = vector.load %arg4[%c104, %c0_19] : memref<392x768xf32, #tpu.memory_space<vmem>>, vector<8x384xf32>
    tpu.vector_store %arg4[%c104, %c0_19], %30 {strides = array<i32>} : memref<392x768xf32, #tpu.memory_space<vmem>>, vector<8x384xf32>,
    %c0_20 = arith.constant 0 : index
    %c0_21 = arith.constant 0 : index
    %c48_22 = arith.constant 48 : index
    %32 = vector.load %arg0[%c0_20, %c0_21, %c48_22] : memref<2x8x534xf32, #tpu.memory_space<vmem>>, vector<1x8x390xf32>
    %33 = vector.shape_cast %32 : vector<1x8x390xf32> to vector<8x390xf32>
    %34 = vector.extract_strided_slice %33 {offsets = [0, 0], sizes = [8, 384], strides = [1, 1]} : vector<8x390xf32> to vector<8x384xf32>
    %c112 = arith.constant 112 : index
    %c0_23 = arith.constant 0 : index
    %35 = vector.load %arg4[%c112, %c0_23] : memref<392x768xf32, #tpu.memory_space<vmem>>, vector<8x384xf32>
    tpu.vector_store %arg4[%c112, %c0_23], %34 {strides = array<i32>} : memref<392x768xf32, #tpu.memory_space<vmem>>, vector<8x384xf32>,
    %36 = vector.extract_strided_slice %33 {offsets = [0, 1], sizes = [8, 384], strides = [1, 1]} : vector<8x390xf32> to vector<8x384xf32>
    %c120 = arith.constant 120 : index
    %c0_24 = arith.constant 0 : index
    %37 = vector.load %arg4[%c120, %c0_24] : memref<392x768xf32, #tpu.memory_space<vmem>>, vector<8x384xf32>
    tpu.vector_store %arg4[%c120, %c0_24], %36 {strides = array<i32>} : memref<392x768xf32, #tpu.memory_space<vmem>>, vector<8x384xf32>,
    %38 = vector.extract_strided_slice %33 {offsets = [0, 2], sizes = [8, 384], strides = [1, 1]} : vector<8x390xf32> to vector<8x384xf32>
    %c128 = arith.constant 128 : index
    %c0_25 = arith.constant 0 : index
    %39 = vector.load %arg4[%c128, %c0_25] : memref<392x768xf32, #tpu.memory_space<vmem>>, vector<8x384xf32>
    tpu.vector_store %arg4[%c128, %c0_25], %38 {strides = array<i32>} : memref<392x768xf32, #tpu.memory_space<vmem>>, vector<8x384xf32>,
    %40 = vector.extract_strided_slice %33 {offsets = [0, 3], sizes = [8, 384], strides = [1, 1]} : vector<8x390xf32> to vector<8x384xf32>
    %c136 = arith.constant 136 : index
    %c0_26 = arith.constant 0 : index
    %41 = vector.load %arg4[%c136, %c0_26] : memref<392x768xf32, #tpu.memory_space<vmem>>, vector<8x384xf32>
    tpu.vector_store %arg4[%c136, %c0_26], %40 {strides = array<i32>} : memref<392x768xf32, #tpu.memory_space<vmem>>, vector<8x384xf32>,
    %42 = vector.extract_strided_slice %33 {offsets = [0, 4], sizes = [8, 384], strides = [1, 1]} : vector<8x390xf32> to vector<8x384xf32>
    %c144 = arith.constant 144 : index
    %c0_27 = arith.constant 0 : index
    %43 = vector.load %arg4[%c144, %c0_27] : memref<392x768xf32, #tpu.memory_space<vmem>>, vector<8x384xf32>
    tpu.vector_store %arg4[%c144, %c0_27], %42 {strides = array<i32>} : memref<392x768xf32, #tpu.memory_space<vmem>>, vector<8x384xf32>,
    %44 = vector.extract_strided_slice %33 {offsets = [0, 5], sizes = [8, 384], strides = [1, 1]} : vector<8x390xf32> to vector<8x384xf32>
    %c152 = arith.constant 152 : index
    %c0_28 = arith.constant 0 : index
    %45 = vector.load %arg4[%c152, %c0_28] : memref<392x768xf32, #tpu.memory_space<vmem>>, vector<8x384xf32>
    tpu.vector_store %arg4[%c152, %c0_28], %44 {strides = array<i32>} : memref<392x768xf32, #tpu.memory_space<vmem>>, vector<8x384xf32>,
    %46 = vector.extract_strided_slice %33 {offsets = [0, 6], sizes = [8, 384], strides = [1, 1]} : vector<8x390xf32> to vector<8x384xf32>
    %c160 = arith.constant 160 : index
    %c0_29 = arith.constant 0 : index
    %47 = vector.load %arg4[%c160, %c0_29] : memref<392x768xf32, #tpu.memory_space<vmem>>, vector<8x384xf32>
    tpu.vector_store %arg4[%c160, %c0_29], %46 {strides = array<i32>} : memref<392x768xf32, #tpu.memory_space<vmem>>, vector<8x384xf32>,
    %c0_30 = arith.constant 0 : index
    %c0_31 = arith.constant 0 : index
    %c72_32 = arith.constant 72 : index
    %48 = vector.load %arg0[%c0_30, %c0_31, %c72_32] : memref<2x8x534xf32, #tpu.memory_space<vmem>>, vector<1x8x390xf32>
    %49 = vector.shape_cast %48 : vector<1x8x390xf32> to vector<8x390xf32>
    %50 = vector.extract_strided_slice %49 {offsets = [0, 0], sizes = [8, 384], strides = [1, 1]} : vector<8x390xf32> to vector<8x384xf32>
    %c168 = arith.constant 168 : index
    %c0_33 = arith.constant 0 : index
    %51 = vector.load %arg4[%c168, %c0_33] : memref<392x768xf32, #tpu.memory_space<vmem>>, vector<8x384xf32>
    tpu.vector_store %arg4[%c168, %c0_33], %50 {strides = array<i32>} : memref<392x768xf32, #tpu.memory_space<vmem>>, vector<8x384xf32>,
    %52 = vector.extract_strided_slice %49 {offsets = [0, 1], sizes = [8, 384], strides = [1, 1]} : vector<8x390xf32> to vector<8x384xf32>
    %c176 = arith.constant 176 : index
    %c0_34 = arith.constant 0 : index
    %53 = vector.load %arg4[%c176, %c0_34] : memref<392x768xf32, #tpu.memory_space<vmem>>, vector<8x384xf32>
    tpu.vector_store %arg4[%c176, %c0_34], %52 {strides = array<i32>} : memref<392x768xf32, #tpu.memory_space<vmem>>, vector<8x384xf32>,
    %54 = vector.extract_strided_slice %49 {offsets = [0, 2], sizes = [8, 384], strides = [1, 1]} : vector<8x390xf32> to vector<8x384xf32>
    %c184 = arith.constant 184 : index
    %c0_35 = arith.constant 0 : index
    %55 = vector.load %arg4[%c184, %c0_35] : memref<392x768xf32, #tpu.memory_space<vmem>>, vector<8x384xf32>
    tpu.vector_store %arg4[%c184, %c0_35], %54 {strides = array<i32>} : memref<392x768xf32, #tpu.memory_space<vmem>>, vector<8x384xf32>,
    %56 = vector.extract_strided_slice %49 {offsets = [0, 3], sizes = [8, 384], strides = [1, 1]} : vector<8x390xf32> to vector<8x384xf32>
    %c192 = arith.constant 192 : index
    %c0_36 = arith.constant 0 : index
    %57 = vector.load %arg4[%c192, %c0_36] : memref<392x768xf32, #tpu.memory_space<vmem>>, vector<8x384xf32>
    tpu.vector_store %arg4[%c192, %c0_36], %56 {strides = array<i32>} : memref<392x768xf32, #tpu.memory_space<vmem>>, vector<8x384xf32>,
    %58 = vector.extract_strided_slice %49 {offsets = [0, 4], sizes = [8, 384], strides = [1, 1]} : vector<8x390xf32> to vector<8x384xf32>
    %c200 = arith.constant 200 : index
    %c0_37 = arith.constant 0 : index
    %59 = vector.load %arg4[%c200, %c0_37] : memref<392x768xf32, #tpu.memory_space<vmem>>, vector<8x384xf32>
    tpu.vector_store %arg4[%c200, %c0_37], %58 {strides = array<i32>} : memref<392x768xf32, #tpu.memory_space<vmem>>, vector<8x384xf32>,
    %60 = vector.extract_strided_slice %49 {offsets = [0, 5], sizes = [8, 384], strides = [1, 1]} : vector<8x390xf32> to vector<8x384xf32>
    %c208 = arith.constant 208 : index
    %c0_38 = arith.constant 0 : index
    %61 = vector.load %arg4[%c208, %c0_38] : memref<392x768xf32, #tpu.memory_space<vmem>>, vector<8x384xf32>
    tpu.vector_store %arg4[%c208, %c0_38], %60 {strides = array<i32>} : memref<392x768xf32, #tpu.memory_space<vmem>>, vector<8x384xf32>,
    %62 = vector.extract_strided_slice %49 {offsets = [0, 6], sizes = [8, 384], strides = [1, 1]} : vector<8x390xf32> to vector<8x384xf32>
    %c216 = arith.constant 216 : index
    %c0_39 = arith.constant 0 : index
    %63 = vector.load %arg4[%c216, %c0_39] : memref<392x768xf32, #tpu.memory_space<vmem>>, vector<8x384xf32>
    tpu.vector_store %arg4[%c216, %c0_39], %62 {strides = array<i32>} : memref<392x768xf32, #tpu.memory_space<vmem>>, vector<8x384xf32>,
    %c0_40 = arith.constant 0 : index
    %c0_41 = arith.constant 0 : index
    %c96_42 = arith.constant 96 : index
    %64 = vector.load %arg0[%c0_40, %c0_41, %c96_42] : memref<2x8x534xf32, #tpu.memory_space<vmem>>, vector<1x8x390xf32>
    %65 = vector.shape_cast %64 : vector<1x8x390xf32> to vector<8x390xf32>
    %66 = vector.extract_strided_slice %65 {offsets = [0, 0], sizes = [8, 384], strides = [1, 1]} : vector<8x390xf32> to vector<8x384xf32>
    %c224 = arith.constant 224 : index
    %c0_43 = arith.constant 0 : index
    %67 = vector.load %arg4[%c224, %c0_43] : memref<392x768xf32, #tpu.memory_space<vmem>>, vector<8x384xf32>
    tpu.vector_store %arg4[%c224, %c0_43], %66 {strides = array<i32>} : memref<392x768xf32, #tpu.memory_space<vmem>>, vector<8x384xf32>,
    %68 = vector.extract_strided_slice %65 {offsets = [0, 1], sizes = [8, 384], strides = [1, 1]} : vector<8x390xf32> to vector<8x384xf32>
    %c232 = arith.constant 232 : index
    %c0_44 = arith.constant 0 : index
    %69 = vector.load %arg4[%c232, %c0_44] : memref<392x768xf32, #tpu.memory_space<vmem>>, vector<8x384xf32>
    tpu.vector_store %arg4[%c232, %c0_44], %68 {strides = array<i32>} : memref<392x768xf32, #tpu.memory_space<vmem>>, vector<8x384xf32>,
    %70 = vector.extract_strided_slice %65 {offsets = [0, 2], sizes = [8, 384], strides = [1, 1]} : vector<8x390xf32> to vector<8x384xf32>
    %c240 = arith.constant 240 : index
    %c0_45 = arith.constant 0 : index
    %71 = vector.load %arg4[%c240, %c0_45] : memref<392x768xf32, #tpu.memory_space<vmem>>, vector<8x384xf32>
    tpu.vector_store %arg4[%c240, %c0_45], %70 {strides = array<i32>} : memref<392x768xf32, #tpu.memory_space<vmem>>, vector<8x384xf32>,
    %72 = vector.extract_strided_slice %65 {offsets = [0, 3], sizes = [8, 384], strides = [1, 1]} : vector<8x390xf32> to vector<8x384xf32>
    %c248 = arith.constant 248 : index
    %c0_46 = arith.constant 0 : index
    %73 = vector.load %arg4[%c248, %c0_46] : memref<392x768xf32, #tpu.memory_space<vmem>>, vector<8x384xf32>
    tpu.vector_store %arg4[%c248, %c0_46], %72 {strides = array<i32>} : memref<392x768xf32, #tpu.memory_space<vmem>>, vector<8x384xf32>,
    %74 = vector.extract_strided_slice %65 {offsets = [0, 4], sizes = [8, 384], strides = [1, 1]} : vector<8x390xf32> to vector<8x384xf32>
    %c256 = arith.constant 256 : index
    %c0_47 = arith.constant 0 : index
    %75 = vector.load %arg4[%c256, %c0_47] : memref<392x768xf32, #tpu.memory_space<vmem>>, vector<8x384xf32>
    tpu.vector_store %arg4[%c256, %c0_47], %74 {strides = array<i32>} : memref<392x768xf32, #tpu.memory_space<vmem>>, vector<8x384xf32>,
    %76 = vector.extract_strided_slice %65 {offsets = [0, 5], sizes = [8, 384], strides = [1, 1]} : vector<8x390xf32> to vector<8x384xf32>
    %c264 = arith.constant 264 : index
    %c0_48 = arith.constant 0 : index
    %77 = vector.load %arg4[%c264, %c0_48] : memref<392x768xf32, #tpu.memory_space<vmem>>, vector<8x384xf32>
    tpu.vector_store %arg4[%c264, %c0_48], %76 {strides = array<i32>} : memref<392x768xf32, #tpu.memory_space<vmem>>, vector<8x384xf32>,
    %78 = vector.extract_strided_slice %65 {offsets = [0, 6], sizes = [8, 384], strides = [1, 1]} : vector<8x390xf32> to vector<8x384xf32>
    %c272 = arith.constant 272 : index
    %c0_49 = arith.constant 0 : index
    %79 = vector.load %arg4[%c272, %c0_49] : memref<392x768xf32, #tpu.memory_space<vmem>>, vector<8x384xf32>
    tpu.vector_store %arg4[%c272, %c0_49], %78 {strides = array<i32>} : memref<392x768xf32, #tpu.memory_space<vmem>>, vector<8x384xf32>,
    %c0_50 = arith.constant 0 : index
    %c0_51 = arith.constant 0 : index
    %c120_52 = arith.constant 120 : index
    %80 = vector.load %arg0[%c0_50, %c0_51, %c120_52] : memref<2x8x534xf32, #tpu.memory_space<vmem>>, vector<1x8x390xf32>
    %81 = vector.shape_cast %80 : vector<1x8x390xf32> to vector<8x390xf32>
    %82 = vector.extract_strided_slice %81 {offsets = [0, 0], sizes = [8, 384], strides = [1, 1]} : vector<8x390xf32> to vector<8x384xf32>
    %c280 = arith.constant 280 : index
    %c0_53 = arith.constant 0 : index
    %83 = vector.load %arg4[%c280, %c0_53] : memref<392x768xf32, #tpu.memory_space<vmem>>, vector<8x384xf32>
    tpu.vector_store %arg4[%c280, %c0_53], %82 {strides = array<i32>} : memref<392x768xf32, #tpu.memory_space<vmem>>, vector<8x384xf32>,
    %84 = vector.extract_strided_slice %81 {offsets = [0, 1], sizes = [8, 384], strides = [1, 1]} : vector<8x390xf32> to vector<8x384xf32>
    %c288 = arith.constant 288 : index
    %c0_54 = arith.constant 0 : index
    %85 = vector.load %arg4[%c288, %c0_54] : memref<392x768xf32, #tpu.memory_space<vmem>>, vector<8x384xf32>
    tpu.vector_store %arg4[%c288, %c0_54], %84 {strides = array<i32>} : memref<392x768xf32, #tpu.memory_space<vmem>>, vector<8x384xf32>,
    %86 = vector.extract_strided_slice %81 {offsets = [0, 2], sizes = [8, 384], strides = [1, 1]} : vector<8x390xf32> to vector<8x384xf32>
    %c296 = arith.constant 296 : index
    %c0_55 = arith.constant 0 : index
    %87 = vector.load %arg4[%c296, %c0_55] : memref<392x768xf32, #tpu.memory_space<vmem>>, vector<8x384xf32>
    tpu.vector_store %arg4[%c296, %c0_55], %86 {strides = array<i32>} : memref<392x768xf32, #tpu.memory_space<vmem>>, vector<8x384xf32>,
    %88 = vector.extract_strided_slice %81 {offsets = [0, 3], sizes = [8, 384], strides = [1, 1]} : vector<8x390xf32> to vector<8x384xf32>
    %c304 = arith.constant 304 : index
    %c0_56 = arith.constant 0 : index
    %89 = vector.load %arg4[%c304, %c0_56] : memref<392x768xf32, #tpu.memory_space<vmem>>, vector<8x384xf32>
    tpu.vector_store %arg4[%c304, %c0_56], %88 {strides = array<i32>} : memref<392x768xf32, #tpu.memory_space<vmem>>, vector<8x384xf32>,
    %90 = vector.extract_strided_slice %81 {offsets = [0, 4], sizes = [8, 384], strides = [1, 1]} : vector<8x390xf32> to vector<8x384xf32>
    %c312 = arith.constant 312 : index
    %c0_57 = arith.constant 0 : index
    %91 = vector.load %arg4[%c312, %c0_57] : memref<392x768xf32, #tpu.memory_space<vmem>>, vector<8x384xf32>
    tpu.vector_store %arg4[%c312, %c0_57], %90 {strides = array<i32>} : memref<392x768xf32, #tpu.memory_space<vmem>>, vector<8x384xf32>,
    %92 = vector.extract_strided_slice %81 {offsets = [0, 5], sizes = [8, 384], strides = [1, 1]} : vector<8x390xf32> to vector<8x384xf32>
    %c320 = arith.constant 320 : index
    %c0_58 = arith.constant 0 : index
    %93 = vector.load %arg4[%c320, %c0_58] : memref<392x768xf32, #tpu.memory_space<vmem>>, vector<8x384xf32>
    tpu.vector_store %arg4[%c320, %c0_58], %92 {strides = array<i32>} : memref<392x768xf32, #tpu.memory_space<vmem>>, vector<8x384xf32>,
    %94 = vector.extract_strided_slice %81 {offsets = [0, 6], sizes = [8, 384], strides = [1, 1]} : vector<8x390xf32> to vector<8x384xf32>
    %c328 = arith.constant 328 : index
    %c0_59 = arith.constant 0 : index
    %95 = vector.load %arg4[%c328, %c0_59] : memref<392x768xf32, #tpu.memory_space<vmem>>, vector<8x384xf32>
    tpu.vector_store %arg4[%c328, %c0_59], %94 {strides = array<i32>} : memref<392x768xf32, #tpu.memory_space<vmem>>, vector<8x384xf32>,
    %c0_60 = arith.constant 0 : index
    %c0_61 = arith.constant 0 : index
    %c144_62 = arith.constant 144 : index
    %96 = vector.load %arg0[%c0_60, %c0_61, %c144_62] : memref<2x8x534xf32, #tpu.memory_space<vmem>>, vector<1x8x390xf32>
    %97 = vector.shape_cast %96 : vector<1x8x390xf32> to vector<8x390xf32>
    %98 = vector.extract_strided_slice %97 {offsets = [0, 0], sizes = [8, 384], strides = [1, 1]} : vector<8x390xf32> to vector<8x384xf32>
    %c336 = arith.constant 336 : index
    %c0_63 = arith.constant 0 : index
    %99 = vector.load %arg4[%c336, %c0_63] : memref<392x768xf32, #tpu.memory_space<vmem>>, vector<8x384xf32>
    tpu.vector_store %arg4[%c336, %c0_63], %98 {strides = array<i32>} : memref<392x768xf32, #tpu.memory_space<vmem>>, vector<8x384xf32>,
    %100 = vector.extract_strided_slice %97 {offsets = [0, 1], sizes = [8, 384], strides = [1, 1]} : vector<8x390xf32> to vector<8x384xf32>
    %c344 = arith.constant 344 : index
    %c0_64 = arith.constant 0 : index
    %101 = vector.load %arg4[%c344, %c0_64] : memref<392x768xf32, #tpu.memory_space<vmem>>, vector<8x384xf32>
    tpu.vector_store %arg4[%c344, %c0_64], %100 {strides = array<i32>} : memref<392x768xf32, #tpu.memory_space<vmem>>, vector<8x384xf32>,
    %102 = vector.extract_strided_slice %97 {offsets = [0, 2], sizes = [8, 384], strides = [1, 1]} : vector<8x390xf32> to vector<8x384xf32>
    %c352 = arith.constant 352 : index
    %c0_65 = arith.constant 0 : index
    %103 = vector.load %arg4[%c352, %c0_65] : memref<392x768xf32, #tpu.memory_space<vmem>>, vector<8x384xf32>
    tpu.vector_store %arg4[%c352, %c0_65], %102 {strides = array<i32>} : memref<392x768xf32, #tpu.memory_space<vmem>>, vector<8x384xf32>,
    %104 = vector.extract_strided_slice %97 {offsets = [0, 3], sizes = [8, 384], strides = [1, 1]} : vector<8x390xf32> to vector<8x384xf32>
    %c360 = arith.constant 360 : index
    %c0_66 = arith.constant 0 : index
    %105 = vector.load %arg4[%c360, %c0_66] : memref<392x768xf32, #tpu.memory_space<vmem>>, vector<8x384xf32>
    tpu.vector_store %arg4[%c360, %c0_66], %104 {strides = array<i32>} : memref<392x768xf32, #tpu.memory_space<vmem>>, vector<8x384xf32>,
    %106 = vector.extract_strided_slice %97 {offsets = [0, 4], sizes = [8, 384], strides = [1, 1]} : vector<8x390xf32> to vector<8x384xf32>
    %c368 = arith.constant 368 : index
    %c0_67 = arith.constant 0 : index
    %107 = vector.load %arg4[%c368, %c0_67] : memref<392x768xf32, #tpu.memory_space<vmem>>, vector<8x384xf32>
    tpu.vector_store %arg4[%c368, %c0_67], %106 {strides = array<i32>} : memref<392x768xf32, #tpu.memory_space<vmem>>, vector<8x384xf32>,
    %108 = vector.extract_strided_slice %97 {offsets = [0, 5], sizes = [8, 384], strides = [1, 1]} : vector<8x390xf32> to vector<8x384xf32>
    %c376 = arith.constant 376 : index
    %c0_68 = arith.constant 0 : index
    %109 = vector.load %arg4[%c376, %c0_68] : memref<392x768xf32, #tpu.memory_space<vmem>>, vector<8x384xf32>
    tpu.vector_store %arg4[%c376, %c0_68], %108 {strides = array<i32>} : memref<392x768xf32, #tpu.memory_space<vmem>>, vector<8x384xf32>,
    %110 = vector.extract_strided_slice %97 {offsets = [0, 6], sizes = [8, 384], strides = [1, 1]} : vector<8x390xf32> to vector<8x384xf32>
    %c384 = arith.constant 384 : index
    %c0_69 = arith.constant 0 : index
    %111 = vector.load %arg4[%c384, %c0_69] : memref<392x768xf32, #tpu.memory_space<vmem>>, vector<8x384xf32>
    tpu.vector_store %arg4[%c384, %c0_69], %110 {strides = array<i32>} : memref<392x768xf32, #tpu.memory_space<vmem>>, vector<8x384xf32>,
    %c1 = arith.constant 1 : index
    %c0_70 = arith.constant 0 : index
    %c0_71 = arith.constant 0 : index
    %112 = vector.load %arg0[%c1, %c0_70, %c0_71] : memref<2x8x534xf32, #tpu.memory_space<vmem>>, vector<1x8x390xf32>
    %113 = vector.shape_cast %112 : vector<1x8x390xf32> to vector<8x390xf32>
    %114 = vector.extract_strided_slice %113 {offsets = [0, 0], sizes = [8, 384], strides = [1, 1]} : vector<8x390xf32> to vector<8x384xf32>
    %c0_72 = arith.constant 0 : index
    %c384_73 = arith.constant 384 : index
    %115 = vector.load %arg4[%c0_72, %c384_73] : memref<392x768xf32, #tpu.memory_space<vmem>>, vector<8x384xf32>
    tpu.vector_store %arg4[%c0_72, %c384_73], %114 {strides = array<i32>} : memref<392x768xf32, #tpu.memory_space<vmem>>, vector<8x384xf32>,
    %116 = vector.extract_strided_slice %113 {offsets = [0, 1], sizes = [8, 384], strides = [1, 1]} : vector<8x390xf32> to vector<8x384xf32>
    %c8_74 = arith.constant 8 : index
    %c384_75 = arith.constant 384 : index
    %117 = vector.load %arg4[%c8_74, %c384_75] : memref<392x768xf32, #tpu.memory_space<vmem>>, vector<8x384xf32>
    tpu.vector_store %arg4[%c8_74, %c384_75], %116 {strides = array<i32>} : memref<392x768xf32, #tpu.memory_space<vmem>>, vector<8x384xf32>,
    %118 = vector.extract_strided_slice %113 {offsets = [0, 2], sizes = [8, 384], strides = [1, 1]} : vector<8x390xf32> to vector<8x384xf32>
    %c16_76 = arith.constant 16 : index
    %c384_77 = arith.constant 384 : index
    %119 = vector.load %arg4[%c16_76, %c384_77] : memref<392x768xf32, #tpu.memory_space<vmem>>, vector<8x384xf32>
    tpu.vector_store %arg4[%c16_76, %c384_77], %118 {strides = array<i32>} : memref<392x768xf32, #tpu.memory_space<vmem>>, vector<8x384xf32>,
    %120 = vector.extract_strided_slice %113 {offsets = [0, 3], sizes = [8, 384], strides = [1, 1]} : vector<8x390xf32> to vector<8x384xf32>
    %c24_78 = arith.constant 24 : index
    %c384_79 = arith.constant 384 : index
    %121 = vector.load %arg4[%c24_78, %c384_79] : memref<392x768xf32, #tpu.memory_space<vmem>>, vector<8x384xf32>
    tpu.vector_store %arg4[%c24_78, %c384_79], %120 {strides = array<i32>} : memref<392x768xf32, #tpu.memory_space<vmem>>, vector<8x384xf32>,
    %122 = vector.extract_strided_slice %113 {offsets = [0, 4], sizes = [8, 384], strides = [1, 1]} : vector<8x390xf32> to vector<8x384xf32>
    %c32_80 = arith.constant 32 : index
    %c384_81 = arith.constant 384 : index
    %123 = vector.load %arg4[%c32_80, %c384_81] : memref<392x768xf32, #tpu.memory_space<vmem>>, vector<8x384xf32>
    tpu.vector_store %arg4[%c32_80, %c384_81], %122 {strides = array<i32>} : memref<392x768xf32, #tpu.memory_space<vmem>>, vector<8x384xf32>,
    %124 = vector.extract_strided_slice %113 {offsets = [0, 5], sizes = [8, 384], strides = [1, 1]} : vector<8x390xf32> to vector<8x384xf32>
    %c40_82 = arith.constant 40 : index
    %c384_83 = arith.constant 384 : index
    %125 = vector.load %arg4[%c40_82, %c384_83] : memref<392x768xf32, #tpu.memory_space<vmem>>, vector<8x384xf32>
    tpu.vector_store %arg4[%c40_82, %c384_83], %124 {strides = array<i32>} : memref<392x768xf32, #tpu.memory_space<vmem>>, vector<8x384xf32>,
    %126 = vector.extract_strided_slice %113 {offsets = [0, 6], sizes = [8, 384], strides = [1, 1]} : vector<8x390xf32> to vector<8x384xf32>
    %c48_84 = arith.constant 48 : index
    %c384_85 = arith.constant 384 : index
    %127 = vector.load %arg4[%c48_84, %c384_85] : memref<392x768xf32, #tpu.memory_space<vmem>>, vector<8x384xf32>
    tpu.vector_store %arg4[%c48_84, %c384_85], %126 {strides = array<i32>} : memref<392x768xf32, #tpu.memory_space<vmem>>, vector<8x384xf32>,
    %c1_86 = arith.constant 1 : index
    %c0_87 = arith.constant 0 : index
    %c24_88 = arith.constant 24 : index
    %128 = vector.load %arg0[%c1_86, %c0_87, %c24_88] : memref<2x8x534xf32, #tpu.memory_space<vmem>>, vector<1x8x390xf32>
    %129 = vector.shape_cast %128 : vector<1x8x390xf32> to vector<8x390xf32>
    %130 = vector.extract_strided_slice %129 {offsets = [0, 0], sizes = [8, 384], strides = [1, 1]} : vector<8x390xf32> to vector<8x384xf32>
    %c56_89 = arith.constant 56 : index
    %c384_90 = arith.constant 384 : index
    %131 = vector.load %arg4[%c56_89, %c384_90] : memref<392x768xf32, #tpu.memory_space<vmem>>, vector<8x384xf32>
    tpu.vector_store %arg4[%c56_89, %c384_90], %130 {strides = array<i32>} : memref<392x768xf32, #tpu.memory_space<vmem>>, vector<8x384xf32>,
    %132 = vector.extract_strided_slice %129 {offsets = [0, 1], sizes = [8, 384], strides = [1, 1]} : vector<8x390xf32> to vector<8x384xf32>
    %c64_91 = arith.constant 64 : index
    %c384_92 = arith.constant 384 : index
    %133 = vector.load %arg4[%c64_91, %c384_92] : memref<392x768xf32, #tpu.memory_space<vmem>>, vector<8x384xf32>
    tpu.vector_store %arg4[%c64_91, %c384_92], %132 {strides = array<i32>} : memref<392x768xf32, #tpu.memory_space<vmem>>, vector<8x384xf32>,
    %134 = vector.extract_strided_slice %129 {offsets = [0, 2], sizes = [8, 384], strides = [1, 1]} : vector<8x390xf32> to vector<8x384xf32>
    %c72_93 = arith.constant 72 : index
    %c384_94 = arith.constant 384 : index
    %135 = vector.load %arg4[%c72_93, %c384_94] : memref<392x768xf32, #tpu.memory_space<vmem>>, vector<8x384xf32>
    tpu.vector_store %arg4[%c72_93, %c384_94], %134 {strides = array<i32>} : memref<392x768xf32, #tpu.memory_space<vmem>>, vector<8x384xf32>,
    %136 = vector.extract_strided_slice %129 {offsets = [0, 3], sizes = [8, 384], strides = [1, 1]} : vector<8x390xf32> to vector<8x384xf32>
    %c80_95 = arith.constant 80 : index
    %c384_96 = arith.constant 384 : index
    %137 = vector.load %arg4[%c80_95, %c384_96] : memref<392x768xf32, #tpu.memory_space<vmem>>, vector<8x384xf32>
    tpu.vector_store %arg4[%c80_95, %c384_96], %136 {strides = array<i32>} : memref<392x768xf32, #tpu.memory_space<vmem>>, vector<8x384xf32>,
    %138 = vector.extract_strided_slice %129 {offsets = [0, 4], sizes = [8, 384], strides = [1, 1]} : vector<8x390xf32> to vector<8x384xf32>
    %c88_97 = arith.constant 88 : index
    %c384_98 = arith.constant 384 : index
    %139 = vector.load %arg4[%c88_97, %c384_98] : memref<392x768xf32, #tpu.memory_space<vmem>>, vector<8x384xf32>
    tpu.vector_store %arg4[%c88_97, %c384_98], %138 {strides = array<i32>} : memref<392x768xf32, #tpu.memory_space<vmem>>, vector<8x384xf32>,
    %140 = vector.extract_strided_slice %129 {offsets = [0, 5], sizes = [8, 384], strides = [1, 1]} : vector<8x390xf32> to vector<8x384xf32>
    %c96_99 = arith.constant 96 : index
    %c384_100 = arith.constant 384 : index
    %141 = vector.load %arg4[%c96_99, %c384_100] : memref<392x768xf32, #tpu.memory_space<vmem>>, vector<8x384xf32>
    tpu.vector_store %arg4[%c96_99, %c384_100], %140 {strides = array<i32>} : memref<392x768xf32, #tpu.memory_space<vmem>>, vector<8x384xf32>,
    %142 = vector.extract_strided_slice %129 {offsets = [0, 6], sizes = [8, 384], strides = [1, 1]} : vector<8x390xf32> to vector<8x384xf32>
    %c104_101 = arith.constant 104 : index
    %c384_102 = arith.constant 384 : index
    %143 = vector.load %arg4[%c104_101, %c384_102] : memref<392x768xf32, #tpu.memory_space<vmem>>, vector<8x384xf32>
    tpu.vector_store %arg4[%c104_101, %c384_102], %142 {strides = array<i32>} : memref<392x768xf32, #tpu.memory_space<vmem>>, vector<8x384xf32>,
    %c1_103 = arith.constant 1 : index
    %c0_104 = arith.constant 0 : index
    %c48_105 = arith.constant 48 : index
    %144 = vector.load %arg0[%c1_103, %c0_104, %c48_105] : memref<2x8x534xf32, #tpu.memory_space<vmem>>, vector<1x8x390xf32>
    %145 = vector.shape_cast %144 : vector<1x8x390xf32> to vector<8x390xf32>
    %146 = vector.extract_strided_slice %145 {offsets = [0, 0], sizes = [8, 384], strides = [1, 1]} : vector<8x390xf32> to vector<8x384xf32>
    %c112_106 = arith.constant 112 : index
    %c384_107 = arith.constant 384 : index
    %147 = vector.load %arg4[%c112_106, %c384_107] : memref<392x768xf32, #tpu.memory_space<vmem>>, vector<8x384xf32>
    tpu.vector_store %arg4[%c112_106, %c384_107], %146 {strides = array<i32>} : memref<392x768xf32, #tpu.memory_space<vmem>>, vector<8x384xf32>,
    %148 = vector.extract_strided_slice %145 {offsets = [0, 1], sizes = [8, 384], strides = [1, 1]} : vector<8x390xf32> to vector<8x384xf32>
    %c120_108 = arith.constant 120 : index
    %c384_109 = arith.constant 384 : index
    %149 = vector.load %arg4[%c120_108, %c384_109] : memref<392x768xf32, #tpu.memory_space<vmem>>, vector<8x384xf32>
    tpu.vector_store %arg4[%c120_108, %c384_109], %148 {strides = array<i32>} : memref<392x768xf32, #tpu.memory_space<vmem>>, vector<8x384xf32>,
    %150 = vector.extract_strided_slice %145 {offsets = [0, 2], sizes = [8, 384], strides = [1, 1]} : vector<8x390xf32> to vector<8x384xf32>
    %c128_110 = arith.constant 128 : index
    %c384_111 = arith.constant 384 : index
    %151 = vector.load %arg4[%c128_110, %c384_111] : memref<392x768xf32, #tpu.memory_space<vmem>>, vector<8x384xf32>
    tpu.vector_store %arg4[%c128_110, %c384_111], %150 {strides = array<i32>} : memref<392x768xf32, #tpu.memory_space<vmem>>, vector<8x384xf32>,
    %152 = vector.extract_strided_slice %145 {offsets = [0, 3], sizes = [8, 384], strides = [1, 1]} : vector<8x390xf32> to vector<8x384xf32>
    %c136_112 = arith.constant 136 : index
    %c384_113 = arith.constant 384 : index
    %153 = vector.load %arg4[%c136_112, %c384_113] : memref<392x768xf32, #tpu.memory_space<vmem>>, vector<8x384xf32>
    tpu.vector_store %arg4[%c136_112, %c384_113], %152 {strides = array<i32>} : memref<392x768xf32, #tpu.memory_space<vmem>>, vector<8x384xf32>,
    %154 = vector.extract_strided_slice %145 {offsets = [0, 4], sizes = [8, 384], strides = [1, 1]} : vector<8x390xf32> to vector<8x384xf32>
    %c144_114 = arith.constant 144 : index
    %c384_115 = arith.constant 384 : index
    %155 = vector.load %arg4[%c144_114, %c384_115] : memref<392x768xf32, #tpu.memory_space<vmem>>, vector<8x384xf32>
    tpu.vector_store %arg4[%c144_114, %c384_115], %154 {strides = array<i32>} : memref<392x768xf32, #tpu.memory_space<vmem>>, vector<8x384xf32>,
    %156 = vector.extract_strided_slice %145 {offsets = [0, 5], sizes = [8, 384], strides = [1, 1]} : vector<8x390xf32> to vector<8x384xf32>
    %c152_116 = arith.constant 152 : index
    %c384_117 = arith.constant 384 : index
    %157 = vector.load %arg4[%c152_116, %c384_117] : memref<392x768xf32, #tpu.memory_space<vmem>>, vector<8x384xf32>
    tpu.vector_store %arg4[%c152_116, %c384_117], %156 {strides = array<i32>} : memref<392x768xf32, #tpu.memory_space<vmem>>, vector<8x384xf32>,
    %158 = vector.extract_strided_slice %145 {offsets = [0, 6], sizes = [8, 384], strides = [1, 1]} : vector<8x390xf32> to vector<8x384xf32>
    %c160_118 = arith.constant 160 : index
    %c384_119 = arith.constant 384 : index
    %159 = vector.load %arg4[%c160_118, %c384_119] : memref<392x768xf32, #tpu.memory_space<vmem>>, vector<8x384xf32>
    tpu.vector_store %arg4[%c160_118, %c384_119], %158 {strides = array<i32>} : memref<392x768xf32, #tpu.memory_space<vmem>>, vector<8x384xf32>,
    %c1_120 = arith.constant 1 : index
    %c0_121 = arith.constant 0 : index
    %c72_122 = arith.constant 72 : index
    %160 = vector.load %arg0[%c1_120, %c0_121, %c72_122] : memref<2x8x534xf32, #tpu.memory_space<vmem>>, vector<1x8x390xf32>
    %161 = vector.shape_cast %160 : vector<1x8x390xf32> to vector<8x390xf32>
    %162 = vector.extract_strided_slice %161 {offsets = [0, 0], sizes = [8, 384], strides = [1, 1]} : vector<8x390xf32> to vector<8x384xf32>
    %c168_123 = arith.constant 168 : index
    %c384_124 = arith.constant 384 : index
    %163 = vector.load %arg4[%c168_123, %c384_124] : memref<392x768xf32, #tpu.memory_space<vmem>>, vector<8x384xf32>
    tpu.vector_store %arg4[%c168_123, %c384_124], %162 {strides = array<i32>} : memref<392x768xf32, #tpu.memory_space<vmem>>, vector<8x384xf32>,
    %164 = vector.extract_strided_slice %161 {offsets = [0, 1], sizes = [8, 384], strides = [1, 1]} : vector<8x390xf32> to vector<8x384xf32>
    %c176_125 = arith.constant 176 : index
    %c384_126 = arith.constant 384 : index
    %165 = vector.load %arg4[%c176_125, %c384_126] : memref<392x768xf32, #tpu.memory_space<vmem>>, vector<8x384xf32>
    tpu.vector_store %arg4[%c176_125, %c384_126], %164 {strides = array<i32>} : memref<392x768xf32, #tpu.memory_space<vmem>>, vector<8x384xf32>,
    %166 = vector.extract_strided_slice %161 {offsets = [0, 2], sizes = [8, 384], strides = [1, 1]} : vector<8x390xf32> to vector<8x384xf32>
    %c184_127 = arith.constant 184 : index
    %c384_128 = arith.constant 384 : index
    %167 = vector.load %arg4[%c184_127, %c384_128] : memref<392x768xf32, #tpu.memory_space<vmem>>, vector<8x384xf32>
    tpu.vector_store %arg4[%c184_127, %c384_128], %166 {strides = array<i32>} : memref<392x768xf32, #tpu.memory_space<vmem>>, vector<8x384xf32>,
    %168 = vector.extract_strided_slice %161 {offsets = [0, 3], sizes = [8, 384], strides = [1, 1]} : vector<8x390xf32> to vector<8x384xf32>
    %c192_129 = arith.constant 192 : index
    %c384_130 = arith.constant 384 : index
    %169 = vector.load %arg4[%c192_129, %c384_130] : memref<392x768xf32, #tpu.memory_space<vmem>>, vector<8x384xf32>
    tpu.vector_store %arg4[%c192_129, %c384_130], %168 {strides = array<i32>} : memref<392x768xf32, #tpu.memory_space<vmem>>, vector<8x384xf32>,
    %170 = vector.extract_strided_slice %161 {offsets = [0, 4], sizes = [8, 384], strides = [1, 1]} : vector<8x390xf32> to vector<8x384xf32>
    %c200_131 = arith.constant 200 : index
    %c384_132 = arith.constant 384 : index
    %171 = vector.load %arg4[%c200_131, %c384_132] : memref<392x768xf32, #tpu.memory_space<vmem>>, vector<8x384xf32>
    tpu.vector_store %arg4[%c200_131, %c384_132], %170 {strides = array<i32>} : memref<392x768xf32, #tpu.memory_space<vmem>>, vector<8x384xf32>,
    %172 = vector.extract_strided_slice %161 {offsets = [0, 5], sizes = [8, 384], strides = [1, 1]} : vector<8x390xf32> to vector<8x384xf32>
    %c208_133 = arith.constant 208 : index
    %c384_134 = arith.constant 384 : index
    %173 = vector.load %arg4[%c208_133, %c384_134] : memref<392x768xf32, #tpu.memory_space<vmem>>, vector<8x384xf32>
    tpu.vector_store %arg4[%c208_133, %c384_134], %172 {strides = array<i32>} : memref<392x768xf32, #tpu.memory_space<vmem>>, vector<8x384xf32>,
    %174 = vector.extract_strided_slice %161 {offsets = [0, 6], sizes = [8, 384], strides = [1, 1]} : vector<8x390xf32> to vector<8x384xf32>
    %c216_135 = arith.constant 216 : index
    %c384_136 = arith.constant 384 : index
    %175 = vector.load %arg4[%c216_135, %c384_136] : memref<392x768xf32, #tpu.memory_space<vmem>>, vector<8x384xf32>
    tpu.vector_store %arg4[%c216_135, %c384_136], %174 {strides = array<i32>} : memref<392x768xf32, #tpu.memory_space<vmem>>, vector<8x384xf32>,
    %c1_137 = arith.constant 1 : index
    %c0_138 = arith.constant 0 : index
    %c96_139 = arith.constant 96 : index
    %176 = vector.load %arg0[%c1_137, %c0_138, %c96_139] : memref<2x8x534xf32, #tpu.memory_space<vmem>>, vector<1x8x390xf32>
    %177 = vector.shape_cast %176 : vector<1x8x390xf32> to vector<8x390xf32>
    %178 = vector.extract_strided_slice %177 {offsets = [0, 0], sizes = [8, 384], strides = [1, 1]} : vector<8x390xf32> to vector<8x384xf32>
    %c224_140 = arith.constant 224 : index
    %c384_141 = arith.constant 384 : index
    %179 = vector.load %arg4[%c224_140, %c384_141] : memref<392x768xf32, #tpu.memory_space<vmem>>, vector<8x384xf32>
    tpu.vector_store %arg4[%c224_140, %c384_141], %178 {strides = array<i32>} : memref<392x768xf32, #tpu.memory_space<vmem>>, vector<8x384xf32>,
    %180 = vector.extract_strided_slice %177 {offsets = [0, 1], sizes = [8, 384], strides = [1, 1]} : vector<8x390xf32> to vector<8x384xf32>
    %c232_142 = arith.constant 232 : index
    %c384_143 = arith.constant 384 : index
    %181 = vector.load %arg4[%c232_142, %c384_143] : memref<392x768xf32, #tpu.memory_space<vmem>>, vector<8x384xf32>
    tpu.vector_store %arg4[%c232_142, %c384_143], %180 {strides = array<i32>} : memref<392x768xf32, #tpu.memory_space<vmem>>, vector<8x384xf32>,
    %182 = vector.extract_strided_slice %177 {offsets = [0, 2], sizes = [8, 384], strides = [1, 1]} : vector<8x390xf32> to vector<8x384xf32>
    %c240_144 = arith.constant 240 : index
    %c384_145 = arith.constant 384 : index
    %183 = vector.load %arg4[%c240_144, %c384_145] : memref<392x768xf32, #tpu.memory_space<vmem>>, vector<8x384xf32>
    tpu.vector_store %arg4[%c240_144, %c384_145], %182 {strides = array<i32>} : memref<392x768xf32, #tpu.memory_space<vmem>>, vector<8x384xf32>,
    %184 = vector.extract_strided_slice %177 {offsets = [0, 3], sizes = [8, 384], strides = [1, 1]} : vector<8x390xf32> to vector<8x384xf32>
    %c248_146 = arith.constant 248 : index
    %c384_147 = arith.constant 384 : index
    %185 = vector.load %arg4[%c248_146, %c384_147] : memref<392x768xf32, #tpu.memory_space<vmem>>, vector<8x384xf32>
    tpu.vector_store %arg4[%c248_146, %c384_147], %184 {strides = array<i32>} : memref<392x768xf32, #tpu.memory_space<vmem>>, vector<8x384xf32>,
    %186 = vector.extract_strided_slice %177 {offsets = [0, 4], sizes = [8, 384], strides = [1, 1]} : vector<8x390xf32> to vector<8x384xf32>
    %c256_148 = arith.constant 256 : index
    %c384_149 = arith.constant 384 : index
    %187 = vector.load %arg4[%c256_148, %c384_149] : memref<392x768xf32, #tpu.memory_space<vmem>>, vector<8x384xf32>
    tpu.vector_store %arg4[%c256_148, %c384_149], %186 {strides = array<i32>} : memref<392x768xf32, #tpu.memory_space<vmem>>, vector<8x384xf32>,
    %188 = vector.extract_strided_slice %177 {offsets = [0, 5], sizes = [8, 384], strides = [1, 1]} : vector<8x390xf32> to vector<8x384xf32>
    %c264_150 = arith.constant 264 : index
    %c384_151 = arith.constant 384 : index
    %189 = vector.load %arg4[%c264_150, %c384_151] : memref<392x768xf32, #tpu.memory_space<vmem>>, vector<8x384xf32>
    tpu.vector_store %arg4[%c264_150, %c384_151], %188 {strides = array<i32>} : memref<392x768xf32, #tpu.memory_space<vmem>>, vector<8x384xf32>,
    %190 = vector.extract_strided_slice %177 {offsets = [0, 6], sizes = [8, 384], strides = [1, 1]} : vector<8x390xf32> to vector<8x384xf32>
    %c272_152 = arith.constant 272 : index
    %c384_153 = arith.constant 384 : index
    %191 = vector.load %arg4[%c272_152, %c384_153] : memref<392x768xf32, #tpu.memory_space<vmem>>, vector<8x384xf32>
    tpu.vector_store %arg4[%c272_152, %c384_153], %190 {strides = array<i32>} : memref<392x768xf32, #tpu.memory_space<vmem>>, vector<8x384xf32>,
    %c1_154 = arith.constant 1 : index
    %c0_155 = arith.constant 0 : index
    %c120_156 = arith.constant 120 : index
    %192 = vector.load %arg0[%c1_154, %c0_155, %c120_156] : memref<2x8x534xf32, #tpu.memory_space<vmem>>, vector<1x8x390xf32>
    %193 = vector.shape_cast %192 : vector<1x8x390xf32> to vector<8x390xf32>
    %194 = vector.extract_strided_slice %193 {offsets = [0, 0], sizes = [8, 384], strides = [1, 1]} : vector<8x390xf32> to vector<8x384xf32>
    %c280_157 = arith.constant 280 : index
    %c384_158 = arith.constant 384 : index
    %195 = vector.load %arg4[%c280_157, %c384_158] : memref<392x768xf32, #tpu.memory_space<vmem>>, vector<8x384xf32>
    tpu.vector_store %arg4[%c280_157, %c384_158], %194 {strides = array<i32>} : memref<392x768xf32, #tpu.memory_space<vmem>>, vector<8x384xf32>,
    %196 = vector.extract_strided_slice %193 {offsets = [0, 1], sizes = [8, 384], strides = [1, 1]} : vector<8x390xf32> to vector<8x384xf32>
    %c288_159 = arith.constant 288 : index
    %c384_160 = arith.constant 384 : index
    %197 = vector.load %arg4[%c288_159, %c384_160] : memref<392x768xf32, #tpu.memory_space<vmem>>, vector<8x384xf32>
    tpu.vector_store %arg4[%c288_159, %c384_160], %196 {strides = array<i32>} : memref<392x768xf32, #tpu.memory_space<vmem>>, vector<8x384xf32>,
    %198 = vector.extract_strided_slice %193 {offsets = [0, 2], sizes = [8, 384], strides = [1, 1]} : vector<8x390xf32> to vector<8x384xf32>
    %c296_161 = arith.constant 296 : index
    %c384_162 = arith.constant 384 : index
    %199 = vector.load %arg4[%c296_161, %c384_162] : memref<392x768xf32, #tpu.memory_space<vmem>>, vector<8x384xf32>
    tpu.vector_store %arg4[%c296_161, %c384_162], %198 {strides = array<i32>} : memref<392x768xf32, #tpu.memory_space<vmem>>, vector<8x384xf32>,
    %200 = vector.extract_strided_slice %193 {offsets = [0, 3], sizes = [8, 384], strides = [1, 1]} : vector<8x390xf32> to vector<8x384xf32>
    %c304_163 = arith.constant 304 : index
    %c384_164 = arith.constant 384 : index
    %201 = vector.load %arg4[%c304_163, %c384_164] : memref<392x768xf32, #tpu.memory_space<vmem>>, vector<8x384xf32>
    tpu.vector_store %arg4[%c304_163, %c384_164], %200 {strides = array<i32>} : memref<392x768xf32, #tpu.memory_space<vmem>>, vector<8x384xf32>,
    %202 = vector.extract_strided_slice %193 {offsets = [0, 4], sizes = [8, 384], strides = [1, 1]} : vector<8x390xf32> to vector<8x384xf32>
    %c312_165 = arith.constant 312 : index
    %c384_166 = arith.constant 384 : index
    %203 = vector.load %arg4[%c312_165, %c384_166] : memref<392x768xf32, #tpu.memory_space<vmem>>, vector<8x384xf32>
    tpu.vector_store %arg4[%c312_165, %c384_166], %202 {strides = array<i32>} : memref<392x768xf32, #tpu.memory_space<vmem>>, vector<8x384xf32>,
    %204 = vector.extract_strided_slice %193 {offsets = [0, 5], sizes = [8, 384], strides = [1, 1]} : vector<8x390xf32> to vector<8x384xf32>
    %c320_167 = arith.constant 320 : index
    %c384_168 = arith.constant 384 : index
    %205 = vector.load %arg4[%c320_167, %c384_168] : memref<392x768xf32, #tpu.memory_space<vmem>>, vector<8x384xf32>
    tpu.vector_store %arg4[%c320_167, %c384_168], %204 {strides = array<i32>} : memref<392x768xf32, #tpu.memory_space<vmem>>, vector<8x384xf32>,
    %206 = vector.extract_strided_slice %193 {offsets = [0, 6], sizes = [8, 384], strides = [1, 1]} : vector<8x390xf32> to vector<8x384xf32>
    %c328_169 = arith.constant 328 : index
    %c384_170 = arith.constant 384 : index
    %207 = vector.load %arg4[%c328_169, %c384_170] : memref<392x768xf32, #tpu.memory_space<vmem>>, vector<8x384xf32>
    tpu.vector_store %arg4[%c328_169, %c384_170], %206 {strides = array<i32>} : memref<392x768xf32, #tpu.memory_space<vmem>>, vector<8x384xf32>,
    %c1_171 = arith.constant 1 : index
    %c0_172 = arith.constant 0 : index
    %c144_173 = arith.constant 144 : index
    %208 = vector.load %arg0[%c1_171, %c0_172, %c144_173] : memref<2x8x534xf32, #tpu.memory_space<vmem>>, vector<1x8x390xf32>
    %209 = vector.shape_cast %208 : vector<1x8x390xf32> to vector<8x390xf32>
    %210 = vector.extract_strided_slice %209 {offsets = [0, 0], sizes = [8, 384], strides = [1, 1]} : vector<8x390xf32> to vector<8x384xf32>
    %c336_174 = arith.constant 336 : index
    %c384_175 = arith.constant 384 : index
    %211 = vector.load %arg4[%c336_174, %c384_175] : memref<392x768xf32, #tpu.memory_space<vmem>>, vector<8x384xf32>
    tpu.vector_store %arg4[%c336_174, %c384_175], %210 {strides = array<i32>} : memref<392x768xf32, #tpu.memory_space<vmem>>, vector<8x384xf32>,
    %212 = vector.extract_strided_slice %209 {offsets = [0, 1], sizes = [8, 384], strides = [1, 1]} : vector<8x390xf32> to vector<8x384xf32>
    %c344_176 = arith.constant 344 : index
    %c384_177 = arith.constant 384 : index
    %213 = vector.load %arg4[%c344_176, %c384_177] : memref<392x768xf32, #tpu.memory_space<vmem>>, vector<8x384xf32>
    tpu.vector_store %arg4[%c344_176, %c384_177], %212 {strides = array<i32>} : memref<392x768xf32, #tpu.memory_space<vmem>>, vector<8x384xf32>,
    %214 = vector.extract_strided_slice %209 {offsets = [0, 2], sizes = [8, 384], strides = [1, 1]} : vector<8x390xf32> to vector<8x384xf32>
    %c352_178 = arith.constant 352 : index
    %c384_179 = arith.constant 384 : index
    %215 = vector.load %arg4[%c352_178, %c384_179] : memref<392x768xf32, #tpu.memory_space<vmem>>, vector<8x384xf32>
    tpu.vector_store %arg4[%c352_178, %c384_179], %214 {strides = array<i32>} : memref<392x768xf32, #tpu.memory_space<vmem>>, vector<8x384xf32>,
    %216 = vector.extract_strided_slice %209 {offsets = [0, 3], sizes = [8, 384], strides = [1, 1]} : vector<8x390xf32> to vector<8x384xf32>
    %c360_180 = arith.constant 360 : index
    %c384_181 = arith.constant 384 : index
    %217 = vector.load %arg4[%c360_180, %c384_181] : memref<392x768xf32, #tpu.memory_space<vmem>>, vector<8x384xf32>
    tpu.vector_store %arg4[%c360_180, %c384_181], %216 {strides = array<i32>} : memref<392x768xf32, #tpu.memory_space<vmem>>, vector<8x384xf32>,
    %218 = vector.extract_strided_slice %209 {offsets = [0, 4], sizes = [8, 384], strides = [1, 1]} : vector<8x390xf32> to vector<8x384xf32>
    %c368_182 = arith.constant 368 : index
    %c384_183 = arith.constant 384 : index
    %219 = vector.load %arg4[%c368_182, %c384_183] : memref<392x768xf32, #tpu.memory_space<vmem>>, vector<8x384xf32>
    tpu.vector_store %arg4[%c368_182, %c384_183], %218 {strides = array<i32>} : memref<392x768xf32, #tpu.memory_space<vmem>>, vector<8x384xf32>,
    %220 = vector.extract_strided_slice %209 {offsets = [0, 5], sizes = [8, 384], strides = [1, 1]} : vector<8x390xf32> to vector<8x384xf32>
    %c376_184 = arith.constant 376 : index
    %c384_185 = arith.constant 384 : index
    %221 = vector.load %arg4[%c376_184, %c384_185] : memref<392x768xf32, #tpu.memory_space<vmem>>, vector<8x384xf32>
    tpu.vector_store %arg4[%c376_184, %c384_185], %220 {strides = array<i32>} : memref<392x768xf32, #tpu.memory_space<vmem>>, vector<8x384xf32>,
    %222 = vector.extract_strided_slice %209 {offsets = [0, 6], sizes = [8, 384], strides = [1, 1]} : vector<8x390xf32> to vector<8x384xf32>
    %c384_186 = arith.constant 384 : index
    %c384_187 = arith.constant 384 : index
    %223 = vector.load %arg4[%c384_186, %c384_187] : memref<392x768xf32, #tpu.memory_space<vmem>>, vector<8x384xf32>
    tpu.vector_store %arg4[%c384_186, %c384_187], %222 {strides = array<i32>} : memref<392x768xf32, #tpu.memory_space<vmem>>, vector<8x384xf32>,
    %c0_188 = arith.constant 0 : index
    %c0_189 = arith.constant 0 : index
    %224 = vector.load %arg1[%c0_188, %c0_189] : memref<8x392xf32, #tpu.memory_space<vmem>>, vector<8x392xf32>
    %c0_190 = arith.constant 0 : index
    %c0_191 = arith.constant 0 : index
    %225 = vector.load %arg4[%c0_190, %c0_191] : memref<392x768xf32, #tpu.memory_space<vmem>>, vector<392x768xf32>
    %cst = arith.constant dense<0.000000e+00> : vector<8x768xf32>
    %226 = tpu.matmul %224, %225, %cst {dimension_numbers = #tpu.dot_dimension_numbers<[1], [0], [0], [1], [0, 0, 1, 1], [], []>} : vector<8x392xf32>, vector<392x768xf32>, vector<8x768xf32> -> vector<8x768xf32>
    %c0_192 = arith.constant 0 : index
    %c0_193 = arith.constant 0 : index
    %227 = vector.load %arg2[%c0_192, %c0_193] : memref<8x1xf32, #tpu.memory_space<vmem>>, vector<8x1xf32>
    %228 = vector.broadcast %227 : vector<8x1xf32> to vector<8x768xf32>
    %229 = arith.addf %226, %228 : vector<8x768xf32>
    %c0_194 = arith.constant 0 : index
    %c0_195 = arith.constant 0 : index
    %230 = vector.load %arg3[%c0_194, %c0_195] : memref<8x768xf32, #tpu.memory_space<vmem>>, vector<8x768xf32>
    tpu.vector_store %arg3[%c0_194, %c0_195], %229 {strides = array<i32>} : memref<8x768xf32, #tpu.memory_space<vmem>>, vector<8x768xf32>,
    return
  }
}

</mosaic_0001>

<llo_original>
// kernel: gcn_forward.1
$region0: #{gcn_forward.1}
  #allocation0 [shape = 'u32[]', space=smem, size = 0x4, offset = 0x4, fixed_abs, tag = 'smem constant byte address 0x4 - core index']
  #allocation1 [shape = 'u32[144,128]{1,0:T(1,128)}', space=vmem, size = 0x12000, scoped, tag = 'internal scratch']
  #allocation2 [shape = 'f32[392,768]{1,0:T(8,128)}', space=vmem, size = 0x126000, scoped, tag = 'scratch operand']
  %s0 = inlined_call_operand.vmem [shape: f32[2,8,534], index: 0, kind: input, shape index: {}]
  %s1 = inlined_call_operand.vmem [shape: f32[8,392], index: 1, kind: input, shape index: {}]
  %s2 = inlined_call_operand.vmem [shape: f32[8,1], index: 2, kind: input, shape index: {}]
  %s3 = inlined_call_operand.vmem [shape: f32[8,768], index: 3, kind: output, shape index: {}]
  %s4 = sld [smem:[#allocation0]]
  $region22: #{gcn_forward.1} parent=0
    _
  %s6 = ssub.s32 1, %s4
  %s7 = scalar_select 0, %s6, %s4
  // Predicated region
  $region2: #{gcn_forward.1} parent=0 // pred_check
    _
  $region3: #{gcn_forward.1} parent=0 // pred_check_branch
    %9 = sbr.rel (0) target = $region5
  $region4: #{gcn_forward.1} parent=0 // pred_region
    _
  $region5: #{gcn_forward.1} parent=0 // pred_fallthru
    _
  // Predicated region
  $region6: #{gcn_forward.1} parent=0 // pred_check
    _
  $region7: #{gcn_forward.1} parent=0 // pred_check_branch
    %11 = sbr.rel (0) target = $region9
  $region8: #{gcn_forward.1} parent=0 // pred_region
    _
  $region9: #{gcn_forward.1} parent=0 // pred_fallthru
    _
  // Predicated region
  $region10: #{gcn_forward.1} parent=0 // pred_check
    _
  $region11: #{gcn_forward.1} parent=0 // pred_check_branch
    %13 = sbr.rel (0) target = $region13
  $region12: #{gcn_forward.1} parent=0 // pred_region
    _
  $region13: #{gcn_forward.1} parent=0 // pred_fallthru
    _
  %v14 = vld [vmem:[%s0] sm:$0xff]
  %v15 = vld [vmem:[%s0 + $0x8] sm:$0xff]
  %v16 = vld [vmem:[%s0 + $0x10] sm:$0xff]
  %v17 = vld [vmem:[%s0 + $0x18] sm:$0xff]
  %18 = vst [vmem:[#allocation2] sm:$0xff] %v14
  %19 = vst [vmem:[#allocation2 + $0x8] sm:$0xff] %v15
  %20 = vst [vmem:[#allocation2 + $0x10] sm:$0xff] %v16
  %25 = vrot.lane.b32.xlu0 %v14, 127
  %v26 = vpop.permute.xlu0 %25
  %27 = vrot.lane.b32.xlu0 %v15, 127
  %v28 = vpop.permute.xlu0 %27
  %29 = vrot.lane.b32.xlu0 %v16, 127
  %v30 = vpop.permute.xlu0 %29
  %31 = vrot.lane.b32.xlu0 %v17, 127
  %v32 = vpop.permute.xlu0 %31
  %vm33 = vcmask 1039360
  %v34 = vsel %vm33, %v26, %v28
  %v35 = vsel %vm33, %v28, %v30
  %v36 = vsel %vm33, %v30, %v32
  %40 = vst [vmem:[#allocation2 + $0x30] sm:$0xff] %v34
  %41 = vst [vmem:[#allocation2 + $0x38] sm:$0xff] %v35
  %42 = vst [vmem:[#allocation2 + $0x40] sm:$0xff] %v36
  %43 = vrot.lane.b32.xlu0 %v14, 126
  %v44 = vpop.permute.xlu0 %43
  %45 = vrot.lane.b32.xlu0 %v15, 126
  %v46 = vpop.permute.xlu0 %45
  %47 = vrot.lane.b32.xlu0 %v16, 126
  %v48 = vpop.permute.xlu0 %47
  %49 = vrot.lane.b32.xlu0 %v17, 126
  %v50 = vpop.permute.xlu0 %49
  %vm51 = vcmask 1031168
  %v52 = vsel %vm51, %v44, %v46
  %v53 = vsel %vm51, %v46, %v48
  %v54 = vsel %vm51, %v48, %v50
  %58 = vst [vmem:[#allocation2 + $0x60] sm:$0xff] %v52
  %59 = vst [vmem:[#allocation2 + $0x68] sm:$0xff] %v53
  %60 = vst [vmem:[#allocation2 + $0x70] sm:$0xff] %v54
  %61 = vrot.lane.b32.xlu0 %v14, 125
  %v62 = vpop.permute.xlu0 %61
  %63 = vrot.lane.b32.xlu0 %v15, 125
  %v64 = vpop.permute.xlu0 %63
  %65 = vrot.lane.b32.xlu0 %v16, 125
  %v66 = vpop.permute.xlu0 %65
  %67 = vrot.lane.b32.xlu0 %v17, 125
  %v68 = vpop.permute.xlu0 %67
  %vm69 = vcmask 1022976
  %v70 = vsel %vm69, %v62, %v64
  %v71 = vsel %vm69, %v64, %v66
  %v72 = vsel %vm69, %v66, %v68
  %76 = vst [vmem:[#allocation2 + $0x90] sm:$0xff] %v70
  %77 = vst [vmem:[#allocation2 + $0x98] sm:$0xff] %v71
  %78 = vst [vmem:[#allocation2 + $0xa0] sm:$0xff] %v72
  %79 = vrot.lane.b32.xlu0 %v14, 124
  %v80 = vpop.permute.xlu0 %79
  %81 = vrot.lane.b32.xlu0 %v15, 124
  %v82 = vpop.permute.xlu0 %81
  %83 = vrot.lane.b32.xlu0 %v16, 124
  %v84 = vpop.permute.xlu0 %83
  %85 = vrot.lane.b32.xlu0 %v17, 124
  %v86 = vpop.permute.xlu0 %85
  %vm87 = vcmask 1014784
  %v88 = vsel %vm87, %v80, %v82
  %v89 = vsel %vm87, %v82, %v84
  %v90 = vsel %vm87, %v84, %v86
  %94 = vst [vmem:[#allocation2 + $0xc0] sm:$0xff] %v88
  %95 = vst [vmem:[#allocation2 + $0xc8] sm:$0xff] %v89
  %96 = vst [vmem:[#allocation2 + $0xd0] sm:$0xff] %v90
  %97 = vrot.lane.b32.xlu0 %v14, 123
  %v98 = vpop.permute.xlu0 %97
  %99 = vrot.lane.b32.xlu0 %v15, 123
  %v100 = vpop.permute.xlu0 %99
  %101 = vrot.lane.b32.xlu0 %v16, 123
  %v102 = vpop.permute.xlu0 %101
  %103 = vrot.lane.b32.xlu0 %v17, 123
  %v104 = vpop.permute.xlu0 %103
  %vm105 = vcmask 1006592
  %v106 = vsel %vm105, %v98, %v100
  %v107 = vsel %vm105, %v100, %v102
  %v108 = vsel %vm105, %v102, %v104
  %112 = vst [vmem:[#allocation2 + $0xf0] sm:$0xff] %v106
  %113 = vst [vmem:[#allocation2 + $0xf8] sm:$0xff] %v107
  %114 = vst [vmem:[#allocation2 + $0x100] sm:$0xff] %v108
  %115 = vrot.lane.b32.xlu0 %v14, 122
  %v116 = vpop.permute.xlu0 %115
  %117 = vrot.lane.b32.xlu0 %v15, 122
  %v118 = vpop.permute.xlu0 %117
  %119 = vrot.lane.b32.xlu0 %v16, 122
  %v120 = vpop.permute.xlu0 %119
  %121 = vrot.lane.b32.xlu0 %v17, 122
  %v122 = vpop.permute.xlu0 %121
  %vm123 = vcmask 998400
  %v124 = vsel %vm123, %v116, %v118
  %v125 = vsel %vm123, %v118, %v120
  %v126 = vsel %vm123, %v120, %v122
  %130 = vst [vmem:[#allocation2 + $0x120] sm:$0xff] %v124
  %131 = vst [vmem:[#allocation2 + $0x128] sm:$0xff] %v125
  %132 = vst [vmem:[#allocation2 + $0x130] sm:$0xff] %v126
  %v133 = vld [vmem:[%s0] sm:$0xff]
  %v134 = vld [vmem:[%s0 + $0x8] sm:$0xff]
  %v135 = vld [vmem:[%s0 + $0x10] sm:$0xff]
  %v136 = vld [vmem:[%s0 + $0x18] sm:$0xff]
  %141 = vrot.lane.b32.xlu0 %v133, 104
  %v142 = vpop.permute.xlu0 %141
  %143 = vrot.lane.b32.xlu0 %v134, 104
  %v144 = vpop.permute.xlu0 %143
  %145 = vrot.lane.b32.xlu0 %v135, 104
  %v146 = vpop.permute.xlu0 %145
  %147 = vrot.lane.b32.xlu0 %v136, 104
  %v148 = vpop.permute.xlu0 %147
  %vm149 = vcmask 850944
  %v150 = vsel %vm149, %v142, %v144
  %v151 = vsel %vm149, %v144, %v146
  %v152 = vsel %vm149, %v146, %v148
  %156 = vst [vmem:[#allocation2 + $0x150] sm:$0xff] %v150
  %157 = vst [vmem:[#allocation2 + $0x158] sm:$0xff] %v151
  %158 = vst [vmem:[#allocation2 + $0x160] sm:$0xff] %v152
  %159 = vrot.lane.b32.xlu0 %v133, 103
  %v160 = vpop.permute.xlu0 %159
  %161 = vrot.lane.b32.xlu0 %v134, 103
  %v162 = vpop.permute.xlu0 %161
  %163 = vrot.lane.b32.xlu0 %v135, 103
  %v164 = vpop.permute.xlu0 %163
  %165 = vrot.lane.b32.xlu0 %v136, 103
  %v166 = vpop.permute.xlu0 %165
  %vm167 = vcmask 842752
  %v168 = vsel %vm167, %v160, %v162
  %v169 = vsel %vm167, %v162, %v164
  %v170 = vsel %vm167, %v164, %v166
  %174 = vst [vmem:[#allocation2 + $0x180] sm:$0xff] %v168
  %175 = vst [vmem:[#allocation2 + $0x188] sm:$0xff] %v169
  %176 = vst [vmem:[#allocation2 + $0x190] sm:$0xff] %v170
  %177 = vrot.lane.b32.xlu0 %v133, 102
  %v178 = vpop.permute.xlu0 %177
  %179 = vrot.lane.b32.xlu0 %v134, 102
  %v180 = vpop.permute.xlu0 %179
  %181 = vrot.lane.b32.xlu0 %v135, 102
  %v182 = vpop.permute.xlu0 %181
  %183 = vrot.lane.b32.xlu0 %v136, 102
  %v184 = vpop.permute.xlu0 %183
  %vm185 = vcmask 834560
  %v186 = vsel %vm185, %v178, %v180
  %v187 = vsel %vm185, %v180, %v182
  %v188 = vsel %vm185, %v182, %v184
  %192 = vst [vmem:[#allocation2 + $0x1b0] sm:$0xff] %v186
  %193 = vst [vmem:[#allocation2 + $0x1b8] sm:$0xff] %v187
  %194 = vst [vmem:[#allocation2 + $0x1c0] sm:$0xff] %v188
  %195 = vrot.lane.b32.xlu0 %v133, 101
  %v196 = vpop.permute.xlu0 %195
  %197 = vrot.lane.b32.xlu0 %v134, 101
  %v198 = vpop.permute.xlu0 %197
  %199 = vrot.lane.b32.xlu0 %v135, 101
  %v200 = vpop.permute.xlu0 %199
  %201 = vrot.lane.b32.xlu0 %v136, 101
  %v202 = vpop.permute.xlu0 %201
  %vm203 = vcmask 826368
  %v204 = vsel %vm203, %v196, %v198
  %v205 = vsel %vm203, %v198, %v200
  %v206 = vsel %vm203, %v200, %v202
  %210 = vst [vmem:[#allocation2 + $0x1e0] sm:$0xff] %v204
  %211 = vst [vmem:[#allocation2 + $0x1e8] sm:$0xff] %v205
  %212 = vst [vmem:[#allocation2 + $0x1f0] sm:$0xff] %v206
  %213 = vrot.lane.b32.xlu0 %v133, 100
  %v214 = vpop.permute.xlu0 %213
  %215 = vrot.lane.b32.xlu0 %v134, 100
  %v216 = vpop.permute.xlu0 %215
  %217 = vrot.lane.b32.xlu0 %v135, 100
  %v218 = vpop.permute.xlu0 %217
  %219 = vrot.lane.b32.xlu0 %v136, 100
  %v220 = vpop.permute.xlu0 %219
  %vm221 = vcmask 818176
  %v222 = vsel %vm221, %v214, %v216
  %v223 = vsel %vm221, %v216, %v218
  %v224 = vsel %vm221, %v218, %v220
  %228 = vst [vmem:[#allocation2 + $0x210] sm:$0xff] %v222
  %229 = vst [vmem:[#allocation2 + $0x218] sm:$0xff] %v223
  %230 = vst [vmem:[#allocation2 + $0x220] sm:$0xff] %v224
  %231 = vrot.lane.b32.xlu0 %v133, 99
  %v232 = vpop.permute.xlu0 %231
  %233 = vrot.lane.b32.xlu0 %v134, 99
  %v234 = vpop.permute.xlu0 %233
  %235 = vrot.lane.b32.xlu0 %v135, 99
  %v236 = vpop.permute.xlu0 %235
  %237 = vrot.lane.b32.xlu0 %v136, 99
  %v238 = vpop.permute.xlu0 %237
  %vm239 = vcmask 809984
  %v240 = vsel %vm239, %v232, %v234
  %v241 = vsel %vm239, %v234, %v236
  %v242 = vsel %vm239, %v236, %v238
  %246 = vst [vmem:[#allocation2 + $0x240] sm:$0xff] %v240
  %247 = vst [vmem:[#allocation2 + $0x248] sm:$0xff] %v241
  %248 = vst [vmem:[#allocation2 + $0x250] sm:$0xff] %v242
  %249 = vrot.lane.b32.xlu0 %v133, 98
  %v250 = vpop.permute.xlu0 %249
  %251 = vrot.lane.b32.xlu0 %v134, 98
  %v252 = vpop.permute.xlu0 %251
  %253 = vrot.lane.b32.xlu0 %v135, 98
  %v254 = vpop.permute.xlu0 %253
  %255 = vrot.lane.b32.xlu0 %v136, 98
  %v256 = vpop.permute.xlu0 %255
  %vm257 = vcmask 801792
  %v258 = vsel %vm257, %v250, %v252
  %v259 = vsel %vm257, %v252, %v254
  %v260 = vsel %vm257, %v254, %v256
  %264 = vst [vmem:[#allocation2 + $0x270] sm:$0xff] %v258
  %265 = vst [vmem:[#allocation2 + $0x278] sm:$0xff] %v259
  %266 = vst [vmem:[#allocation2 + $0x280] sm:$0xff] %v260
  %v267 = vld [vmem:[%s0] sm:$0xff]
  %v268 = vld [vmem:[%s0 + $0x8] sm:$0xff]
  %v269 = vld [vmem:[%s0 + $0x10] sm:$0xff]
  %v270 = vld [vmem:[%s0 + $0x18] sm:$0xff]
  %275 = vrot.lane.b32.xlu0 %v267, 80
  %v276 = vpop.permute.xlu0 %275
  %277 = vrot.lane.b32.xlu0 %v268, 80
  %v278 = vpop.permute.xlu0 %277
  %279 = vrot.lane.b32.xlu0 %v269, 80
  %v280 = vpop.permute.xlu0 %279
  %281 = vrot.lane.b32.xlu0 %v270, 80
  %v282 = vpop.permute.xlu0 %281
  %vm283 = vcmask 654336
  %v284 = vsel %vm283, %v276, %v278
  %v285 = vsel %vm283, %v278, %v280
  %v286 = vsel %vm283, %v280, %v282
  %290 = vst [vmem:[#allocation2 + $0x2a0] sm:$0xff] %v284
  %291 = vst [vmem:[#allocation2 + $0x2a8] sm:$0xff] %v285
  %292 = vst [vmem:[#allocation2 + $0x2b0] sm:$0xff] %v286
  %293 = vrot.lane.b32.xlu0 %v267, 79
  %v294 = vpop.permute.xlu0 %293
  %295 = vrot.lane.b32.xlu0 %v268, 79
  %v296 = vpop.permute.xlu0 %295
  %297 = vrot.lane.b32.xlu0 %v269, 79
  %v298 = vpop.permute.xlu0 %297
  %299 = vrot.lane.b32.xlu0 %v270, 79
  %v300 = vpop.permute.xlu0 %299
  %vm301 = vcmask 646144
  %v302 = vsel %vm301, %v294, %v296
  %v303 = vsel %vm301, %v296, %v298
  %v304 = vsel %vm301, %v298, %v300
  %308 = vst [vmem:[#allocation2 + $0x2d0] sm:$0xff] %v302
  %309 = vst [vmem:[#allocation2 + $0x2d8] sm:$0xff] %v303
  %310 = vst [vmem:[#allocation2 + $0x2e0] sm:$0xff] %v304
  %311 = vrot.lane.b32.xlu0 %v267, 78
  %v312 = vpop.permute.xlu0 %311
  %313 = vrot.lane.b32.xlu0 %v268, 78
  %v314 = vpop.permute.xlu0 %313
  %315 = vrot.lane.b32.xlu0 %v269, 78
  %v316 = vpop.permute.xlu0 %315
  %317 = vrot.lane.b32.xlu0 %v270, 78
  %v318 = vpop.permute.xlu0 %317
  %vm319 = vcmask 637952
  %v320 = vsel %vm319, %v312, %v314
  %v321 = vsel %vm319, %v314, %v316
  %v322 = vsel %vm319, %v316, %v318
  %326 = vst [vmem:[#allocation2 + $0x300] sm:$0xff] %v320
  %327 = vst [vmem:[#allocation2 + $0x308] sm:$0xff] %v321
  %328 = vst [vmem:[#allocation2 + $0x310] sm:$0xff] %v322
  %329 = vrot.lane.b32.xlu0 %v267, 77
  %v330 = vpop.permute.xlu0 %329
  %331 = vrot.lane.b32.xlu0 %v268, 77
  %v332 = vpop.permute.xlu0 %331
  %333 = vrot.lane.b32.xlu0 %v269, 77
  %v334 = vpop.permute.xlu0 %333
  %335 = vrot.lane.b32.xlu0 %v270, 77
  %v336 = vpop.permute.xlu0 %335
  %vm337 = vcmask 629760
  %v338 = vsel %vm337, %v330, %v332
  %v339 = vsel %vm337, %v332, %v334
  %v340 = vsel %vm337, %v334, %v336
  %344 = vst [vmem:[#allocation2 + $0x330] sm:$0xff] %v338
  %345 = vst [vmem:[#allocation2 + $0x338] sm:$0xff] %v339
  %346 = vst [vmem:[#allocation2 + $0x340] sm:$0xff] %v340
  %347 = vrot.lane.b32.xlu0 %v267, 76
  %v348 = vpop.permute.xlu0 %347
  %349 = vrot.lane.b32.xlu0 %v268, 76
  %v350 = vpop.permute.xlu0 %349
  %351 = vrot.lane.b32.xlu0 %v269, 76
  %v352 = vpop.permute.xlu0 %351
  %353 = vrot.lane.b32.xlu0 %v270, 76
  %v354 = vpop.permute.xlu0 %353
  %vm355 = vcmask 621568
  %v356 = vsel %vm355, %v348, %v350
  %v357 = vsel %vm355, %v350, %v352
  %v358 = vsel %vm355, %v352, %v354
  %362 = vst [vmem:[#allocation2 + $0x360] sm:$0xff] %v356
  %363 = vst [vmem:[#allocation2 + $0x368] sm:$0xff] %v357
  %364 = vst [vmem:[#allocation2 + $0x370] sm:$0xff] %v358
  %365 = vrot.lane.b32.xlu0 %v267, 75
  %v366 = vpop.permute.xlu0 %365
  %367 = vrot.lane.b32.xlu0 %v268, 75
  %v368 = vpop.permute.xlu0 %367
  %369 = vrot.lane.b32.xlu0 %v269, 75
  %v370 = vpop.permute.xlu0 %369
  %371 = vrot.lane.b32.xlu0 %v270, 75
  %v372 = vpop.permute.xlu0 %371
  %vm373 = vcmask 613376
  %v374 = vsel %vm373, %v366, %v368
  %v375 = vsel %vm373, %v368, %v370
  %v376 = vsel %vm373, %v370, %v372
  %380 = vst [vmem:[#allocation2 + $0x390] sm:$0xff] %v374
  %381 = vst [vmem:[#allocation2 + $0x398] sm:$0xff] %v375
  %382 = vst [vmem:[#allocation2 + $0x3a0] sm:$0xff] %v376
  %383 = vrot.lane.b32.xlu0 %v267, 74
  %v384 = vpop.permute.xlu0 %383
  %385 = vrot.lane.b32.xlu0 %v268, 74
  %v386 = vpop.permute.xlu0 %385
  %387 = vrot.lane.b32.xlu0 %v269, 74
  %v388 = vpop.permute.xlu0 %387
  %389 = vrot.lane.b32.xlu0 %v270, 74
  %v390 = vpop.permute.xlu0 %389
  %vm391 = vcmask 605184
  %v392 = vsel %vm391, %v384, %v386
  %v393 = vsel %vm391, %v386, %v388
  %v394 = vsel %vm391, %v388, %v390
  %398 = vst [vmem:[#allocation2 + $0x3c0] sm:$0xff] %v392
  %399 = vst [vmem:[#allocation2 + $0x3c8] sm:$0xff] %v393
  %400 = vst [vmem:[#allocation2 + $0x3d0] sm:$0xff] %v394
  %v401 = vld [vmem:[%s0] sm:$0xff]
  %v402 = vld [vmem:[%s0 + $0x8] sm:$0xff]
  %v403 = vld [vmem:[%s0 + $0x10] sm:$0xff]
  %v404 = vld [vmem:[%s0 + $0x18] sm:$0xff]
  %409 = vrot.lane.b32.xlu0 %v401, 56
  %v410 = vpop.permute.xlu0 %409
  %411 = vrot.lane.b32.xlu0 %v402, 56
  %v412 = vpop.permute.xlu0 %411
  %413 = vrot.lane.b32.xlu0 %v403, 56
  %v414 = vpop.permute.xlu0 %413
  %415 = vrot.lane.b32.xlu0 %v404, 56
  %v416 = vpop.permute.xlu0 %415
  %vm417 = vcmask 457728
  %v418 = vsel %vm417, %v410, %v412
  %v419 = vsel %vm417, %v412, %v414
  %v420 = vsel %vm417, %v414, %v416
  %424 = vst [vmem:[#allocation2 + $0x3f0] sm:$0xff] %v418
  %425 = vst [vmem:[#allocation2 + $0x3f8] sm:$0xff] %v419
  %426 = vst [vmem:[#allocation2 + $0x400] sm:$0xff] %v420
  %427 = vrot.lane.b32.xlu0 %v401, 55
  %v428 = vpop.permute.xlu0 %427
  %429 = vrot.lane.b32.xlu0 %v402, 55
  %v430 = vpop.permute.xlu0 %429
  %431 = vrot.lane.b32.xlu0 %v403, 55
  %v432 = vpop.permute.xlu0 %431
  %433 = vrot.lane.b32.xlu0 %v404, 55
  %v434 = vpop.permute.xlu0 %433
  %vm435 = vcmask 449536
  %v436 = vsel %vm435, %v428, %v430
  %v437 = vsel %vm435, %v430, %v432
  %v438 = vsel %vm435, %v432, %v434
  %442 = vst [vmem:[#allocation2 + $0x420] sm:$0xff] %v436
  %443 = vst [vmem:[#allocation2 + $0x428] sm:$0xff] %v437
  %444 = vst [vmem:[#allocation2 + $0x430] sm:$0xff] %v438
  %445 = vrot.lane.b32.xlu0 %v401, 54
  %v446 = vpop.permute.xlu0 %445
  %447 = vrot.lane.b32.xlu0 %v402, 54
  %v448 = vpop.permute.xlu0 %447
  %449 = vrot.lane.b32.xlu0 %v403, 54
  %v450 = vpop.permute.xlu0 %449
  %451 = vrot.lane.b32.xlu0 %v404, 54
  %v452 = vpop.permute.xlu0 %451
  %vm453 = vcmask 441344
  %v454 = vsel %vm453, %v446, %v448
  %v455 = vsel %vm453, %v448, %v450
  %v456 = vsel %vm453, %v450, %v452
  %460 = vst [vmem:[#allocation2 + $0x450] sm:$0xff] %v454
  %461 = vst [vmem:[#allocation2 + $0x458] sm:$0xff] %v455
  %462 = vst [vmem:[#allocation2 + $0x460] sm:$0xff] %v456
  %463 = vrot.lane.b32.xlu0 %v401, 53
  %v464 = vpop.permute.xlu0 %463
  %465 = vrot.lane.b32.xlu0 %v402, 53
  %v466 = vpop.permute.xlu0 %465
  %467 = vrot.lane.b32.xlu0 %v403, 53
  %v468 = vpop.permute.xlu0 %467
  %469 = vrot.lane.b32.xlu0 %v404, 53
  %v470 = vpop.permute.xlu0 %469
  %vm471 = vcmask 433152
  %v472 = vsel %vm471, %v464, %v466
  %v473 = vsel %vm471, %v466, %v468
  %v474 = vsel %vm471, %v468, %v470
  %478 = vst [vmem:[#allocation2 + $0x480] sm:$0xff] %v472
  %479 = vst [vmem:[#allocation2 + $0x488] sm:$0xff] %v473
  %480 = vst [vmem:[#allocation2 + $0x490] sm:$0xff] %v474
  %481 = vrot.lane.b32.xlu0 %v401, 52
  %v482 = vpop.permute.xlu0 %481
  %483 = vrot.lane.b32.xlu0 %v402, 52
  %v484 = vpop.permute.xlu0 %483
  %485 = vrot.lane.b32.xlu0 %v403, 52
  %v486 = vpop.permute.xlu0 %485
  %487 = vrot.lane.b32.xlu0 %v404, 52
  %v488 = vpop.permute.xlu0 %487
  %vm489 = vcmask 424960
  %v490 = vsel %vm489, %v482, %v484
  %v491 = vsel %vm489, %v484, %v486
  %v492 = vsel %vm489, %v486, %v488
  %496 = vst [vmem:[#allocation2 + $0x4b0] sm:$0xff] %v490
  %497 = vst [vmem:[#allocation2 + $0x4b8] sm:$0xff] %v491
  %498 = vst [vmem:[#allocation2 + $0x4c0] sm:$0xff] %v492
  %499 = vrot.lane.b32.xlu0 %v401, 51
  %v500 = vpop.permute.xlu0 %499
  %501 = vrot.lane.b32.xlu0 %v402, 51
  %v502 = vpop.permute.xlu0 %501
  %503 = vrot.lane.b32.xlu0 %v403, 51
  %v504 = vpop.permute.xlu0 %503
  %505 = vrot.lane.b32.xlu0 %v404, 51
  %v506 = vpop.permute.xlu0 %505
  %vm507 = vcmask 416768
  %v508 = vsel %vm507, %v500, %v502
  %v509 = vsel %vm507, %v502, %v504
  %v510 = vsel %vm507, %v504, %v506
  %514 = vst [vmem:[#allocation2 + $0x4e0] sm:$0xff] %v508
  %515 = vst [vmem:[#allocation2 + $0x4e8] sm:$0xff] %v509
  %516 = vst [vmem:[#allocation2 + $0x4f0] sm:$0xff] %v510
  %517 = vrot.lane.b32.xlu0 %v401, 50
  %v518 = vpop.permute.xlu0 %517
  %519 = vrot.lane.b32.xlu0 %v402, 50
  %v520 = vpop.permute.xlu0 %519
  %521 = vrot.lane.b32.xlu0 %v403, 50
  %v522 = vpop.permute.xlu0 %521
  %523 = vrot.lane.b32.xlu0 %v404, 50
  %v524 = vpop.permute.xlu0 %523
  %vm525 = vcmask 408576
  %v526 = vsel %vm525, %v518, %v520
  %v527 = vsel %vm525, %v520, %v522
  %v528 = vsel %vm525, %v522, %v524
  %532 = vst [vmem:[#allocation2 + $0x510] sm:$0xff] %v526
  %533 = vst [vmem:[#allocation2 + $0x518] sm:$0xff] %v527
  %534 = vst [vmem:[#allocation2 + $0x520] sm:$0xff] %v528
  %v535 = vld [vmem:[%s0] sm:$0xff]
  %v536 = vld [vmem:[%s0 + $0x8] sm:$0xff]
  %v537 = vld [vmem:[%s0 + $0x10] sm:$0xff]
  %v538 = vld [vmem:[%s0 + $0x18] sm:$0xff]
  %543 = vrot.lane.b32.xlu0 %v535, 32
  %v544 = vpop.permute.xlu0 %543
  %545 = vrot.lane.b32.xlu0 %v536, 32
  %v546 = vpop.permute.xlu0 %545
  %547 = vrot.lane.b32.xlu0 %v537, 32
  %v548 = vpop.permute.xlu0 %547
  %549 = vrot.lane.b32.xlu0 %v538, 32
  %v550 = vpop.permute.xlu0 %549
  %vm551 = vcmask 261120
  %v552 = vsel %vm551, %v544, %v546
  %v553 = vsel %vm551, %v546, %v548
  %v554 = vsel %vm551, %v548, %v550
  %558 = vst [vmem:[#allocation2 + $0x540] sm:$0xff] %v552
  %559 = vst [vmem:[#allocation2 + $0x548] sm:$0xff] %v553
  %560 = vst [vmem:[#allocation2 + $0x550] sm:$0xff] %v554
  %561 = vrot.lane.b32.xlu0 %v535, 31
  %v562 = vpop.permute.xlu0 %561
  %563 = vrot.lane.b32.xlu0 %v536, 31
  %v564 = vpop.permute.xlu0 %563
  %565 = vrot.lane.b32.xlu0 %v537, 31
  %v566 = vpop.permute.xlu0 %565
  %567 = vrot.lane.b32.xlu0 %v538, 31
  %v568 = vpop.permute.xlu0 %567
  %vm569 = vcmask 252928
  %v570 = vsel %vm569, %v562, %v564
  %v571 = vsel %vm569, %v564, %v566
  %v572 = vsel %vm569, %v566, %v568
  %576 = vst [vmem:[#allocation2 + $0x570] sm:$0xff] %v570
  %577 = vst [vmem:[#allocation2 + $0x578] sm:$0xff] %v571
  %578 = vst [vmem:[#allocation2 + $0x580] sm:$0xff] %v572
  %579 = vrot.lane.b32.xlu0 %v535, 30
  %v580 = vpop.permute.xlu0 %579
  %581 = vrot.lane.b32.xlu0 %v536, 30
  %v582 = vpop.permute.xlu0 %581
  %583 = vrot.lane.b32.xlu0 %v537, 30
  %v584 = vpop.permute.xlu0 %583
  %585 = vrot.lane.b32.xlu0 %v538, 30
  %v586 = vpop.permute.xlu0 %585
  %vm587 = vcmask 244736
  %v588 = vsel %vm587, %v580, %v582
  %v589 = vsel %vm587, %v582, %v584
  %v590 = vsel %vm587, %v584, %v586
  %594 = vst [vmem:[#allocation2 + $0x5a0] sm:$0xff] %v588
  %595 = vst [vmem:[#allocation2 + $0x5a8] sm:$0xff] %v589
  %596 = vst [vmem:[#allocation2 + $0x5b0] sm:$0xff] %v590
  %597 = vrot.lane.b32.xlu0 %v535, 29
  %v598 = vpop.permute.xlu0 %597
  %599 = vrot.lane.b32.xlu0 %v536, 29
  %v600 = vpop.permute.xlu0 %599
  %601 = vrot.lane.b32.xlu0 %v537, 29
  %v602 = vpop.permute.xlu0 %601
  %603 = vrot.lane.b32.xlu0 %v538, 29
  %v604 = vpop.permute.xlu0 %603
  %vm605 = vcmask 236544
  %v606 = vsel %vm605, %v598, %v600
  %v607 = vsel %vm605, %v600, %v602
  %v608 = vsel %vm605, %v602, %v604
  %612 = vst [vmem:[#allocation2 + $0x5d0] sm:$0xff] %v606
  %613 = vst [vmem:[#allocation2 + $0x5d8] sm:$0xff] %v607
  %614 = vst [vmem:[#allocation2 + $0x5e0] sm:$0xff] %v608
  %615 = vrot.lane.b32.xlu0 %v535, 28
  %v616 = vpop.permute.xlu0 %615
  %617 = vrot.lane.b32.xlu0 %v536, 28
  %v618 = vpop.permute.xlu0 %617
  %619 = vrot.lane.b32.xlu0 %v537, 28
  %v620 = vpop.permute.xlu0 %619
  %621 = vrot.lane.b32.xlu0 %v538, 28
  %v622 = vpop.permute.xlu0 %621
  %vm623 = vcmask 228352
  %v624 = vsel %vm623, %v616, %v618
  %v625 = vsel %vm623, %v618, %v620
  %v626 = vsel %vm623, %v620, %v622
  %630 = vst [vmem:[#allocation2 + $0x600] sm:$0xff] %v624
  %631 = vst [vmem:[#allocation2 + $0x608] sm:$0xff] %v625
  %632 = vst [vmem:[#allocation2 + $0x610] sm:$0xff] %v626
  %633 = vrot.lane.b32.xlu0 %v535, 27
  %v634 = vpop.permute.xlu0 %633
  %635 = vrot.lane.b32.xlu0 %v536, 27
  %v636 = vpop.permute.xlu0 %635
  %637 = vrot.lane.b32.xlu0 %v537, 27
  %v638 = vpop.permute.xlu0 %637
  %639 = vrot.lane.b32.xlu0 %v538, 27
  %v640 = vpop.permute.xlu0 %639
  %vm641 = vcmask 220160
  %v642 = vsel %vm641, %v634, %v636
  %v643 = vsel %vm641, %v636, %v638
  %v644 = vsel %vm641, %v638, %v640
  %648 = vst [vmem:[#allocation2 + $0x630] sm:$0xff] %v642
  %649 = vst [vmem:[#allocation2 + $0x638] sm:$0xff] %v643
  %650 = vst [vmem:[#allocation2 + $0x640] sm:$0xff] %v644
  %651 = vrot.lane.b32.xlu0 %v535, 26
  %v652 = vpop.permute.xlu0 %651
  %653 = vrot.lane.b32.xlu0 %v536, 26
  %v654 = vpop.permute.xlu0 %653
  %655 = vrot.lane.b32.xlu0 %v537, 26
  %v656 = vpop.permute.xlu0 %655
  %657 = vrot.lane.b32.xlu0 %v538, 26
  %v658 = vpop.permute.xlu0 %657
  %vm659 = vcmask 211968
  %v660 = vsel %vm659, %v652, %v654
  %v661 = vsel %vm659, %v654, %v656
  %v662 = vsel %vm659, %v656, %v658
  %666 = vst [vmem:[#allocation2 + $0x660] sm:$0xff] %v660
  %667 = vst [vmem:[#allocation2 + $0x668] sm:$0xff] %v661
  %668 = vst [vmem:[#allocation2 + $0x670] sm:$0xff] %v662
  %v669 = vld [vmem:[%s0] sm:$0xff]
  %v670 = vld [vmem:[%s0 + $0x8] sm:$0xff]
  %v671 = vld [vmem:[%s0 + $0x10] sm:$0xff]
  %v672 = vld [vmem:[%s0 + $0x18] sm:$0xff]
  %677 = vrot.lane.b32.xlu0 %v669, 8
  %v678 = vpop.permute.xlu0 %677
  %679 = vrot.lane.b32.xlu0 %v670, 8
  %v680 = vpop.permute.xlu0 %679
  %681 = vrot.lane.b32.xlu0 %v671, 8
  %v682 = vpop.permute.xlu0 %681
  %683 = vrot.lane.b32.xlu0 %v672, 8
  %v684 = vpop.permute.xlu0 %683
  %vm685 = vcmask 64512
  %v686 = vsel %vm685, %v678, %v680
  %v687 = vsel %vm685, %v680, %v682
  %v688 = vsel %vm685, %v682, %v684
  %692 = vst [vmem:[#allocation2 + $0x690] sm:$0xff] %v686
  %693 = vst [vmem:[#allocation2 + $0x698] sm:$0xff] %v687
  %694 = vst [vmem:[#allocation2 + $0x6a0] sm:$0xff] %v688
  %695 = vrot.lane.b32.xlu0 %v669, 7
  %v696 = vpop.permute.xlu0 %695
  %697 = vrot.lane.b32.xlu0 %v670, 7
  %v698 = vpop.permute.xlu0 %697
  %699 = vrot.lane.b32.xlu0 %v671, 7
  %v700 = vpop.permute.xlu0 %699
  %701 = vrot.lane.b32.xlu0 %v672, 7
  %v702 = vpop.permute.xlu0 %701
  %vm703 = vcmask 56320
  %v704 = vsel %vm703, %v696, %v698
  %v705 = vsel %vm703, %v698, %v700
  %v706 = vsel %vm703, %v700, %v702
  %710 = vst [vmem:[#allocation2 + $0x6c0] sm:$0xff] %v704
  %711 = vst [vmem:[#allocation2 + $0x6c8] sm:$0xff] %v705
  %712 = vst [vmem:[#allocation2 + $0x6d0] sm:$0xff] %v706
  %713 = vrot.lane.b32.xlu0 %v669, 6
  %v714 = vpop.permute.xlu0 %713
  %715 = vrot.lane.b32.xlu0 %v670, 6
  %v716 = vpop.permute.xlu0 %715
  %717 = vrot.lane.b32.xlu0 %v671, 6
  %v718 = vpop.permute.xlu0 %717
  %719 = vrot.lane.b32.xlu0 %v672, 6
  %v720 = vpop.permute.xlu0 %719
  %vm721 = vcmask 48128
  %v722 = vsel %vm721, %v714, %v716
  %v723 = vsel %vm721, %v716, %v718
  %v724 = vsel %vm721, %v718, %v720
  %728 = vst [vmem:[#allocation2 + $0x6f0] sm:$0xff] %v722
  %729 = vst [vmem:[#allocation2 + $0x6f8] sm:$0xff] %v723
  %730 = vst [vmem:[#allocation2 + $0x700] sm:$0xff] %v724
  %731 = vrot.lane.b32.xlu0 %v669, 5
  %v732 = vpop.permute.xlu0 %731
  %733 = vrot.lane.b32.xlu0 %v670, 5
  %v734 = vpop.permute.xlu0 %733
  %735 = vrot.lane.b32.xlu0 %v671, 5
  %v736 = vpop.permute.xlu0 %735
  %737 = vrot.lane.b32.xlu0 %v672, 5
  %v738 = vpop.permute.xlu0 %737
  %vm739 = vcmask 39936
  %v740 = vsel %vm739, %v732, %v734
  %v741 = vsel %vm739, %v734, %v736
  %v742 = vsel %vm739, %v736, %v738
  %746 = vst [vmem:[#allocation2 + $0x720] sm:$0xff] %v740
  %747 = vst [vmem:[#allocation2 + $0x728] sm:$0xff] %v741
  %748 = vst [vmem:[#allocation2 + $0x730] sm:$0xff] %v742
  %749 = vrot.lane.b32.xlu0 %v669, 4
  %v750 = vpop.permute.xlu0 %749
  %751 = vrot.lane.b32.xlu0 %v670, 4
  %v752 = vpop.permute.xlu0 %751
  %753 = vrot.lane.b32.xlu0 %v671, 4
  %v754 = vpop.permute.xlu0 %753
  %755 = vrot.lane.b32.xlu0 %v672, 4
  %v756 = vpop.permute.xlu0 %755
  %vm757 = vcmask 31744
  %v758 = vsel %vm757, %v750, %v752
  %v759 = vsel %vm757, %v752, %v754
  %v760 = vsel %vm757, %v754, %v756
  %764 = vst [vmem:[#allocation2 + $0x750] sm:$0xff] %v758
  %765 = vst [vmem:[#allocation2 + $0x758] sm:$0xff] %v759
  %766 = vst [vmem:[#allocation2 + $0x760] sm:$0xff] %v760
  %767 = vrot.lane.b32.xlu0 %v669, 3
  %v768 = vpop.permute.xlu0 %767
  %769 = vrot.lane.b32.xlu0 %v670, 3
  %v770 = vpop.permute.xlu0 %769
  %771 = vrot.lane.b32.xlu0 %v671, 3
  %v772 = vpop.permute.xlu0 %771
  %773 = vrot.lane.b32.xlu0 %v672, 3
  %v774 = vpop.permute.xlu0 %773
  %vm775 = vcmask 23552
  %v776 = vsel %vm775, %v768, %v770
  %v777 = vsel %vm775, %v770, %v772
  %v778 = vsel %vm775, %v772, %v774
  %782 = vst [vmem:[#allocation2 + $0x780] sm:$0xff] %v776
  %783 = vst [vmem:[#allocation2 + $0x788] sm:$0xff] %v777
  %784 = vst [vmem:[#allocation2 + $0x790] sm:$0xff] %v778
  %785 = vrot.lane.b32.xlu0 %v669, 2
  %v786 = vpop.permute.xlu0 %785
  %787 = vrot.lane.b32.xlu0 %v670, 2
  %v788 = vpop.permute.xlu0 %787
  %789 = vrot.lane.b32.xlu0 %v671, 2
  %v790 = vpop.permute.xlu0 %789
  %791 = vrot.lane.b32.xlu0 %v672, 2
  %v792 = vpop.permute.xlu0 %791
  %vm793 = vcmask 15360
  %v794 = vsel %vm793, %v786, %v788
  %v795 = vsel %vm793, %v788, %v790
  %v796 = vsel %vm793, %v790, %v792
  %800 = vst [vmem:[#allocation2 + $0x7b0] sm:$0xff] %v794
  %801 = vst [vmem:[#allocation2 + $0x7b8] sm:$0xff] %v795
  %802 = vst [vmem:[#allocation2 + $0x7c0] sm:$0xff] %v796
  %v803 = vld [vmem:[%s0 + $0x8] sm:$0xff]
  %v804 = vld [vmem:[%s0 + $0x10] sm:$0xff]
  %v805 = vld [vmem:[%s0 + $0x18] sm:$0xff]
  %v806 = vld [vmem:[%s0 + $0x20] sm:$0xff]
  %811 = vrot.lane.b32.xlu0 %v803, 112
  %v812 = vpop.permute.xlu0 %811
  %813 = vrot.lane.b32.xlu0 %v804, 112
  %v814 = vpop.permute.xlu0 %813
  %815 = vrot.lane.b32.xlu0 %v805, 112
  %v816 = vpop.permute.xlu0 %815
  %817 = vrot.lane.b32.xlu0 %v806, 112
  %v818 = vpop.permute.xlu0 %817
  %vm819 = vcmask 916480
  %v820 = vsel %vm819, %v812, %v814
  %v821 = vsel %vm819, %v814, %v816
  %v822 = vsel %vm819, %v816, %v818
  %826 = vst [vmem:[#allocation2 + $0x7e0] sm:$0xff] %v820
  %827 = vst [vmem:[#allocation2 + $0x7e8] sm:$0xff] %v821
  %828 = vst [vmem:[#allocation2 + $0x7f0] sm:$0xff] %v822
  %829 = vrot.lane.b32.xlu0 %v803, 111
  %v830 = vpop.permute.xlu0 %829
  %831 = vrot.lane.b32.xlu0 %v804, 111
  %v832 = vpop.permute.xlu0 %831
  %833 = vrot.lane.b32.xlu0 %v805, 111
  %v834 = vpop.permute.xlu0 %833
  %835 = vrot.lane.b32.xlu0 %v806, 111
  %v836 = vpop.permute.xlu0 %835
  %vm837 = vcmask 908288
  %v838 = vsel %vm837, %v830, %v832
  %v839 = vsel %vm837, %v832, %v834
  %v840 = vsel %vm837, %v834, %v836
  %844 = vst [vmem:[#allocation2 + $0x810] sm:$0xff] %v838
  %845 = vst [vmem:[#allocation2 + $0x818] sm:$0xff] %v839
  %846 = vst [vmem:[#allocation2 + $0x820] sm:$0xff] %v840
  %847 = vrot.lane.b32.xlu0 %v803, 110
  %v848 = vpop.permute.xlu0 %847
  %849 = vrot.lane.b32.xlu0 %v804, 110
  %v850 = vpop.permute.xlu0 %849
  %851 = vrot.lane.b32.xlu0 %v805, 110
  %v852 = vpop.permute.xlu0 %851
  %853 = vrot.lane.b32.xlu0 %v806, 110
  %v854 = vpop.permute.xlu0 %853
  %vm855 = vcmask 900096
  %v856 = vsel %vm855, %v848, %v850
  %v857 = vsel %vm855, %v850, %v852
  %v858 = vsel %vm855, %v852, %v854
  %862 = vst [vmem:[#allocation2 + $0x840] sm:$0xff] %v856
  %863 = vst [vmem:[#allocation2 + $0x848] sm:$0xff] %v857
  %864 = vst [vmem:[#allocation2 + $0x850] sm:$0xff] %v858
  %865 = vrot.lane.b32.xlu0 %v803, 109
  %v866 = vpop.permute.xlu0 %865
  %867 = vrot.lane.b32.xlu0 %v804, 109
  %v868 = vpop.permute.xlu0 %867
  %869 = vrot.lane.b32.xlu0 %v805, 109
  %v870 = vpop.permute.xlu0 %869
  %871 = vrot.lane.b32.xlu0 %v806, 109
  %v872 = vpop.permute.xlu0 %871
  %vm873 = vcmask 891904
  %v874 = vsel %vm873, %v866, %v868
  %v875 = vsel %vm873, %v868, %v870
  %v876 = vsel %vm873, %v870, %v872
  %880 = vst [vmem:[#allocation2 + $0x870] sm:$0xff] %v874
  %881 = vst [vmem:[#allocation2 + $0x878] sm:$0xff] %v875
  %882 = vst [vmem:[#allocation2 + $0x880] sm:$0xff] %v876
  %883 = vrot.lane.b32.xlu0 %v803, 108
  %v884 = vpop.permute.xlu0 %883
  %885 = vrot.lane.b32.xlu0 %v804, 108
  %v886 = vpop.permute.xlu0 %885
  %887 = vrot.lane.b32.xlu0 %v805, 108
  %v888 = vpop.permute.xlu0 %887
  %889 = vrot.lane.b32.xlu0 %v806, 108
  %v890 = vpop.permute.xlu0 %889
  %vm891 = vcmask 883712
  %v892 = vsel %vm891, %v884, %v886
  %v893 = vsel %vm891, %v886, %v888
  %v894 = vsel %vm891, %v888, %v890
  %898 = vst [vmem:[#allocation2 + $0x8a0] sm:$0xff] %v892
  %899 = vst [vmem:[#allocation2 + $0x8a8] sm:$0xff] %v893
  %900 = vst [vmem:[#allocation2 + $0x8b0] sm:$0xff] %v894
  %901 = vrot.lane.b32.xlu0 %v803, 107
  %v902 = vpop.permute.xlu0 %901
  %903 = vrot.lane.b32.xlu0 %v804, 107
  %v904 = vpop.permute.xlu0 %903
  %905 = vrot.lane.b32.xlu0 %v805, 107
  %v906 = vpop.permute.xlu0 %905
  %907 = vrot.lane.b32.xlu0 %v806, 107
  %v908 = vpop.permute.xlu0 %907
  %vm909 = vcmask 875520
  %v910 = vsel %vm909, %v902, %v904
  %v911 = vsel %vm909, %v904, %v906
  %v912 = vsel %vm909, %v906, %v908
  %916 = vst [vmem:[#allocation2 + $0x8d0] sm:$0xff] %v910
  %917 = vst [vmem:[#allocation2 + $0x8d8] sm:$0xff] %v911
  %918 = vst [vmem:[#allocation2 + $0x8e0] sm:$0xff] %v912
  %919 = vrot.lane.b32.xlu0 %v803, 106
  %v920 = vpop.permute.xlu0 %919
  %921 = vrot.lane.b32.xlu0 %v804, 106
  %v922 = vpop.permute.xlu0 %921
  %923 = vrot.lane.b32.xlu0 %v805, 106
  %v924 = vpop.permute.xlu0 %923
  %925 = vrot.lane.b32.xlu0 %v806, 106
  %v926 = vpop.permute.xlu0 %925
  %vm927 = vcmask 867328
  %v928 = vsel %vm927, %v920, %v922
  %v929 = vsel %vm927, %v922, %v924
  %v930 = vsel %vm927, %v924, %v926
  %934 = vst [vmem:[#allocation2 + $0x900] sm:$0xff] %v928
  %935 = vst [vmem:[#allocation2 + $0x908] sm:$0xff] %v929
  %936 = vst [vmem:[#allocation2 + $0x910] sm:$0xff] %v930
  %s937 = scalar_lea.vmem %s0, 40
  %v938 = vld [vmem:[%s937] sm:$0xff]
  %v939 = vld [vmem:[%s937 + $0x8] sm:$0xff]
  %v940 = vld [vmem:[%s937 + $0x10] sm:$0xff]
  %v941 = vld [vmem:[%s937 + $0x18] sm:$0xff]
  %942 = vst [vmem:[#allocation2 + $0x18] sm:$0xff] %v938
  %943 = vst [vmem:[#allocation2 + $0x20] sm:$0xff] %v939
  %944 = vst [vmem:[#allocation2 + $0x28] sm:$0xff] %v940
  %949 = vrot.lane.b32.xlu0 %v938, 127
  %v950 = vpop.permute.xlu0 %949
  %951 = vrot.lane.b32.xlu0 %v939, 127
  %v952 = vpop.permute.xlu0 %951
  %953 = vrot.lane.b32.xlu0 %v940, 127
  %v954 = vpop.permute.xlu0 %953
  %955 = vrot.lane.b32.xlu0 %v941, 127
  %v956 = vpop.permute.xlu0 %955
  %v957 = vsel %vm33, %v950, %v952
  %v958 = vsel %vm33, %v952, %v954
  %v959 = vsel %vm33, %v954, %v956
  %963 = vst [vmem:[#allocation2 + $0x48] sm:$0xff] %v957
  %964 = vst [vmem:[#allocation2 + $0x50] sm:$0xff] %v958
  %965 = vst [vmem:[#allocation2 + $0x58] sm:$0xff] %v959
  %966 = vrot.lane.b32.xlu0 %v938, 126
  %v967 = vpop.permute.xlu0 %966
  %968 = vrot.lane.b32.xlu0 %v939, 126
  %v969 = vpop.permute.xlu0 %968
  %970 = vrot.lane.b32.xlu0 %v940, 126
  %v971 = vpop.permute.xlu0 %970
  %972 = vrot.lane.b32.xlu0 %v941, 126
  %v973 = vpop.permute.xlu0 %972
  %v974 = vsel %vm51, %v967, %v969
  %v975 = vsel %vm51, %v969, %v971
  %v976 = vsel %vm51, %v971, %v973
  %980 = vst [vmem:[#allocation2 + $0x78] sm:$0xff] %v974
  %981 = vst [vmem:[#allocation2 + $0x80] sm:$0xff] %v975
  %982 = vst [vmem:[#allocation2 + $0x88] sm:$0xff] %v976
  %983 = vrot.lane.b32.xlu0 %v938, 125
  %v984 = vpop.permute.xlu0 %983
  %985 = vrot.lane.b32.xlu0 %v939, 125
  %v986 = vpop.permute.xlu0 %985
  %987 = vrot.lane.b32.xlu0 %v940, 125
  %v988 = vpop.permute.xlu0 %987
  %989 = vrot.lane.b32.xlu0 %v941, 125
  %v990 = vpop.permute.xlu0 %989
  %v991 = vsel %vm69, %v984, %v986
  %v992 = vsel %vm69, %v986, %v988
  %v993 = vsel %vm69, %v988, %v990
  %997 = vst [vmem:[#allocation2 + $0xa8] sm:$0xff] %v991
  %998 = vst [vmem:[#allocation2 + $0xb0] sm:$0xff] %v992
  %999 = vst [vmem:[#allocation2 + $0xb8] sm:$0xff] %v993
  %1000 = vrot.lane.b32.xlu0 %v938, 124
  %v1001 = vpop.permute.xlu0 %1000
  %1002 = vrot.lane.b32.xlu0 %v939, 124
  %v1003 = vpop.permute.xlu0 %1002
  %1004 = vrot.lane.b32.xlu0 %v940, 124
  %v1005 = vpop.permute.xlu0 %1004
  %1006 = vrot.lane.b32.xlu0 %v941, 124
  %v1007 = vpop.permute.xlu0 %1006
  %v1008 = vsel %vm87, %v1001, %v1003
  %v1009 = vsel %vm87, %v1003, %v1005
  %v1010 = vsel %vm87, %v1005, %v1007
  %1014 = vst [vmem:[#allocation2 + $0xd8] sm:$0xff] %v1008
  %1015 = vst [vmem:[#allocation2 + $0xe0] sm:$0xff] %v1009
  %1016 = vst [vmem:[#allocation2 + $0xe8] sm:$0xff] %v1010
  %1017 = vrot.lane.b32.xlu0 %v938, 123
  %v1018 = vpop.permute.xlu0 %1017
  %1019 = vrot.lane.b32.xlu0 %v939, 123
  %v1020 = vpop.permute.xlu0 %1019
  %1021 = vrot.lane.b32.xlu0 %v940, 123
  %v1022 = vpop.permute.xlu0 %1021
  %1023 = vrot.lane.b32.xlu0 %v941, 123
  %v1024 = vpop.permute.xlu0 %1023
  %v1025 = vsel %vm105, %v1018, %v1020
  %v1026 = vsel %vm105, %v1020, %v1022
  %v1027 = vsel %vm105, %v1022, %v1024
  %1031 = vst [vmem:[#allocation2 + $0x108] sm:$0xff] %v1025
  %1032 = vst [vmem:[#allocation2 + $0x110] sm:$0xff] %v1026
  %1033 = vst [vmem:[#allocation2 + $0x118] sm:$0xff] %v1027
  %1034 = vrot.lane.b32.xlu0 %v938, 122
  %v1035 = vpop.permute.xlu0 %1034
  %1036 = vrot.lane.b32.xlu0 %v939, 122
  %v1037 = vpop.permute.xlu0 %1036
  %1038 = vrot.lane.b32.xlu0 %v940, 122
  %v1039 = vpop.permute.xlu0 %1038
  %1040 = vrot.lane.b32.xlu0 %v941, 122
  %v1041 = vpop.permute.xlu0 %1040
  %v1042 = vsel %vm123, %v1035, %v1037
  %v1043 = vsel %vm123, %v1037, %v1039
  %v1044 = vsel %vm123, %v1039, %v1041
  %1048 = vst [vmem:[#allocation2 + $0x138] sm:$0xff] %v1042
  %1049 = vst [vmem:[#allocation2 + $0x140] sm:$0xff] %v1043
  %1050 = vst [vmem:[#allocation2 + $0x148] sm:$0xff] %v1044
  %v1051 = vld [vmem:[%s937] sm:$0xff]
  %v1052 = vld [vmem:[%s937 + $0x8] sm:$0xff]
  %v1053 = vld [vmem:[%s937 + $0x10] sm:$0xff]
  %v1054 = vld [vmem:[%s937 + $0x18] sm:$0xff]
  %1059 = vrot.lane.b32.xlu0 %v1051, 104
  %v1060 = vpop.permute.xlu0 %1059
  %1061 = vrot.lane.b32.xlu0 %v1052, 104
  %v1062 = vpop.permute.xlu0 %1061
  %1063 = vrot.lane.b32.xlu0 %v1053, 104
  %v1064 = vpop.permute.xlu0 %1063
  %1065 = vrot.lane.b32.xlu0 %v1054, 104
  %v1066 = vpop.permute.xlu0 %1065
  %v1067 = vsel %vm149, %v1060, %v1062
  %v1068 = vsel %vm149, %v1062, %v1064
  %v1069 = vsel %vm149, %v1064, %v1066
  %1073 = vst [vmem:[#allocation2 + $0x168] sm:$0xff] %v1067
  %1074 = vst [vmem:[#allocation2 + $0x170] sm:$0xff] %v1068
  %1075 = vst [vmem:[#allocation2 + $0x178] sm:$0xff] %v1069
  %1076 = vrot.lane.b32.xlu0 %v1051, 103
  %v1077 = vpop.permute.xlu0 %1076
  %1078 = vrot.lane.b32.xlu0 %v1052, 103
  %v1079 = vpop.permute.xlu0 %1078
  %1080 = vrot.lane.b32.xlu0 %v1053, 103
  %v1081 = vpop.permute.xlu0 %1080
  %1082 = vrot.lane.b32.xlu0 %v1054, 103
  %v1083 = vpop.permute.xlu0 %1082
  %v1084 = vsel %vm167, %v1077, %v1079
  %v1085 = vsel %vm167, %v1079, %v1081
  %v1086 = vsel %vm167, %v1081, %v1083
  %1090 = vst [vmem:[#allocation2 + $0x198] sm:$0xff] %v1084
  %1091 = vst [vmem:[#allocation2 + $0x1a0] sm:$0xff] %v1085
  %1092 = vst [vmem:[#allocation2 + $0x1a8] sm:$0xff] %v1086
  %1093 = vrot.lane.b32.xlu0 %v1051, 102
  %v1094 = vpop.permute.xlu0 %1093
  %1095 = vrot.lane.b32.xlu0 %v1052, 102
  %v1096 = vpop.permute.xlu0 %1095
  %1097 = vrot.lane.b32.xlu0 %v1053, 102
  %v1098 = vpop.permute.xlu0 %1097
  %1099 = vrot.lane.b32.xlu0 %v1054, 102
  %v1100 = vpop.permute.xlu0 %1099
  %v1101 = vsel %vm185, %v1094, %v1096
  %v1102 = vsel %vm185, %v1096, %v1098
  %v1103 = vsel %vm185, %v1098, %v1100
  %1107 = vst [vmem:[#allocation2 + $0x1c8] sm:$0xff] %v1101
  %1108 = vst [vmem:[#allocation2 + $0x1d0] sm:$0xff] %v1102
  %1109 = vst [vmem:[#allocation2 + $0x1d8] sm:$0xff] %v1103
  %1110 = vrot.lane.b32.xlu0 %v1051, 101
  %v1111 = vpop.permute.xlu0 %1110
  %1112 = vrot.lane.b32.xlu0 %v1052, 101
  %v1113 = vpop.permute.xlu0 %1112
  %1114 = vrot.lane.b32.xlu0 %v1053, 101
  %v1115 = vpop.permute.xlu0 %1114
  %1116 = vrot.lane.b32.xlu0 %v1054, 101
  %v1117 = vpop.permute.xlu0 %1116
  %v1118 = vsel %vm203, %v1111, %v1113
  %v1119 = vsel %vm203, %v1113, %v1115
  %v1120 = vsel %vm203, %v1115, %v1117
  %1124 = vst [vmem:[#allocation2 + $0x1f8] sm:$0xff] %v1118
  %1125 = vst [vmem:[#allocation2 + $0x200] sm:$0xff] %v1119
  %1126 = vst [vmem:[#allocation2 + $0x208] sm:$0xff] %v1120
  %1127 = vrot.lane.b32.xlu0 %v1051, 100
  %v1128 = vpop.permute.xlu0 %1127
  %1129 = vrot.lane.b32.xlu0 %v1052, 100
  %v1130 = vpop.permute.xlu0 %1129
  %1131 = vrot.lane.b32.xlu0 %v1053, 100
  %v1132 = vpop.permute.xlu0 %1131
  %1133 = vrot.lane.b32.xlu0 %v1054, 100
  %v1134 = vpop.permute.xlu0 %1133
  %v1135 = vsel %vm221, %v1128, %v1130
  %v1136 = vsel %vm221, %v1130, %v1132
  %v1137 = vsel %vm221, %v1132, %v1134
  %1141 = vst [vmem:[#allocation2 + $0x228] sm:$0xff] %v1135
  %1142 = vst [vmem:[#allocation2 + $0x230] sm:$0xff] %v1136
  %1143 = vst [vmem:[#allocation2 + $0x238] sm:$0xff] %v1137
  %1144 = vrot.lane.b32.xlu0 %v1051, 99
  %v1145 = vpop.permute.xlu0 %1144
  %1146 = vrot.lane.b32.xlu0 %v1052, 99
  %v1147 = vpop.permute.xlu0 %1146
  %1148 = vrot.lane.b32.xlu0 %v1053, 99
  %v1149 = vpop.permute.xlu0 %1148
  %1150 = vrot.lane.b32.xlu0 %v1054, 99
  %v1151 = vpop.permute.xlu0 %1150
  %v1152 = vsel %vm239, %v1145, %v1147
  %v1153 = vsel %vm239, %v1147, %v1149
  %v1154 = vsel %vm239, %v1149, %v1151
  %1158 = vst [vmem:[#allocation2 + $0x258] sm:$0xff] %v1152
  %1159 = vst [vmem:[#allocation2 + $0x260] sm:$0xff] %v1153
  %1160 = vst [vmem:[#allocation2 + $0x268] sm:$0xff] %v1154
  %1161 = vrot.lane.b32.xlu0 %v1051, 98
  %v1162 = vpop.permute.xlu0 %1161
  %1163 = vrot.lane.b32.xlu0 %v1052, 98
  %v1164 = vpop.permute.xlu0 %1163
  %1165 = vrot.lane.b32.xlu0 %v1053, 98
  %v1166 = vpop.permute.xlu0 %1165
  %1167 = vrot.lane.b32.xlu0 %v1054, 98
  %v1168 = vpop.permute.xlu0 %1167
  %v1169 = vsel %vm257, %v1162, %v1164
  %v1170 = vsel %vm257, %v1164, %v1166
  %v1171 = vsel %vm257, %v1166, %v1168
  %1175 = vst [vmem:[#allocation2 + $0x288] sm:$0xff] %v1169
  %1176 = vst [vmem:[#allocation2 + $0x290] sm:$0xff] %v1170
  %1177 = vst [vmem:[#allocation2 + $0x298] sm:$0xff] %v1171
  %v1178 = vld [vmem:[%s937] sm:$0xff]
  %v1179 = vld [vmem:[%s937 + $0x8] sm:$0xff]
  %v1180 = vld [vmem:[%s937 + $0x10] sm:$0xff]
  %v1181 = vld [vmem:[%s937 + $0x18] sm:$0xff]
  %1186 = vrot.lane.b32.xlu0 %v1178, 80
  %v1187 = vpop.permute.xlu0 %1186
  %1188 = vrot.lane.b32.xlu0 %v1179, 80
  %v1189 = vpop.permute.xlu0 %1188
  %1190 = vrot.lane.b32.xlu0 %v1180, 80
  %v1191 = vpop.permute.xlu0 %1190
  %1192 = vrot.lane.b32.xlu0 %v1181, 80
  %v1193 = vpop.permute.xlu0 %1192
  %v1194 = vsel %vm283, %v1187, %v1189
  %v1195 = vsel %vm283, %v1189, %v1191
  %v1196 = vsel %vm283, %v1191, %v1193
  %1200 = vst [vmem:[#allocation2 + $0x2b8] sm:$0xff] %v1194
  %1201 = vst [vmem:[#allocation2 + $0x2c0] sm:$0xff] %v1195
  %1202 = vst [vmem:[#allocation2 + $0x2c8] sm:$0xff] %v1196
  %1203 = vrot.lane.b32.xlu0 %v1178, 79
  %v1204 = vpop.permute.xlu0 %1203
  %1205 = vrot.lane.b32.xlu0 %v1179, 79
  %v1206 = vpop.permute.xlu0 %1205
  %1207 = vrot.lane.b32.xlu0 %v1180, 79
  %v1208 = vpop.permute.xlu0 %1207
  %1209 = vrot.lane.b32.xlu0 %v1181, 79
  %v1210 = vpop.permute.xlu0 %1209
  %v1211 = vsel %vm301, %v1204, %v1206
  %v1212 = vsel %vm301, %v1206, %v1208
  %v1213 = vsel %vm301, %v1208, %v1210
  %1217 = vst [vmem:[#allocation2 + $0x2e8] sm:$0xff] %v1211
  %1218 = vst [vmem:[#allocation2 + $0x2f0] sm:$0xff] %v1212
  %1219 = vst [vmem:[#allocation2 + $0x2f8] sm:$0xff] %v1213
  %1220 = vrot.lane.b32.xlu0 %v1178, 78
  %v1221 = vpop.permute.xlu0 %1220
  %1222 = vrot.lane.b32.xlu0 %v1179, 78
  %v1223 = vpop.permute.xlu0 %1222
  %1224 = vrot.lane.b32.xlu0 %v1180, 78
  %v1225 = vpop.permute.xlu0 %1224
  %1226 = vrot.lane.b32.xlu0 %v1181, 78
  %v1227 = vpop.permute.xlu0 %1226
  %v1228 = vsel %vm319, %v1221, %v1223
  %v1229 = vsel %vm319, %v1223, %v1225
  %v1230 = vsel %vm319, %v1225, %v1227
  %1234 = vst [vmem:[#allocation2 + $0x318] sm:$0xff] %v1228
  %1235 = vst [vmem:[#allocation2 + $0x320] sm:$0xff] %v1229
  %1236 = vst [vmem:[#allocation2 + $0x328] sm:$0xff] %v1230
  %1237 = vrot.lane.b32.xlu0 %v1178, 77
  %v1238 = vpop.permute.xlu0 %1237
  %1239 = vrot.lane.b32.xlu0 %v1179, 77
  %v1240 = vpop.permute.xlu0 %1239
  %1241 = vrot.lane.b32.xlu0 %v1180, 77
  %v1242 = vpop.permute.xlu0 %1241
  %1243 = vrot.lane.b32.xlu0 %v1181, 77
  %v1244 = vpop.permute.xlu0 %1243
  %v1245 = vsel %vm337, %v1238, %v1240
  %v1246 = vsel %vm337, %v1240, %v1242
  %v1247 = vsel %vm337, %v1242, %v1244
  %1251 = vst [vmem:[#allocation2 + $0x348] sm:$0xff] %v1245
  %1252 = vst [vmem:[#allocation2 + $0x350] sm:$0xff] %v1246
  %1253 = vst [vmem:[#allocation2 + $0x358] sm:$0xff] %v1247
  %1254 = vrot.lane.b32.xlu0 %v1178, 76
  %v1255 = vpop.permute.xlu0 %1254
  %1256 = vrot.lane.b32.xlu0 %v1179, 76
  %v1257 = vpop.permute.xlu0 %1256
  %1258 = vrot.lane.b32.xlu0 %v1180, 76
  %v1259 = vpop.permute.xlu0 %1258
  %1260 = vrot.lane.b32.xlu0 %v1181, 76
  %v1261 = vpop.permute.xlu0 %1260
  %v1262 = vsel %vm355, %v1255, %v1257
  %v1263 = vsel %vm355, %v1257, %v1259
  %v1264 = vsel %vm355, %v1259, %v1261
  %1268 = vst [vmem:[#allocation2 + $0x378] sm:$0xff] %v1262
  %1269 = vst [vmem:[#allocation2 + $0x380] sm:$0xff] %v1263
  %1270 = vst [vmem:[#allocation2 + $0x388] sm:$0xff] %v1264
  %1271 = vrot.lane.b32.xlu0 %v1178, 75
  %v1272 = vpop.permute.xlu0 %1271
  %1273 = vrot.lane.b32.xlu0 %v1179, 75
  %v1274 = vpop.permute.xlu0 %1273
  %1275 = vrot.lane.b32.xlu0 %v1180, 75
  %v1276 = vpop.permute.xlu0 %1275
  %1277 = vrot.lane.b32.xlu0 %v1181, 75
  %v1278 = vpop.permute.xlu0 %1277
  %v1279 = vsel %vm373, %v1272, %v1274
  %v1280 = vsel %vm373, %v1274, %v1276
  %v1281 = vsel %vm373, %v1276, %v1278
  %1285 = vst [vmem:[#allocation2 + $0x3a8] sm:$0xff] %v1279
  %1286 = vst [vmem:[#allocation2 + $0x3b0] sm:$0xff] %v1280
  %1287 = vst [vmem:[#allocation2 + $0x3b8] sm:$0xff] %v1281
  %1288 = vrot.lane.b32.xlu0 %v1178, 74
  %v1289 = vpop.permute.xlu0 %1288
  %1290 = vrot.lane.b32.xlu0 %v1179, 74
  %v1291 = vpop.permute.xlu0 %1290
  %1292 = vrot.lane.b32.xlu0 %v1180, 74
  %v1293 = vpop.permute.xlu0 %1292
  %1294 = vrot.lane.b32.xlu0 %v1181, 74
  %v1295 = vpop.permute.xlu0 %1294
  %v1296 = vsel %vm391, %v1289, %v1291
  %v1297 = vsel %vm391, %v1291, %v1293
  %v1298 = vsel %vm391, %v1293, %v1295
  %1302 = vst [vmem:[#allocation2 + $0x3d8] sm:$0xff] %v1296
  %1303 = vst [vmem:[#allocation2 + $0x3e0] sm:$0xff] %v1297
  %1304 = vst [vmem:[#allocation2 + $0x3e8] sm:$0xff] %v1298
  %v1305 = vld [vmem:[%s937] sm:$0xff]
  %v1306 = vld [vmem:[%s937 + $0x8] sm:$0xff]
  %v1307 = vld [vmem:[%s937 + $0x10] sm:$0xff]
  %v1308 = vld [vmem:[%s937 + $0x18] sm:$0xff]
  %1313 = vrot.lane.b32.xlu0 %v1305, 56
  %v1314 = vpop.permute.xlu0 %1313
  %1315 = vrot.lane.b32.xlu0 %v1306, 56
  %v1316 = vpop.permute.xlu0 %1315
  %1317 = vrot.lane.b32.xlu0 %v1307, 56
  %v1318 = vpop.permute.xlu0 %1317
  %1319 = vrot.lane.b32.xlu0 %v1308, 56
  %v1320 = vpop.permute.xlu0 %1319
  %v1321 = vsel %vm417, %v1314, %v1316
  %v1322 = vsel %vm417, %v1316, %v1318
  %v1323 = vsel %vm417, %v1318, %v1320
  %1327 = vst [vmem:[#allocation2 + $0x408] sm:$0xff] %v1321
  %1328 = vst [vmem:[#allocation2 + $0x410] sm:$0xff] %v1322
  %1329 = vst [vmem:[#allocation2 + $0x418] sm:$0xff] %v1323
  %1330 = vrot.lane.b32.xlu0 %v1305, 55
  %v1331 = vpop.permute.xlu0 %1330
  %1332 = vrot.lane.b32.xlu0 %v1306, 55
  %v1333 = vpop.permute.xlu0 %1332
  %1334 = vrot.lane.b32.xlu0 %v1307, 55
  %v1335 = vpop.permute.xlu0 %1334
  %1336 = vrot.lane.b32.xlu0 %v1308, 55
  %v1337 = vpop.permute.xlu0 %1336
  %v1338 = vsel %vm435, %v1331, %v1333
  %v1339 = vsel %vm435, %v1333, %v1335
  %v1340 = vsel %vm435, %v1335, %v1337
  %1344 = vst [vmem:[#allocation2 + $0x438] sm:$0xff] %v1338
  %1345 = vst [vmem:[#allocation2 + $0x440] sm:$0xff] %v1339
  %1346 = vst [vmem:[#allocation2 + $0x448] sm:$0xff] %v1340
  %1347 = vrot.lane.b32.xlu0 %v1305, 54
  %v1348 = vpop.permute.xlu0 %1347
  %1349 = vrot.lane.b32.xlu0 %v1306, 54
  %v1350 = vpop.permute.xlu0 %1349
  %1351 = vrot.lane.b32.xlu0 %v1307, 54
  %v1352 = vpop.permute.xlu0 %1351
  %1353 = vrot.lane.b32.xlu0 %v1308, 54
  %v1354 = vpop.permute.xlu0 %1353
  %v1355 = vsel %vm453, %v1348, %v1350
  %v1356 = vsel %vm453, %v1350, %v1352
  %v1357 = vsel %vm453, %v1352, %v1354
  %1361 = vst [vmem:[#allocation2 + $0x468] sm:$0xff] %v1355
  %1362 = vst [vmem:[#allocation2 + $0x470] sm:$0xff] %v1356
  %1363 = vst [vmem:[#allocation2 + $0x478] sm:$0xff] %v1357
  %1364 = vrot.lane.b32.xlu0 %v1305, 53
  %v1365 = vpop.permute.xlu0 %1364
  %1366 = vrot.lane.b32.xlu0 %v1306, 53
  %v1367 = vpop.permute.xlu0 %1366
  %1368 = vrot.lane.b32.xlu0 %v1307, 53
  %v1369 = vpop.permute.xlu0 %1368
  %1370 = vrot.lane.b32.xlu0 %v1308, 53
  %v1371 = vpop.permute.xlu0 %1370
  %v1372 = vsel %vm471, %v1365, %v1367
  %v1373 = vsel %vm471, %v1367, %v1369
  %v1374 = vsel %vm471, %v1369, %v1371
  %1378 = vst [vmem:[#allocation2 + $0x498] sm:$0xff] %v1372
  %1379 = vst [vmem:[#allocation2 + $0x4a0] sm:$0xff] %v1373
  %1380 = vst [vmem:[#allocation2 + $0x4a8] sm:$0xff] %v1374
  %1381 = vrot.lane.b32.xlu0 %v1305, 52
  %v1382 = vpop.permute.xlu0 %1381
  %1383 = vrot.lane.b32.xlu0 %v1306, 52
  %v1384 = vpop.permute.xlu0 %1383
  %1385 = vrot.lane.b32.xlu0 %v1307, 52
  %v1386 = vpop.permute.xlu0 %1385
  %1387 = vrot.lane.b32.xlu0 %v1308, 52
  %v1388 = vpop.permute.xlu0 %1387
  %v1389 = vsel %vm489, %v1382, %v1384
  %v1390 = vsel %vm489, %v1384, %v1386
  %v1391 = vsel %vm489, %v1386, %v1388
  %1395 = vst [vmem:[#allocation2 + $0x4c8] sm:$0xff] %v1389
  %1396 = vst [vmem:[#allocation2 + $0x4d0] sm:$0xff] %v1390
  %1397 = vst [vmem:[#allocation2 + $0x4d8] sm:$0xff] %v1391
  %1398 = vrot.lane.b32.xlu0 %v1305, 51
  %v1399 = vpop.permute.xlu0 %1398
  %1400 = vrot.lane.b32.xlu0 %v1306, 51
  %v1401 = vpop.permute.xlu0 %1400
  %1402 = vrot.lane.b32.xlu0 %v1307, 51
  %v1403 = vpop.permute.xlu0 %1402
  %1404 = vrot.lane.b32.xlu0 %v1308, 51
  %v1405 = vpop.permute.xlu0 %1404
  %v1406 = vsel %vm507, %v1399, %v1401
  %v1407 = vsel %vm507, %v1401, %v1403
  %v1408 = vsel %vm507, %v1403, %v1405
  %1412 = vst [vmem:[#allocation2 + $0x4f8] sm:$0xff] %v1406
  %1413 = vst [vmem:[#allocation2 + $0x500] sm:$0xff] %v1407
  %1414 = vst [vmem:[#allocation2 + $0x508] sm:$0xff] %v1408
  %1415 = vrot.lane.b32.xlu0 %v1305, 50
  %v1416 = vpop.permute.xlu0 %1415
  %1417 = vrot.lane.b32.xlu0 %v1306, 50
  %v1418 = vpop.permute.xlu0 %1417
  %1419 = vrot.lane.b32.xlu0 %v1307, 50
  %v1420 = vpop.permute.xlu0 %1419
  %1421 = vrot.lane.b32.xlu0 %v1308, 50
  %v1422 = vpop.permute.xlu0 %1421
  %v1423 = vsel %vm525, %v1416, %v1418
  %v1424 = vsel %vm525, %v1418, %v1420
  %v1425 = vsel %vm525, %v1420, %v1422
  %1429 = vst [vmem:[#allocation2 + $0x528] sm:$0xff] %v1423
  %1430 = vst [vmem:[#allocation2 + $0x530] sm:$0xff] %v1424
  %1431 = vst [vmem:[#allocation2 + $0x538] sm:$0xff] %v1425
  %v1432 = vld [vmem:[%s937] sm:$0xff]
  %v1433 = vld [vmem:[%s937 + $0x8] sm:$0xff]
  %v1434 = vld [vmem:[%s937 + $0x10] sm:$0xff]
  %v1435 = vld [vmem:[%s937 + $0x18] sm:$0xff]
  %1440 = vrot.lane.b32.xlu0 %v1432, 32
  %v1441 = vpop.permute.xlu0 %1440
  %1442 = vrot.lane.b32.xlu0 %v1433, 32
  %v1443 = vpop.permute.xlu0 %1442
  %1444 = vrot.lane.b32.xlu0 %v1434, 32
  %v1445 = vpop.permute.xlu0 %1444
  %1446 = vrot.lane.b32.xlu0 %v1435, 32
  %v1447 = vpop.permute.xlu0 %1446
  %v1448 = vsel %vm551, %v1441, %v1443
  %v1449 = vsel %vm551, %v1443, %v1445
  %v1450 = vsel %vm551, %v1445, %v1447
  %1454 = vst [vmem:[#allocation2 + $0x558] sm:$0xff] %v1448
  %1455 = vst [vmem:[#allocation2 + $0x560] sm:$0xff] %v1449
  %1456 = vst [vmem:[#allocation2 + $0x568] sm:$0xff] %v1450
  %1457 = vrot.lane.b32.xlu0 %v1432, 31
  %v1458 = vpop.permute.xlu0 %1457
  %1459 = vrot.lane.b32.xlu0 %v1433, 31
  %v1460 = vpop.permute.xlu0 %1459
  %1461 = vrot.lane.b32.xlu0 %v1434, 31
  %v1462 = vpop.permute.xlu0 %1461
  %1463 = vrot.lane.b32.xlu0 %v1435, 31
  %v1464 = vpop.permute.xlu0 %1463
  %v1465 = vsel %vm569, %v1458, %v1460
  %v1466 = vsel %vm569, %v1460, %v1462
  %v1467 = vsel %vm569, %v1462, %v1464
  %1471 = vst [vmem:[#allocation2 + $0x588] sm:$0xff] %v1465
  %1472 = vst [vmem:[#allocation2 + $0x590] sm:$0xff] %v1466
  %1473 = vst [vmem:[#allocation2 + $0x598] sm:$0xff] %v1467
  %1474 = vrot.lane.b32.xlu0 %v1432, 30
  %v1475 = vpop.permute.xlu0 %1474
  %1476 = vrot.lane.b32.xlu0 %v1433, 30
  %v1477 = vpop.permute.xlu0 %1476
  %1478 = vrot.lane.b32.xlu0 %v1434, 30
  %v1479 = vpop.permute.xlu0 %1478
  %1480 = vrot.lane.b32.xlu0 %v1435, 30
  %v1481 = vpop.permute.xlu0 %1480
  %v1482 = vsel %vm587, %v1475, %v1477
  %v1483 = vsel %vm587, %v1477, %v1479
  %v1484 = vsel %vm587, %v1479, %v1481
  %1488 = vst [vmem:[#allocation2 + $0x5b8] sm:$0xff] %v1482
  %1489 = vst [vmem:[#allocation2 + $0x5c0] sm:$0xff] %v1483
  %1490 = vst [vmem:[#allocation2 + $0x5c8] sm:$0xff] %v1484
  %1491 = vrot.lane.b32.xlu0 %v1432, 29
  %v1492 = vpop.permute.xlu0 %1491
  %1493 = vrot.lane.b32.xlu0 %v1433, 29
  %v1494 = vpop.permute.xlu0 %1493
  %1495 = vrot.lane.b32.xlu0 %v1434, 29
  %v1496 = vpop.permute.xlu0 %1495
  %1497 = vrot.lane.b32.xlu0 %v1435, 29
  %v1498 = vpop.permute.xlu0 %1497
  %v1499 = vsel %vm605, %v1492, %v1494
  %v1500 = vsel %vm605, %v1494, %v1496
  %v1501 = vsel %vm605, %v1496, %v1498
  %1505 = vst [vmem:[#allocation2 + $0x5e8] sm:$0xff] %v1499
  %1506 = vst [vmem:[#allocation2 + $0x5f0] sm:$0xff] %v1500
  %1507 = vst [vmem:[#allocation2 + $0x5f8] sm:$0xff] %v1501
  %1508 = vrot.lane.b32.xlu0 %v1432, 28
  %v1509 = vpop.permute.xlu0 %1508
  %1510 = vrot.lane.b32.xlu0 %v1433, 28
  %v1511 = vpop.permute.xlu0 %1510
  %1512 = vrot.lane.b32.xlu0 %v1434, 28
  %v1513 = vpop.permute.xlu0 %1512
  %1514 = vrot.lane.b32.xlu0 %v1435, 28
  %v1515 = vpop.permute.xlu0 %1514
  %v1516 = vsel %vm623, %v1509, %v1511
  %v1517 = vsel %vm623, %v1511, %v1513
  %v1518 = vsel %vm623, %v1513, %v1515
  %1522 = vst [vmem:[#allocation2 + $0x618] sm:$0xff] %v1516
  %1523 = vst [vmem:[#allocation2 + $0x620] sm:$0xff] %v1517
  %1524 = vst [vmem:[#allocation2 + $0x628] sm:$0xff] %v1518
  %1525 = vrot.lane.b32.xlu0 %v1432, 27
  %v1526 = vpop.permute.xlu0 %1525
  %1527 = vrot.lane.b32.xlu0 %v1433, 27
  %v1528 = vpop.permute.xlu0 %1527
  %1529 = vrot.lane.b32.xlu0 %v1434, 27
  %v1530 = vpop.permute.xlu0 %1529
  %1531 = vrot.lane.b32.xlu0 %v1435, 27
  %v1532 = vpop.permute.xlu0 %1531
  %v1533 = vsel %vm641, %v1526, %v1528
  %v1534 = vsel %vm641, %v1528, %v1530
  %v1535 = vsel %vm641, %v1530, %v1532
  %1539 = vst [vmem:[#allocation2 + $0x648] sm:$0xff] %v1533
  %1540 = vst [vmem:[#allocation2 + $0x650] sm:$0xff] %v1534
  %1541 = vst [vmem:[#allocation2 + $0x658] sm:$0xff] %v1535
  %1542 = vrot.lane.b32.xlu0 %v1432, 26
  %v1543 = vpop.permute.xlu0 %1542
  %1544 = vrot.lane.b32.xlu0 %v1433, 26
  %v1545 = vpop.permute.xlu0 %1544
  %1546 = vrot.lane.b32.xlu0 %v1434, 26
  %v1547 = vpop.permute.xlu0 %1546
  %1548 = vrot.lane.b32.xlu0 %v1435, 26
  %v1549 = vpop.permute.xlu0 %1548
  %v1550 = vsel %vm659, %v1543, %v1545
  %v1551 = vsel %vm659, %v1545, %v1547
  %v1552 = vsel %vm659, %v1547, %v1549
  %1556 = vst [vmem:[#allocation2 + $0x678] sm:$0xff] %v1550
  %1557 = vst [vmem:[#allocation2 + $0x680] sm:$0xff] %v1551
  %1558 = vst [vmem:[#allocation2 + $0x688] sm:$0xff] %v1552
  %v1559 = vld [vmem:[%s937] sm:$0xff]
  %v1560 = vld [vmem:[%s937 + $0x8] sm:$0xff]
  %v1561 = vld [vmem:[%s937 + $0x10] sm:$0xff]
  %v1562 = vld [vmem:[%s937 + $0x18] sm:$0xff]
  %1567 = vrot.lane.b32.xlu0 %v1559, 8
  %v1568 = vpop.permute.xlu0 %1567
  %1569 = vrot.lane.b32.xlu0 %v1560, 8
  %v1570 = vpop.permute.xlu0 %1569
  %1571 = vrot.lane.b32.xlu0 %v1561, 8
  %v1572 = vpop.permute.xlu0 %1571
  %1573 = vrot.lane.b32.xlu0 %v1562, 8
  %v1574 = vpop.permute.xlu0 %1573
  %v1575 = vsel %vm685, %v1568, %v1570
  %v1576 = vsel %vm685, %v1570, %v1572
  %v1577 = vsel %vm685, %v1572, %v1574
  %1581 = vst [vmem:[#allocation2 + $0x6a8] sm:$0xff] %v1575
  %1582 = vst [vmem:[#allocation2 + $0x6b0] sm:$0xff] %v1576
  %1583 = vst [vmem:[#allocation2 + $0x6b8] sm:$0xff] %v1577
  %1584 = vrot.lane.b32.xlu0 %v1559, 7
  %v1585 = vpop.permute.xlu0 %1584
  %1586 = vrot.lane.b32.xlu0 %v1560, 7
  %v1587 = vpop.permute.xlu0 %1586
  %1588 = vrot.lane.b32.xlu0 %v1561, 7
  %v1589 = vpop.permute.xlu0 %1588
  %1590 = vrot.lane.b32.xlu0 %v1562, 7
  %v1591 = vpop.permute.xlu0 %1590
  %v1592 = vsel %vm703, %v1585, %v1587
  %v1593 = vsel %vm703, %v1587, %v1589
  %v1594 = vsel %vm703, %v1589, %v1591
  %1598 = vst [vmem:[#allocation2 + $0x6d8] sm:$0xff] %v1592
  %1599 = vst [vmem:[#allocation2 + $0x6e0] sm:$0xff] %v1593
  %1600 = vst [vmem:[#allocation2 + $0x6e8] sm:$0xff] %v1594
  %1601 = vrot.lane.b32.xlu0 %v1559, 6
  %v1602 = vpop.permute.xlu0 %1601
  %1603 = vrot.lane.b32.xlu0 %v1560, 6
  %v1604 = vpop.permute.xlu0 %1603
  %1605 = vrot.lane.b32.xlu0 %v1561, 6
  %v1606 = vpop.permute.xlu0 %1605
  %1607 = vrot.lane.b32.xlu0 %v1562, 6
  %v1608 = vpop.permute.xlu0 %1607
  %v1609 = vsel %vm721, %v1602, %v1604
  %v1610 = vsel %vm721, %v1604, %v1606
  %v1611 = vsel %vm721, %v1606, %v1608
  %1615 = vst [vmem:[#allocation2 + $0x708] sm:$0xff] %v1609
  %1616 = vst [vmem:[#allocation2 + $0x710] sm:$0xff] %v1610
  %1617 = vst [vmem:[#allocation2 + $0x718] sm:$0xff] %v1611
  %1618 = vrot.lane.b32.xlu0 %v1559, 5
  %v1619 = vpop.permute.xlu0 %1618
  %1620 = vrot.lane.b32.xlu0 %v1560, 5
  %v1621 = vpop.permute.xlu0 %1620
  %1622 = vrot.lane.b32.xlu0 %v1561, 5
  %v1623 = vpop.permute.xlu0 %1622
  %1624 = vrot.lane.b32.xlu0 %v1562, 5
  %v1625 = vpop.permute.xlu0 %1624
  %v1626 = vsel %vm739, %v1619, %v1621
  %v1627 = vsel %vm739, %v1621, %v1623
  %v1628 = vsel %vm739, %v1623, %v1625
  %1632 = vst [vmem:[#allocation2 + $0x738] sm:$0xff] %v1626
  %1633 = vst [vmem:[#allocation2 + $0x740] sm:$0xff] %v1627
  %1634 = vst [vmem:[#allocation2 + $0x748] sm:$0xff] %v1628
  %1635 = vrot.lane.b32.xlu0 %v1559, 4
  %v1636 = vpop.permute.xlu0 %1635
  %1637 = vrot.lane.b32.xlu0 %v1560, 4
  %v1638 = vpop.permute.xlu0 %1637
  %1639 = vrot.lane.b32.xlu0 %v1561, 4
  %v1640 = vpop.permute.xlu0 %1639
  %1641 = vrot.lane.b32.xlu0 %v1562, 4
  %v1642 = vpop.permute.xlu0 %1641
  %v1643 = vsel %vm757, %v1636, %v1638
  %v1644 = vsel %vm757, %v1638, %v1640
  %v1645 = vsel %vm757, %v1640, %v1642
  %1649 = vst [vmem:[#allocation2 + $0x768] sm:$0xff] %v1643
  %1650 = vst [vmem:[#allocation2 + $0x770] sm:$0xff] %v1644
  %1651 = vst [vmem:[#allocation2 + $0x778] sm:$0xff] %v1645
  %1652 = vrot.lane.b32.xlu0 %v1559, 3
  %v1653 = vpop.permute.xlu0 %1652
  %1654 = vrot.lane.b32.xlu0 %v1560, 3
  %v1655 = vpop.permute.xlu0 %1654
  %1656 = vrot.lane.b32.xlu0 %v1561, 3
  %v1657 = vpop.permute.xlu0 %1656
  %1658 = vrot.lane.b32.xlu0 %v1562, 3
  %v1659 = vpop.permute.xlu0 %1658
  %v1660 = vsel %vm775, %v1653, %v1655
  %v1661 = vsel %vm775, %v1655, %v1657
  %v1662 = vsel %vm775, %v1657, %v1659
  %1666 = vst [vmem:[#allocation2 + $0x798] sm:$0xff] %v1660
  %1667 = vst [vmem:[#allocation2 + $0x7a0] sm:$0xff] %v1661
  %1668 = vst [vmem:[#allocation2 + $0x7a8] sm:$0xff] %v1662
  %1669 = vrot.lane.b32.xlu0 %v1559, 2
  %v1670 = vpop.permute.xlu0 %1669
  %1671 = vrot.lane.b32.xlu0 %v1560, 2
  %v1672 = vpop.permute.xlu0 %1671
  %1673 = vrot.lane.b32.xlu0 %v1561, 2
  %v1674 = vpop.permute.xlu0 %1673
  %1675 = vrot.lane.b32.xlu0 %v1562, 2
  %v1676 = vpop.permute.xlu0 %1675
  %v1677 = vsel %vm793, %v1670, %v1672
  %v1678 = vsel %vm793, %v1672, %v1674
  %v1679 = vsel %vm793, %v1674, %v1676
  %1683 = vst [vmem:[#allocation2 + $0x7c8] sm:$0xff] %v1677
  %1684 = vst [vmem:[#allocation2 + $0x7d0] sm:$0xff] %v1678
  %1685 = vst [vmem:[#allocation2 + $0x7d8] sm:$0xff] %v1679
  %v1686 = vld [vmem:[%s937 + $0x8] sm:$0xff]
  %v1687 = vld [vmem:[%s937 + $0x10] sm:$0xff]
  %v1688 = vld [vmem:[%s937 + $0x18] sm:$0xff]
  %v1689 = vld [vmem:[%s937 + $0x20] sm:$0xff]
  %1694 = vrot.lane.b32.xlu0 %v1686, 112
  %v1695 = vpop.permute.xlu0 %1694
  %1696 = vrot.lane.b32.xlu0 %v1687, 112
  %v1697 = vpop.permute.xlu0 %1696
  %1698 = vrot.lane.b32.xlu0 %v1688, 112
  %v1699 = vpop.permute.xlu0 %1698
  %1700 = vrot.lane.b32.xlu0 %v1689, 112
  %v1701 = vpop.permute.xlu0 %1700
  %v1702 = vsel %vm819, %v1695, %v1697
  %v1703 = vsel %vm819, %v1697, %v1699
  %v1704 = vsel %vm819, %v1699, %v1701
  %1708 = vst [vmem:[#allocation2 + $0x7f8] sm:$0xff] %v1702
  %1709 = vst [vmem:[#allocation2 + $0x800] sm:$0xff] %v1703
  %1710 = vst [vmem:[#allocation2 + $0x808] sm:$0xff] %v1704
  %1711 = vrot.lane.b32.xlu0 %v1686, 111
  %v1712 = vpop.permute.xlu0 %1711
  %1713 = vrot.lane.b32.xlu0 %v1687, 111
  %v1714 = vpop.permute.xlu0 %1713
  %1715 = vrot.lane.b32.xlu0 %v1688, 111
  %v1716 = vpop.permute.xlu0 %1715
  %1717 = vrot.lane.b32.xlu0 %v1689, 111
  %v1718 = vpop.permute.xlu0 %1717
  %v1719 = vsel %vm837, %v1712, %v1714
  %v1720 = vsel %vm837, %v1714, %v1716
  %v1721 = vsel %vm837, %v1716, %v1718
  %1725 = vst [vmem:[#allocation2 + $0x828] sm:$0xff] %v1719
  %1726 = vst [vmem:[#allocation2 + $0x830] sm:$0xff] %v1720
  %1727 = vst [vmem:[#allocation2 + $0x838] sm:$0xff] %v1721
  %1728 = vrot.lane.b32.xlu0 %v1686, 110
  %v1729 = vpop.permute.xlu0 %1728
  %1730 = vrot.lane.b32.xlu0 %v1687, 110
  %v1731 = vpop.permute.xlu0 %1730
  %1732 = vrot.lane.b32.xlu0 %v1688, 110
  %v1733 = vpop.permute.xlu0 %1732
  %1734 = vrot.lane.b32.xlu0 %v1689, 110
  %v1735 = vpop.permute.xlu0 %1734
  %v1736 = vsel %vm855, %v1729, %v1731
  %v1737 = vsel %vm855, %v1731, %v1733
  %v1738 = vsel %vm855, %v1733, %v1735
  %1742 = vst [vmem:[#allocation2 + $0x858] sm:$0xff] %v1736
  %1743 = vst [vmem:[#allocation2 + $0x860] sm:$0xff] %v1737
  %1744 = vst [vmem:[#allocation2 + $0x868] sm:$0xff] %v1738
  %1745 = vrot.lane.b32.xlu0 %v1686, 109
  %v1746 = vpop.permute.xlu0 %1745
  %1747 = vrot.lane.b32.xlu0 %v1687, 109
  %v1748 = vpop.permute.xlu0 %1747
  %1749 = vrot.lane.b32.xlu0 %v1688, 109
  %v1750 = vpop.permute.xlu0 %1749
  %1751 = vrot.lane.b32.xlu0 %v1689, 109
  %v1752 = vpop.permute.xlu0 %1751
  %v1753 = vsel %vm873, %v1746, %v1748
  %v1754 = vsel %vm873, %v1748, %v1750
  %v1755 = vsel %vm873, %v1750, %v1752
  %1759 = vst [vmem:[#allocation2 + $0x888] sm:$0xff] %v1753
  %1760 = vst [vmem:[#allocation2 + $0x890] sm:$0xff] %v1754
  %1761 = vst [vmem:[#allocation2 + $0x898] sm:$0xff] %v1755
  %1762 = vrot.lane.b32.xlu0 %v1686, 108
  %v1763 = vpop.permute.xlu0 %1762
  %1764 = vrot.lane.b32.xlu0 %v1687, 108
  %v1765 = vpop.permute.xlu0 %1764
  %1766 = vrot.lane.b32.xlu0 %v1688, 108
  %v1767 = vpop.permute.xlu0 %1766
  %1768 = vrot.lane.b32.xlu0 %v1689, 108
  %v1769 = vpop.permute.xlu0 %1768
  %v1770 = vsel %vm891, %v1763, %v1765
  %v1771 = vsel %vm891, %v1765, %v1767
  %v1772 = vsel %vm891, %v1767, %v1769
  %1776 = vst [vmem:[#allocation2 + $0x8b8] sm:$0xff] %v1770
  %1777 = vst [vmem:[#allocation2 + $0x8c0] sm:$0xff] %v1771
  %1778 = vst [vmem:[#allocation2 + $0x8c8] sm:$0xff] %v1772
  %1779 = vrot.lane.b32.xlu0 %v1686, 107
  %v1780 = vpop.permute.xlu0 %1779
  %1781 = vrot.lane.b32.xlu0 %v1687, 107
  %v1782 = vpop.permute.xlu0 %1781
  %1783 = vrot.lane.b32.xlu0 %v1688, 107
  %v1784 = vpop.permute.xlu0 %1783
  %1785 = vrot.lane.b32.xlu0 %v1689, 107
  %v1786 = vpop.permute.xlu0 %1785
  %v1787 = vsel %vm909, %v1780, %v1782
  %v1788 = vsel %vm909, %v1782, %v1784
  %v1789 = vsel %vm909, %v1784, %v1786
  %1793 = vst [vmem:[#allocation2 + $0x8e8] sm:$0xff] %v1787
  %1794 = vst [vmem:[#allocation2 + $0x8f0] sm:$0xff] %v1788
  %1795 = vst [vmem:[#allocation2 + $0x8f8] sm:$0xff] %v1789
  %1796 = vrot.lane.b32.xlu0 %v1686, 106
  %v1797 = vpop.permute.xlu0 %1796
  %1798 = vrot.lane.b32.xlu0 %v1687, 106
  %v1799 = vpop.permute.xlu0 %1798
  %1800 = vrot.lane.b32.xlu0 %v1688, 106
  %v1801 = vpop.permute.xlu0 %1800
  %1802 = vrot.lane.b32.xlu0 %v1689, 106
  %v1803 = vpop.permute.xlu0 %1802
  %v1804 = vsel %vm927, %v1797, %v1799
  %v1805 = vsel %vm927, %v1799, %v1801
  %v1806 = vsel %vm927, %v1801, %v1803
  %1810 = vst [vmem:[#allocation2 + $0x918] sm:$0xff] %v1804
  %1811 = vst [vmem:[#allocation2 + $0x920] sm:$0xff] %v1805
  %1812 = vst [vmem:[#allocation2 + $0x928] sm:$0xff] %v1806
  %v1813 = vld [vmem:[%s1] sm:$0xff]
  %v1814 = vld [vmem:[%s1 + $0x8] sm:$0xff]
  %v1815 = vld [vmem:[%s1 + $0x10] sm:$0xff]
  %v1816 = vld [vmem:[%s1 + $0x18] sm:$0xff]
  %v1817 = vld [vmem:[#allocation2] sm:$0xff]
  %v1818 = vld [vmem:[#allocation2 + $0x8] sm:$0xff]
  %v1819 = vld [vmem:[#allocation2 + $0x10] sm:$0xff]
  %v1820 = vld [vmem:[#allocation2 + $0x18] sm:$0xff]
  %v1821 = vld [vmem:[#allocation2 + $0x20] sm:$0xff]
  %v1822 = vld [vmem:[#allocation2 + $0x28] sm:$0xff]
  %v1823 = vld [vmem:[#allocation2 + $0x30] sm:$0xff]
  %v1824 = vld [vmem:[#allocation2 + $0x38] sm:$0xff]
  %v1825 = vld [vmem:[#allocation2 + $0x40] sm:$0xff]
  %v1826 = vld [vmem:[#allocation2 + $0x48] sm:$0xff]
  %v1827 = vld [vmem:[#allocation2 + $0x50] sm:$0xff]
  %v1828 = vld [vmem:[#allocation2 + $0x58] sm:$0xff]
  %v1829 = vld [vmem:[#allocation2 + $0x60] sm:$0xff]
  %v1830 = vld [vmem:[#allocation2 + $0x68] sm:$0xff]
  %v1831 = vld [vmem:[#allocation2 + $0x70] sm:$0xff]
  %v1832 = vld [vmem:[#allocation2 + $0x78] sm:$0xff]
  %v1833 = vld [vmem:[#allocation2 + $0x80] sm:$0xff]
  %v1834 = vld [vmem:[#allocation2 + $0x88] sm:$0xff]
  %v1835 = vld [vmem:[#allocation2 + $0x90] sm:$0xff]
  %v1836 = vld [vmem:[#allocation2 + $0x98] sm:$0xff]
  %v1837 = vld [vmem:[#allocation2 + $0xa0] sm:$0xff]
  %v1838 = vld [vmem:[#allocation2 + $0xa8] sm:$0xff]
  %v1839 = vld [vmem:[#allocation2 + $0xb0] sm:$0xff]
  %v1840 = vld [vmem:[#allocation2 + $0xb8] sm:$0xff]
  %v1841 = vld [vmem:[#allocation2 + $0xc0] sm:$0xff]
  %v1842 = vld [vmem:[#allocation2 + $0xc8] sm:$0xff]
  %v1843 = vld [vmem:[#allocation2 + $0xd0] sm:$0xff]
  %v1844 = vld [vmem:[#allocation2 + $0xd8] sm:$0xff]
  %v1845 = vld [vmem:[#allocation2 + $0xe0] sm:$0xff]
  %v1846 = vld [vmem:[#allocation2 + $0xe8] sm:$0xff]
  %v1847 = vld [vmem:[#allocation2 + $0xf0] sm:$0xff]
  %v1848 = vld [vmem:[#allocation2 + $0xf8] sm:$0xff]
  %v1849 = vld [vmem:[#allocation2 + $0x100] sm:$0xff]
  %v1850 = vld [vmem:[#allocation2 + $0x108] sm:$0xff]
  %v1851 = vld [vmem:[#allocation2 + $0x110] sm:$0xff]
  %v1852 = vld [vmem:[#allocation2 + $0x118] sm:$0xff]
  %v1853 = vld [vmem:[#allocation2 + $0x120] sm:$0xff]
  %v1854 = vld [vmem:[#allocation2 + $0x128] sm:$0xff]
  %v1855 = vld [vmem:[#allocation2 + $0x130] sm:$0xff]
  %v1856 = vld [vmem:[#allocation2 + $0x138] sm:$0xff]
  %v1857 = vld [vmem:[#allocation2 + $0x140] sm:$0xff]
  %v1858 = vld [vmem:[#allocation2 + $0x148] sm:$0xff]
  %v1859 = vld [vmem:[#allocation2 + $0x150] sm:$0xff]
  %v1860 = vld [vmem:[#allocation2 + $0x158] sm:$0xff]
  %v1861 = vld [vmem:[#allocation2 + $0x160] sm:$0xff]
  %v1862 = vld [vmem:[#allocation2 + $0x168] sm:$0xff]
  %v1863 = vld [vmem:[#allocation2 + $0x170] sm:$0xff]
  %v1864 = vld [vmem:[#allocation2 + $0x178] sm:$0xff]
  %v1865 = vld [vmem:[#allocation2 + $0x180] sm:$0xff]
  %v1866 = vld [vmem:[#allocation2 + $0x188] sm:$0xff]
  %v1867 = vld [vmem:[#allocation2 + $0x190] sm:$0xff]
  %v1868 = vld [vmem:[#allocation2 + $0x198] sm:$0xff]
  %v1869 = vld [vmem:[#allocation2 + $0x1a0] sm:$0xff]
  %v1870 = vld [vmem:[#allocation2 + $0x1a8] sm:$0xff]
  %v1871 = vld [vmem:[#allocation2 + $0x1b0] sm:$0xff]
  %v1872 = vld [vmem:[#allocation2 + $0x1b8] sm:$0xff]
  %v1873 = vld [vmem:[#allocation2 + $0x1c0] sm:$0xff]
  %v1874 = vld [vmem:[#allocation2 + $0x1c8] sm:$0xff]
  %v1875 = vld [vmem:[#allocation2 + $0x1d0] sm:$0xff]
  %v1876 = vld [vmem:[#allocation2 + $0x1d8] sm:$0xff]
  %v1877 = vld [vmem:[#allocation2 + $0x1e0] sm:$0xff]
  %v1878 = vld [vmem:[#allocation2 + $0x1e8] sm:$0xff]
  %v1879 = vld [vmem:[#allocation2 + $0x1f0] sm:$0xff]
  %v1880 = vld [vmem:[#allocation2 + $0x1f8] sm:$0xff]
  %v1881 = vld [vmem:[#allocation2 + $0x200] sm:$0xff]
  %v1882 = vld [vmem:[#allocation2 + $0x208] sm:$0xff]
  %v1883 = vld [vmem:[#allocation2 + $0x210] sm:$0xff]
  %v1884 = vld [vmem:[#allocation2 + $0x218] sm:$0xff]
  %v1885 = vld [vmem:[#allocation2 + $0x220] sm:$0xff]
  %v1886 = vld [vmem:[#allocation2 + $0x228] sm:$0xff]
  %v1887 = vld [vmem:[#allocation2 + $0x230] sm:$0xff]
  %v1888 = vld [vmem:[#allocation2 + $0x238] sm:$0xff]
  %v1889 = vld [vmem:[#allocation2 + $0x240] sm:$0xff]
  %v1890 = vld [vmem:[#allocation2 + $0x248] sm:$0xff]
  %v1891 = vld [vmem:[#allocation2 + $0x250] sm:$0xff]
  %v1892 = vld [vmem:[#allocation2 + $0x258] sm:$0xff]
  %v1893 = vld [vmem:[#allocation2 + $0x260] sm:$0xff]
  %v1894 = vld [vmem:[#allocation2 + $0x268] sm:$0xff]
  %v1895 = vld [vmem:[#allocation2 + $0x270] sm:$0xff]
  %v1896 = vld [vmem:[#allocation2 + $0x278] sm:$0xff]
  %v1897 = vld [vmem:[#allocation2 + $0x280] sm:$0xff]
  %v1898 = vld [vmem:[#allocation2 + $0x288] sm:$0xff]
  %v1899 = vld [vmem:[#allocation2 + $0x290] sm:$0xff]
  %v1900 = vld [vmem:[#allocation2 + $0x298] sm:$0xff]
  %v1901 = vld [vmem:[#allocation2 + $0x2a0] sm:$0xff]
  %v1902 = vld [vmem:[#allocation2 + $0x2a8] sm:$0xff]
  %v1903 = vld [vmem:[#allocation2 + $0x2b0] sm:$0xff]
  %v1904 = vld [vmem:[#allocation2 + $0x2b8] sm:$0xff]
  %v1905 = vld [vmem:[#allocation2 + $0x2c0] sm:$0xff]
  %v1906 = vld [vmem:[#allocation2 + $0x2c8] sm:$0xff]
  %v1907 = vld [vmem:[#allocation2 + $0x2d0] sm:$0xff]
  %v1908 = vld [vmem:[#allocation2 + $0x2d8] sm:$0xff]
  %v1909 = vld [vmem:[#allocation2 + $0x2e0] sm:$0xff]
  %v1910 = vld [vmem:[#allocation2 + $0x2e8] sm:$0xff]
  %v1911 = vld [vmem:[#allocation2 + $0x2f0] sm:$0xff]
  %v1912 = vld [vmem:[#allocation2 + $0x2f8] sm:$0xff]
  %v1913 = vld [vmem:[#allocation2 + $0x300] sm:$0xff]
  %v1914 = vld [vmem:[#allocation2 + $0x308] sm:$0xff]
  %v1915 = vld [vmem:[#allocation2 + $0x310] sm:$0xff]
  %v1916 = vld [vmem:[#allocation2 + $0x318] sm:$0xff]
  %v1917 = vld [vmem:[#allocation2 + $0x320] sm:$0xff]
  %v1918 = vld [vmem:[#allocation2 + $0x328] sm:$0xff]
  %v1919 = vld [vmem:[#allocation2 + $0x330] sm:$0xff]
  %v1920 = vld [vmem:[#allocation2 + $0x338] sm:$0xff]
  %v1921 = vld [vmem:[#allocation2 + $0x340] sm:$0xff]
  %v1922 = vld [vmem:[#allocation2 + $0x348] sm:$0xff]
  %v1923 = vld [vmem:[#allocation2 + $0x350] sm:$0xff]
  %v1924 = vld [vmem:[#allocation2 + $0x358] sm:$0xff]
  %v1925 = vld [vmem:[#allocation2 + $0x360] sm:$0xff]
  %v1926 = vld [vmem:[#allocation2 + $0x368] sm:$0xff]
  %v1927 = vld [vmem:[#allocation2 + $0x370] sm:$0xff]
  %v1928 = vld [vmem:[#allocation2 + $0x378] sm:$0xff]
  %v1929 = vld [vmem:[#allocation2 + $0x380] sm:$0xff]
  %v1930 = vld [vmem:[#allocation2 + $0x388] sm:$0xff]
  %v1931 = vld [vmem:[#allocation2 + $0x390] sm:$0xff]
  %v1932 = vld [vmem:[#allocation2 + $0x398] sm:$0xff]
  %v1933 = vld [vmem:[#allocation2 + $0x3a0] sm:$0xff]
  %v1934 = vld [vmem:[#allocation2 + $0x3a8] sm:$0xff]
  %v1935 = vld [vmem:[#allocation2 + $0x3b0] sm:$0xff]
  %v1936 = vld [vmem:[#allocation2 + $0x3b8] sm:$0xff]
  %v1937 = vld [vmem:[#allocation2 + $0x3c0] sm:$0xff]
  %v1938 = vld [vmem:[#allocation2 + $0x3c8] sm:$0xff]
  %v1939 = vld [vmem:[#allocation2 + $0x3d0] sm:$0xff]
  %v1940 = vld [vmem:[#allocation2 + $0x3d8] sm:$0xff]
  %v1941 = vld [vmem:[#allocation2 + $0x3e0] sm:$0xff]
  %v1942 = vld [vmem:[#allocation2 + $0x3e8] sm:$0xff]
  %v1943 = vld [vmem:[#allocation2 + $0x3f0] sm:$0xff]
  %v1944 = vld [vmem:[#allocation2 + $0x3f8] sm:$0xff]
  %v1945 = vld [vmem:[#allocation2 + $0x400] sm:$0xff]
  %v1946 = vld [vmem:[#allocation2 + $0x408] sm:$0xff]
  %v1947 = vld [vmem:[#allocation2 + $0x410] sm:$0xff]
  %v1948 = vld [vmem:[#allocation2 + $0x418] sm:$0xff]
  %v1949 = vld [vmem:[#allocation2 + $0x420] sm:$0xff]
  %v1950 = vld [vmem:[#allocation2 + $0x428] sm:$0xff]
  %v1951 = vld [vmem:[#allocation2 + $0x430] sm:$0xff]
  %v1952 = vld [vmem:[#allocation2 + $0x438] sm:$0xff]
  %v1953 = vld [vmem:[#allocation2 + $0x440] sm:$0xff]
  %v1954 = vld [vmem:[#allocation2 + $0x448] sm:$0xff]
  %v1955 = vld [vmem:[#allocation2 + $0x450] sm:$0xff]
  %v1956 = vld [vmem:[#allocation2 + $0x458] sm:$0xff]
  %v1957 = vld [vmem:[#allocation2 + $0x460] sm:$0xff]
  %v1958 = vld [vmem:[#allocation2 + $0x468] sm:$0xff]
  %v1959 = vld [vmem:[#allocation2 + $0x470] sm:$0xff]
  %v1960 = vld [vmem:[#allocation2 + $0x478] sm:$0xff]
  %v1961 = vld [vmem:[#allocation2 + $0x480] sm:$0xff]
  %v1962 = vld [vmem:[#allocation2 + $0x488] sm:$0xff]
  %v1963 = vld [vmem:[#allocation2 + $0x490] sm:$0xff]
  %v1964 = vld [vmem:[#allocation2 + $0x498] sm:$0xff]
  %v1965 = vld [vmem:[#allocation2 + $0x4a0] sm:$0xff]
  %v1966 = vld [vmem:[#allocation2 + $0x4a8] sm:$0xff]
  %v1967 = vld [vmem:[#allocation2 + $0x4b0] sm:$0xff]
  %v1968 = vld [vmem:[#allocation2 + $0x4b8] sm:$0xff]
  %v1969 = vld [vmem:[#allocation2 + $0x4c0] sm:$0xff]
  %v1970 = vld [vmem:[#allocation2 + $0x4c8] sm:$0xff]
  %v1971 = vld [vmem:[#allocation2 + $0x4d0] sm:$0xff]
  %v1972 = vld [vmem:[#allocation2 + $0x4d8] sm:$0xff]
  %v1973 = vld [vmem:[#allocation2 + $0x4e0] sm:$0xff]
  %v1974 = vld [vmem:[#allocation2 + $0x4e8] sm:$0xff]
  %v1975 = vld [vmem:[#allocation2 + $0x4f0] sm:$0xff]
  %v1976 = vld [vmem:[#allocation2 + $0x4f8] sm:$0xff]
  %v1977 = vld [vmem:[#allocation2 + $0x500] sm:$0xff]
  %v1978 = vld [vmem:[#allocation2 + $0x508] sm:$0xff]
  %v1979 = vld [vmem:[#allocation2 + $0x510] sm:$0xff]
  %v1980 = vld [vmem:[#allocation2 + $0x518] sm:$0xff]
  %v1981 = vld [vmem:[#allocation2 + $0x520] sm:$0xff]
  %v1982 = vld [vmem:[#allocation2 + $0x528] sm:$0xff]
  %v1983 = vld [vmem:[#allocation2 + $0x530] sm:$0xff]
  %v1984 = vld [vmem:[#allocation2 + $0x538] sm:$0xff]
  %v1985 = vld [vmem:[#allocation2 + $0x540] sm:$0xff]
  %v1986 = vld [vmem:[#allocation2 + $0x548] sm:$0xff]
  %v1987 = vld [vmem:[#allocation2 + $0x550] sm:$0xff]
  %v1988 = vld [vmem:[#allocation2 + $0x558] sm:$0xff]
  %v1989 = vld [vmem:[#allocation2 + $0x560] sm:$0xff]
  %v1990 = vld [vmem:[#allocation2 + $0x568] sm:$0xff]
  %v1991 = vld [vmem:[#allocation2 + $0x570] sm:$0xff]
  %v1992 = vld [vmem:[#allocation2 + $0x578] sm:$0xff]
  %v1993 = vld [vmem:[#allocation2 + $0x580] sm:$0xff]
  %v1994 = vld [vmem:[#allocation2 + $0x588] sm:$0xff]
  %v1995 = vld [vmem:[#allocation2 + $0x590] sm:$0xff]
  %v1996 = vld [vmem:[#allocation2 + $0x598] sm:$0xff]
  %v1997 = vld [vmem:[#allocation2 + $0x5a0] sm:$0xff]
  %v1998 = vld [vmem:[#allocation2 + $0x5a8] sm:$0xff]
  %v1999 = vld [vmem:[#allocation2 + $0x5b0] sm:$0xff]
  %v2000 = vld [vmem:[#allocation2 + $0x5b8] sm:$0xff]
  %v2001 = vld [vmem:[#allocation2 + $0x5c0] sm:$0xff]
  %v2002 = vld [vmem:[#allocation2 + $0x5c8] sm:$0xff]
  %v2003 = vld [vmem:[#allocation2 + $0x5d0] sm:$0xff]
  %v2004 = vld [vmem:[#allocation2 + $0x5d8] sm:$0xff]
  %v2005 = vld [vmem:[#allocation2 + $0x5e0] sm:$0xff]
  %v2006 = vld [vmem:[#allocation2 + $0x5e8] sm:$0xff]
  %v2007 = vld [vmem:[#allocation2 + $0x5f0] sm:$0xff]
  %v2008 = vld [vmem:[#allocation2 + $0x5f8] sm:$0xff]
  %v2009 = vld [vmem:[#allocation2 + $0x600] sm:$0xff]
  %v2010 = vld [vmem:[#allocation2 + $0x608] sm:$0xff]
  %v2011 = vld [vmem:[#allocation2 + $0x610] sm:$0xff]
  %v2012 = vld [vmem:[#allocation2 + $0x618] sm:$0xff]
  %v2013 = vld [vmem:[#allocation2 + $0x620] sm:$0xff]
  %v2014 = vld [vmem:[#allocation2 + $0x628] sm:$0xff]
  %v2015 = vld [vmem:[#allocation2 + $0x630] sm:$0xff]
  %v2016 = vld [vmem:[#allocation2 + $0x638] sm:$0xff]
  %v2017 = vld [vmem:[#allocation2 + $0x640] sm:$0xff]
  %v2018 = vld [vmem:[#allocation2 + $0x648] sm:$0xff]
  %v2019 = vld [vmem:[#allocation2 + $0x650] sm:$0xff]
  %v2020 = vld [vmem:[#allocation2 + $0x658] sm:$0xff]
  %v2021 = vld [vmem:[#allocation2 + $0x660] sm:$0xff]
  %v2022 = vld [vmem:[#allocation2 + $0x668] sm:$0xff]
  %v2023 = vld [vmem:[#allocation2 + $0x670] sm:$0xff]
  %v2024 = vld [vmem:[#allocation2 + $0x678] sm:$0xff]
  %v2025 = vld [vmem:[#allocation2 + $0x680] sm:$0xff]
  %v2026 = vld [vmem:[#allocation2 + $0x688] sm:$0xff]
  %v2027 = vld [vmem:[#allocation2 + $0x690] sm:$0xff]
  %v2028 = vld [vmem:[#allocation2 + $0x698] sm:$0xff]
  %v2029 = vld [vmem:[#allocation2 + $0x6a0] sm:$0xff]
  %v2030 = vld [vmem:[#allocation2 + $0x6a8] sm:$0xff]
  %v2031 = vld [vmem:[#allocation2 + $0x6b0] sm:$0xff]
  %v2032 = vld [vmem:[#allocation2 + $0x6b8] sm:$0xff]
  %v2033 = vld [vmem:[#allocation2 + $0x6c0] sm:$0xff]
  %v2034 = vld [vmem:[#allocation2 + $0x6c8] sm:$0xff]
  %v2035 = vld [vmem:[#allocation2 + $0x6d0] sm:$0xff]
  %v2036 = vld [vmem:[#allocation2 + $0x6d8] sm:$0xff]
  %v2037 = vld [vmem:[#allocation2 + $0x6e0] sm:$0xff]
  %v2038 = vld [vmem:[#allocation2 + $0x6e8] sm:$0xff]
  %v2039 = vld [vmem:[#allocation2 + $0x6f0] sm:$0xff]
  %v2040 = vld [vmem:[#allocation2 + $0x6f8] sm:$0xff]
  %v2041 = vld [vmem:[#allocation2 + $0x700] sm:$0xff]
  %v2042 = vld [vmem:[#allocation2 + $0x708] sm:$0xff]
  %v2043 = vld [vmem:[#allocation2 + $0x710] sm:$0xff]
  %v2044 = vld [vmem:[#allocation2 + $0x718] sm:$0xff]
  %v2045 = vld [vmem:[#allocation2 + $0x720] sm:$0xff]
  %v2046 = vld [vmem:[#allocation2 + $0x728] sm:$0xff]
  %v2047 = vld [vmem:[#allocation2 + $0x730] sm:$0xff]
  %v2048 = vld [vmem:[#allocation2 + $0x738] sm:$0xff]
  %v2049 = vld [vmem:[#allocation2 + $0x740] sm:$0xff]
  %v2050 = vld [vmem:[#allocation2 + $0x748] sm:$0xff]
  %v2051 = vld [vmem:[#allocation2 + $0x750] sm:$0xff]
  %v2052 = vld [vmem:[#allocation2 + $0x758] sm:$0xff]
  %v2053 = vld [vmem:[#allocation2 + $0x760] sm:$0xff]
  %v2054 = vld [vmem:[#allocation2 + $0x768] sm:$0xff]
  %v2055 = vld [vmem:[#allocation2 + $0x770] sm:$0xff]
  %v2056 = vld [vmem:[#allocation2 + $0x778] sm:$0xff]
  %v2057 = vld [vmem:[#allocation2 + $0x780] sm:$0xff]
  %v2058 = vld [vmem:[#allocation2 + $0x788] sm:$0xff]
  %v2059 = vld [vmem:[#allocation2 + $0x790] sm:$0xff]
  %v2060 = vld [vmem:[#allocation2 + $0x798] sm:$0xff]
  %v2061 = vld [vmem:[#allocation2 + $0x7a0] sm:$0xff]
  %v2062 = vld [vmem:[#allocation2 + $0x7a8] sm:$0xff]
  %v2063 = vld [vmem:[#allocation2 + $0x7b0] sm:$0xff]
  %v2064 = vld [vmem:[#allocation2 + $0x7b8] sm:$0xff]
  %v2065 = vld [vmem:[#allocation2 + $0x7c0] sm:$0xff]
  %v2066 = vld [vmem:[#allocation2 + $0x7c8] sm:$0xff]
  %v2067 = vld [vmem:[#allocation2 + $0x7d0] sm:$0xff]
  %v2068 = vld [vmem:[#allocation2 + $0x7d8] sm:$0xff]
  %v2069 = vld [vmem:[#allocation2 + $0x7e0] sm:$0xff]
  %v2070 = vld [vmem:[#allocation2 + $0x7e8] sm:$0xff]
  %v2071 = vld [vmem:[#allocation2 + $0x7f0] sm:$0xff]
  %v2072 = vld [vmem:[#allocation2 + $0x7f8] sm:$0xff]
  %v2073 = vld [vmem:[#allocation2 + $0x800] sm:$0xff]
  %v2074 = vld [vmem:[#allocation2 + $0x808] sm:$0xff]
  %v2075 = vld [vmem:[#allocation2 + $0x810] sm:$0xff]
  %v2076 = vld [vmem:[#allocation2 + $0x818] sm:$0xff]
  %v2077 = vld [vmem:[#allocation2 + $0x820] sm:$0xff]
  %v2078 = vld [vmem:[#allocation2 + $0x828] sm:$0xff]
  %v2079 = vld [vmem:[#allocation2 + $0x830] sm:$0xff]
  %v2080 = vld [vmem:[#allocation2 + $0x838] sm:$0xff]
  %v2081 = vld [vmem:[#allocation2 + $0x840] sm:$0xff]
  %v2082 = vld [vmem:[#allocation2 + $0x848] sm:$0xff]
  %v2083 = vld [vmem:[#allocation2 + $0x850] sm:$0xff]
  %v2084 = vld [vmem:[#allocation2 + $0x858] sm:$0xff]
  %v2085 = vld [vmem:[#allocation2 + $0x860] sm:$0xff]
  %v2086 = vld [vmem:[#allocation2 + $0x868] sm:$0xff]
  %v2087 = vld [vmem:[#allocation2 + $0x870] sm:$0xff]
  %v2088 = vld [vmem:[#allocation2 + $0x878] sm:$0xff]
  %v2089 = vld [vmem:[#allocation2 + $0x880] sm:$0xff]
  %v2090 = vld [vmem:[#allocation2 + $0x888] sm:$0xff]
  %v2091 = vld [vmem:[#allocation2 + $0x890] sm:$0xff]
  %v2092 = vld [vmem:[#allocation2 + $0x898] sm:$0xff]
  %v2093 = vld [vmem:[#allocation2 + $0x8a0] sm:$0xff]
  %v2094 = vld [vmem:[#allocation2 + $0x8a8] sm:$0xff]
  %v2095 = vld [vmem:[#allocation2 + $0x8b0] sm:$0xff]
  %v2096 = vld [vmem:[#allocation2 + $0x8b8] sm:$0xff]
  %v2097 = vld [vmem:[#allocation2 + $0x8c0] sm:$0xff]
  %v2098 = vld [vmem:[#allocation2 + $0x8c8] sm:$0xff]
  %v2099 = vld [vmem:[#allocation2 + $0x8d0] sm:$0xff]
  %v2100 = vld [vmem:[#allocation2 + $0x8d8] sm:$0xff]
  %v2101 = vld [vmem:[#allocation2 + $0x8e0] sm:$0xff]
  %v2102 = vld [vmem:[#allocation2 + $0x8e8] sm:$0xff]
  %v2103 = vld [vmem:[#allocation2 + $0x8f0] sm:$0xff]
  %v2104 = vld [vmem:[#allocation2 + $0x8f8] sm:$0xff]
  %v2105 = vld [vmem:[#allocation2 + $0x900] sm:$0xff]
  %v2106 = vld [vmem:[#allocation2 + $0x908] sm:$0xff]
  %v2107 = vld [vmem:[#allocation2 + $0x910] sm:$0xff]
  %v2108 = vld [vmem:[#allocation2 + $0x918] sm:$0xff]
  %v2109 = vld [vmem:[#allocation2 + $0x920] sm:$0xff]
  %v2110 = vld [vmem:[#allocation2 + $0x928] sm:$0xff]
  %v2111 = vld [vmem:[%s2] sm:$0xff]
  %2113 = vset.pattern.permute.xlu0 0
  %2114 = vperm.xlu0 %2113, %v2111
  %v2115 = vpop.permute.xlu0 %2114
  %v2118 = vsel %vm685, %v1816, 0
  %2120 = vmatprep.subr.mxu0 %v1818
  %2121 = vmatpush1.msra.mxu0 %v1817
  %2122 = vmatprep.subr.mxu0 %v1824
  %2123 = vmatpush1.msra.mxu0 %v1823
  %2124 = vmatprep.subr.mxu0 %v1830
  %2125 = vmatpush1.msra.mxu0 %v1829
  %2126 = vmatprep.subr.mxu0 %v1836
  %2127 = vmatpush1.msra.mxu0 %v1835
  %2128 = vmatprep.subr.mxu0 %v1842
  %2129 = vmatpush1.msra.mxu0 %v1841
  %2130 = vmatprep.subr.mxu0 %v1848
  %2131 = vmatpush1.msra.mxu0 %v1847
  %2132 = vmatprep.subr.mxu0 %v1854
  %2133 = vmatpush1.msra.mxu0 %v1853
  %2134 = vmatprep.subr.mxu0 %v1860
  %2135 = vmatpush1.msra.mxu0 %v1859
  %2136 = vmatprep.subr.mxu0 %v1866
  %2137 = vmatpush1.msra.mxu0 %v1865
  %2138 = vmatprep.subr.mxu0 %v1872
  %2139 = vmatpush1.msra.mxu0 %v1871
  %2140 = vmatprep.subr.mxu0 %v1878
  %2141 = vmatpush1.msra.mxu0 %v1877
  %2142 = vmatprep.subr.mxu0 %v1884
  %2143 = vmatpush1.msra.mxu0 %v1883
  %2144 = vmatprep.subr.mxu0 %v1890
  %2145 = vmatpush1.msra.mxu0 %v1889
  %2146 = vmatprep.subr.mxu0 %v1896
  %2147 = vmatpush1.msra.mxu0 %v1895
  %2148 = vmatprep.subr.mxu0 %v1902
  %2149 = vmatpush1.msra.mxu0 %v1901
  %2150 = vmatprep.subr.mxu0 %v1908
  %2151 = vmatpush1.msra.mxu0 %v1907
  %2152 = vmatprep.subr.mxu0 %v1914
  %2153 = vmatpush1.msra.mxu0 %v1913
  %2154 = vmatprep.subr.mxu0 %v1920
  %2155 = vmatpush1.msra.mxu0 %v1919
  %2156 = vmatprep.subr.mxu0 %v1926
  %2157 = vmatpush1.msra.mxu0 %v1925
  %2158 = vmatprep.subr.mxu0 %v1932
  %2159 = vmatpush1.msra.mxu0 %v1931
  %2160 = vmatprep.subr.mxu0 %v1938
  %2161 = vmatpush1.msra.mxu0 %v1937
  %2162 = vmatprep.subr.mxu0 %v1944
  %2163 = vmatpush1.msra.mxu0 %v1943
  %2164 = vmatprep.subr.mxu0 %v1950
  %2165 = vmatpush1.msra.mxu0 %v1949
  %2166 = vmatprep.subr.mxu0 %v1956
  %2167 = vmatpush1.msra.mxu0 %v1955
  %2168 = vmatprep.subr.mxu0 %v1962
  %2169 = vmatpush1.msra.mxu0 %v1961
  %2170 = vmatprep.subr.mxu0 %v1968
  %2171 = vmatpush1.msra.mxu0 %v1967
  %2172 = vmatprep.subr.mxu0 %v1974
  %2173 = vmatpush1.msra.mxu0 %v1973
  %2174 = vmatprep.subr.mxu0 %v1980
  %2175 = vmatpush1.msra.mxu0 %v1979
  %2176 = vmatprep.subr.mxu0 %v1986
  %2177 = vmatpush1.msra.mxu0 %v1985
  %2178 = vmatprep.subr.mxu0 %v1992
  %2179 = vmatpush1.msra.mxu0 %v1991
  %2180 = vmatprep.subr.mxu0 %v1998
  %2181 = vmatpush1.msra.mxu0 %v1997
  %2182 = vmatprep.subr.mxu0 %v2004
  %2183 = vmatpush1.msra.mxu0 %v2003
  %2184 = vmatprep.mubr.f32.mxu0 %v1814
  %2185 = vmatmul.mubr.f32.gmra.mrb[0].mxu0 %v1813
  %v2186 = vpop.f32.mrb[0].mxu0
  %v2187 = vadd.f32 %v2115, %v2186
  %v2188 = vpop.f32.mrb[0].mxu0
  %v2189 = vadd.f32 %v2115, %v2188
  %2190 = vdwg.mxu0
  %2191 = vmatprep.subr.mxu0 %v2010
  %2192 = vmatpush1.msra.mxu0 %v2009
  %2193 = vmatprep.subr.mxu0 %v2016
  %2194 = vmatpush1.msra.mxu0 %v2015
  %2195 = vmatprep.subr.mxu0 %v2022
  %2196 = vmatpush1.msra.mxu0 %v2021
  %2197 = vmatprep.subr.mxu0 %v2028
  %2198 = vmatpush1.msra.mxu0 %v2027
  %2199 = vmatprep.subr.mxu0 %v2034
  %2200 = vmatpush1.msra.mxu0 %v2033
  %2201 = vmatprep.subr.mxu0 %v2040
  %2202 = vmatpush1.msra.mxu0 %v2039
  %2203 = vmatprep.subr.mxu0 %v2046
  %2204 = vmatpush1.msra.mxu0 %v2045
  %2205 = vmatprep.subr.mxu0 %v2052
  %2206 = vmatpush1.msra.mxu0 %v2051
  %2207 = vmatprep.subr.mxu0 %v2058
  %2208 = vmatpush1.msra.mxu0 %v2057
  %2209 = vmatprep.subr.mxu0 %v2064
  %2210 = vmatpush1.msra.mxu0 %v2063
  %2211 = vmatprep.subr.mxu0 %v2070
  %2212 = vmatpush1.msra.mxu0 %v2069
  %2213 = vmatprep.subr.mxu0 %v2076
  %2214 = vmatpush1.msra.mxu0 %v2075
  %2215 = vmatprep.subr.mxu0 %v2082
  %2216 = vmatpush1.msra.mxu0 %v2081
  %2217 = vmatprep.subr.mxu0 %v2088
  %2218 = vmatpush1.msra.mxu0 %v2087
  %2219 = vmatprep.subr.mxu0 %v2094
  %2220 = vmatpush1.msra.mxu0 %v2093
  %2221 = vmatprep.subr.mxu0 %v2100
  %2222 = vmatpush1.msra.mxu0 %v2099
  %2223 = vmatprep.subr.mxu0 %v2106
  %2224 = vmatpush1.msra.mxu0 %v2105
  %2225 = vmatprep.subr.mxu0 0.0
  %2226 = vmatpush1.msra.mxu0 0.0
  %2227 = vmatprep.subr.mxu0 0.0
  %2228 = vmatpush1.msra.mxu0 0.0
  %2229 = vmatprep.subr.mxu0 0.0
  %2230 = vmatpush1.msra.mxu0 0.0
  %2231 = vmatprep.subr.mxu0 0.0
  %2232 = vmatpush1.msra.mxu0 0.0
  %2233 = vmatprep.subr.mxu0 0.0
  %2234 = vmatpush1.msra.mxu0 0.0
  %2235 = vmatprep.subr.mxu0 0.0
  %2236 = vmatpush1.msra.mxu0 0.0
  %2237 = vmatprep.subr.mxu0 0.0
  %2238 = vmatpush1.msra.mxu0 0.0
  %2239 = vmatprep.subr.mxu0 0.0
  %2240 = vmatpush1.msra.mxu0 0.0
  %2241 = vmatprep.subr.mxu0 0.0
  %2242 = vmatpush1.msra.mxu0 0.0
  %2243 = vmatprep.subr.mxu0 0.0
  %2244 = vmatpush1.msra.mxu0 0.0
  %2245 = vmatprep.subr.mxu0 0.0
  %2246 = vmatpush1.msra.mxu0 0.0
  %2247 = vmatprep.subr.mxu0 0.0
  %2248 = vmatpush1.msra.mxu0 0.0
  %2249 = vmatprep.subr.mxu0 0.0
  %2250 = vmatpush1.msra.mxu0 0.0
  %2251 = vmatprep.subr.mxu0 0.0
  %2252 = vmatpush1.msra.mxu0 0.0
  %2253 = vmatprep.subr.mxu0 0.0
  %2254 = vmatpush1.msra.mxu0 0.0
  %2255 = vmatprep.mubr.f32.mxu0 %v2118
  %2256 = vmatmul.mubr.f32.gmra.mrb[0].mxu0 %v1815
  %v2257 = vpop.f32.mrb[0].mxu0
  %v2258 = vadd.f32 %v2187, %v2257
  %v2259 = vpop.f32.mrb[0].mxu0
  %v2260 = vadd.f32 %v2189, %v2259
  %2261 = vdwg.mxu0
  %2262 = vmatprep.subr.mxu0 %v1820
  %2263 = vmatpush1.msra.mxu0 %v1819
  %2264 = vmatprep.subr.mxu0 %v1826
  %2265 = vmatpush1.msra.mxu0 %v1825
  %2266 = vmatprep.subr.mxu0 %v1832
  %2267 = vmatpush1.msra.mxu0 %v1831
  %2268 = vmatprep.subr.mxu0 %v1838
  %2269 = vmatpush1.msra.mxu0 %v1837
  %2270 = vmatprep.subr.mxu0 %v1844
  %2271 = vmatpush1.msra.mxu0 %v1843
  %2272 = vmatprep.subr.mxu0 %v1850
  %2273 = vmatpush1.msra.mxu0 %v1849
  %2274 = vmatprep.subr.mxu0 %v1856
  %2275 = vmatpush1.msra.mxu0 %v1855
  %2276 = vmatprep.subr.mxu0 %v1862
  %2277 = vmatpush1.msra.mxu0 %v1861
  %2278 = vmatprep.subr.mxu0 %v1868
  %2279 = vmatpush1.msra.mxu0 %v1867
  %2280 = vmatprep.subr.mxu0 %v1874
  %2281 = vmatpush1.msra.mxu0 %v1873
  %2282 = vmatprep.subr.mxu0 %v1880
  %2283 = vmatpush1.msra.mxu0 %v1879
  %2284 = vmatprep.subr.mxu0 %v1886
  %2285 = vmatpush1.msra.mxu0 %v1885
  %2286 = vmatprep.subr.mxu0 %v1892
  %2287 = vmatpush1.msra.mxu0 %v1891
  %2288 = vmatprep.subr.mxu0 %v1898
  %2289 = vmatpush1.msra.mxu0 %v1897
  %2290 = vmatprep.subr.mxu0 %v1904
  %2291 = vmatpush1.msra.mxu0 %v1903
  %2292 = vmatprep.subr.mxu0 %v1910
  %2293 = vmatpush1.msra.mxu0 %v1909
  %2294 = vmatprep.subr.mxu0 %v1916
  %2295 = vmatpush1.msra.mxu0 %v1915
  %2296 = vmatprep.subr.mxu0 %v1922
  %2297 = vmatpush1.msra.mxu0 %v1921
  %2298 = vmatprep.subr.mxu0 %v1928
  %2299 = vmatpush1.msra.mxu0 %v1927
  %2300 = vmatprep.subr.mxu0 %v1934
  %2301 = vmatpush1.msra.mxu0 %v1933
  %2302 = vmatprep.subr.mxu0 %v1940
  %2303 = vmatpush1.msra.mxu0 %v1939
  %2304 = vmatprep.subr.mxu0 %v1946
  %2305 = vmatpush1.msra.mxu0 %v1945
  %2306 = vmatprep.subr.mxu0 %v1952
  %2307 = vmatpush1.msra.mxu0 %v1951
  %2308 = vmatprep.subr.mxu0 %v1958
  %2309 = vmatpush1.msra.mxu0 %v1957
  %2310 = vmatprep.subr.mxu0 %v1964
  %2311 = vmatpush1.msra.mxu0 %v1963
  %2312 = vmatprep.subr.mxu0 %v1970
  %2313 = vmatpush1.msra.mxu0 %v1969
  %2314 = vmatprep.subr.mxu0 %v1976
  %2315 = vmatpush1.msra.mxu0 %v1975
  %2316 = vmatprep.subr.mxu0 %v1982
  %2317 = vmatpush1.msra.mxu0 %v1981
  %2318 = vmatprep.subr.mxu0 %v1988
  %2319 = vmatpush1.msra.mxu0 %v1987
  %2320 = vmatprep.subr.mxu0 %v1994
  %2321 = vmatpush1.msra.mxu0 %v1993
  %2322 = vmatprep.subr.mxu0 %v2000
  %2323 = vmatpush1.msra.mxu0 %v1999
  %2324 = vmatprep.subr.mxu0 %v2006
  %2325 = vmatpush1.msra.mxu0 %v2005
  %2326 = vmatprep.mubr.f32.mxu0 %v1814
  %2327 = vmatmul.mubr.f32.gmra.mrb[0].mxu0 %v1813
  %v2328 = vpop.f32.mrb[0].mxu0
  %v2329 = vadd.f32 %v2115, %v2328
  %v2330 = vpop.f32.mrb[0].mxu0
  %v2331 = vadd.f32 %v2115, %v2330
  %2332 = vdwg.mxu0
  %2333 = vmatprep.subr.mxu0 %v2012
  %2334 = vmatpush1.msra.mxu0 %v2011
  %2335 = vmatprep.subr.mxu0 %v2018
  %2336 = vmatpush1.msra.mxu0 %v2017
  %2337 = vmatprep.subr.mxu0 %v2024
  %2338 = vmatpush1.msra.mxu0 %v2023
  %2339 = vmatprep.subr.mxu0 %v2030
  %2340 = vmatpush1.msra.mxu0 %v2029
  %2341 = vmatprep.subr.mxu0 %v2036
  %2342 = vmatpush1.msra.mxu0 %v2035
  %2343 = vmatprep.subr.mxu0 %v2042
  %2344 = vmatpush1.msra.mxu0 %v2041
  %2345 = vmatprep.subr.mxu0 %v2048
  %2346 = vmatpush1.msra.mxu0 %v2047
  %2347 = vmatprep.subr.mxu0 %v2054
  %2348 = vmatpush1.msra.mxu0 %v2053
  %2349 = vmatprep.subr.mxu0 %v2060
  %2350 = vmatpush1.msra.mxu0 %v2059
  %2351 = vmatprep.subr.mxu0 %v2066
  %2352 = vmatpush1.msra.mxu0 %v2065
  %2353 = vmatprep.subr.mxu0 %v2072
  %2354 = vmatpush1.msra.mxu0 %v2071
  %2355 = vmatprep.subr.mxu0 %v2078
  %2356 = vmatpush1.msra.mxu0 %v2077
  %2357 = vmatprep.subr.mxu0 %v2084
  %2358 = vmatpush1.msra.mxu0 %v2083
  %2359 = vmatprep.subr.mxu0 %v2090
  %2360 = vmatpush1.msra.mxu0 %v2089
  %2361 = vmatprep.subr.mxu0 %v2096
  %2362 = vmatpush1.msra.mxu0 %v2095
  %2363 = vmatprep.subr.mxu0 %v2102
  %2364 = vmatpush1.msra.mxu0 %v2101
  %2365 = vmatprep.subr.mxu0 %v2108
  %2366 = vmatpush1.msra.mxu0 %v2107
  %2367 = vmatprep.subr.mxu0 0.0
  %2368 = vmatpush1.msra.mxu0 0.0
  %2369 = vmatprep.subr.mxu0 0.0
  %2370 = vmatpush1.msra.mxu0 0.0
  %2371 = vmatprep.subr.mxu0 0.0
  %2372 = vmatpush1.msra.mxu0 0.0
  %2373 = vmatprep.subr.mxu0 0.0
  %2374 = vmatpush1.msra.mxu0 0.0
  %2375 = vmatprep.subr.mxu0 0.0
  %2376 = vmatpush1.msra.mxu0 0.0
  %2377 = vmatprep.subr.mxu0 0.0
  %2378 = vmatpush1.msra.mxu0 0.0
  %2379 = vmatprep.subr.mxu0 0.0
  %2380 = vmatpush1.msra.mxu0 0.0
  %2381 = vmatprep.subr.mxu0 0.0
  %2382 = vmatpush1.msra.mxu0 0.0
  %2383 = vmatprep.subr.mxu0 0.0
  %2384 = vmatpush1.msra.mxu0 0.0
  %2385 = vmatprep.subr.mxu0 0.0
  %2386 = vmatpush1.msra.mxu0 0.0
  %2387 = vmatprep.subr.mxu0 0.0
  %2388 = vmatpush1.msra.mxu0 0.0
  %2389 = vmatprep.subr.mxu0 0.0
  %2390 = vmatpush1.msra.mxu0 0.0
  %2391 = vmatprep.subr.mxu0 0.0
  %2392 = vmatpush1.msra.mxu0 0.0
  %2393 = vmatprep.subr.mxu0 0.0
  %2394 = vmatpush1.msra.mxu0 0.0
  %2395 = vmatprep.subr.mxu0 0.0
  %2396 = vmatpush1.msra.mxu0 0.0
  %2397 = vmatprep.mubr.f32.mxu0 %v2118
  %2398 = vmatmul.mubr.f32.gmra.mrb[0].mxu0 %v1815
  %v2399 = vpop.f32.mrb[0].mxu0
  %v2400 = vadd.f32 %v2329, %v2399
  %v2401 = vpop.f32.mrb[0].mxu0
  %v2402 = vadd.f32 %v2331, %v2401
  %2403 = vdwg.mxu0
  %2404 = vmatprep.subr.mxu0 %v1822
  %2405 = vmatpush1.msra.mxu0 %v1821
  %2406 = vmatprep.subr.mxu0 %v1828
  %2407 = vmatpush1.msra.mxu0 %v1827
  %2408 = vmatprep.subr.mxu0 %v1834
  %2409 = vmatpush1.msra.mxu0 %v1833
  %2410 = vmatprep.subr.mxu0 %v1840
  %2411 = vmatpush1.msra.mxu0 %v1839
  %2412 = vmatprep.subr.mxu0 %v1846
  %2413 = vmatpush1.msra.mxu0 %v1845
  %2414 = vmatprep.subr.mxu0 %v1852
  %2415 = vmatpush1.msra.mxu0 %v1851
  %2416 = vmatprep.subr.mxu0 %v1858
  %2417 = vmatpush1.msra.mxu0 %v1857
  %2418 = vmatprep.subr.mxu0 %v1864
  %2419 = vmatpush1.msra.mxu0 %v1863
  %2420 = vmatprep.subr.mxu0 %v1870
  %2421 = vmatpush1.msra.mxu0 %v1869
  %2422 = vmatprep.subr.mxu0 %v1876
  %2423 = vmatpush1.msra.mxu0 %v1875
  %2424 = vmatprep.subr.mxu0 %v1882
  %2425 = vmatpush1.msra.mxu0 %v1881
  %2426 = vmatprep.subr.mxu0 %v1888
  %2427 = vmatpush1.msra.mxu0 %v1887
  %2428 = vmatprep.subr.mxu0 %v1894
  %2429 = vmatpush1.msra.mxu0 %v1893
  %2430 = vmatprep.subr.mxu0 %v1900
  %2431 = vmatpush1.msra.mxu0 %v1899
  %2432 = vmatprep.subr.mxu0 %v1906
  %2433 = vmatpush1.msra.mxu0 %v1905
  %2434 = vmatprep.subr.mxu0 %v1912
  %2435 = vmatpush1.msra.mxu0 %v1911
  %2436 = vmatprep.subr.mxu0 %v1918
  %2437 = vmatpush1.msra.mxu0 %v1917
  %2438 = vmatprep.subr.mxu0 %v1924
  %2439 = vmatpush1.msra.mxu0 %v1923
  %2440 = vmatprep.subr.mxu0 %v1930
  %2441 = vmatpush1.msra.mxu0 %v1929
  %2442 = vmatprep.subr.mxu0 %v1936
  %2443 = vmatpush1.msra.mxu0 %v1935
  %2444 = vmatprep.subr.mxu0 %v1942
  %2445 = vmatpush1.msra.mxu0 %v1941
  %2446 = vmatprep.subr.mxu0 %v1948
  %2447 = vmatpush1.msra.mxu0 %v1947
  %2448 = vmatprep.subr.mxu0 %v1954
  %2449 = vmatpush1.msra.mxu0 %v1953
  %2450 = vmatprep.subr.mxu0 %v1960
  %2451 = vmatpush1.msra.mxu0 %v1959
  %2452 = vmatprep.subr.mxu0 %v1966
  %2453 = vmatpush1.msra.mxu0 %v1965
  %2454 = vmatprep.subr.mxu0 %v1972
  %2455 = vmatpush1.msra.mxu0 %v1971
  %2456 = vmatprep.subr.mxu0 %v1978
  %2457 = vmatpush1.msra.mxu0 %v1977
  %2458 = vmatprep.subr.mxu0 %v1984
  %2459 = vmatpush1.msra.mxu0 %v1983
  %2460 = vmatprep.subr.mxu0 %v1990
  %2461 = vmatpush1.msra.mxu0 %v1989
  %2462 = vmatprep.subr.mxu0 %v1996
  %2463 = vmatpush1.msra.mxu0 %v1995
  %2464 = vmatprep.subr.mxu0 %v2002
  %2465 = vmatpush1.msra.mxu0 %v2001
  %2466 = vmatprep.subr.mxu0 %v2008
  %2467 = vmatpush1.msra.mxu0 %v2007
  %2468 = vmatprep.mubr.f32.mxu0 %v1814
  %2469 = vmatmul.mubr.f32.gmra.mrb[0].mxu0 %v1813
  %v2470 = vpop.f32.mrb[0].mxu0
  %v2471 = vadd.f32 %v2115, %v2470
  %v2472 = vpop.f32.mrb[0].mxu0
  %v2473 = vadd.f32 %v2115, %v2472
  %2474 = vdwg.mxu0
  %2475 = vmatprep.subr.mxu0 %v2014
  %2476 = vmatpush1.msra.mxu0 %v2013
  %2477 = vmatprep.subr.mxu0 %v2020
  %2478 = vmatpush1.msra.mxu0 %v2019
  %2479 = vmatprep.subr.mxu0 %v2026
  %2480 = vmatpush1.msra.mxu0 %v2025
  %2481 = vmatprep.subr.mxu0 %v2032
  %2482 = vmatpush1.msra.mxu0 %v2031
  %2483 = vmatprep.subr.mxu0 %v2038
  %2484 = vmatpush1.msra.mxu0 %v2037
  %2485 = vmatprep.subr.mxu0 %v2044
  %2486 = vmatpush1.msra.mxu0 %v2043
  %2487 = vmatprep.subr.mxu0 %v2050
  %2488 = vmatpush1.msra.mxu0 %v2049
  %2489 = vmatprep.subr.mxu0 %v2056
  %2490 = vmatpush1.msra.mxu0 %v2055
  %2491 = vmatprep.subr.mxu0 %v2062
  %2492 = vmatpush1.msra.mxu0 %v2061
  %2493 = vmatprep.subr.mxu0 %v2068
  %2494 = vmatpush1.msra.mxu0 %v2067
  %2495 = vmatprep.subr.mxu0 %v2074
  %2496 = vmatpush1.msra.mxu0 %v2073
  %2497 = vmatprep.subr.mxu0 %v2080
  %2498 = vmatpush1.msra.mxu0 %v2079
  %2499 = vmatprep.subr.mxu0 %v2086
  %2500 = vmatpush1.msra.mxu0 %v2085
  %2501 = vmatprep.subr.mxu0 %v2092
  %2502 = vmatpush1.msra.mxu0 %v2091
  %2503 = vmatprep.subr.mxu0 %v2098
  %2504 = vmatpush1.msra.mxu0 %v2097
  %2505 = vmatprep.subr.mxu0 %v2104
  %2506 = vmatpush1.msra.mxu0 %v2103
  %2507 = vmatprep.subr.mxu0 %v2110
  %2508 = vmatpush1.msra.mxu0 %v2109
  %2509 = vmatprep.subr.mxu0 0.0
  %2510 = vmatpush1.msra.mxu0 0.0
  %2511 = vmatprep.subr.mxu0 0.0
  %2512 = vmatpush1.msra.mxu0 0.0
  %2513 = vmatprep.subr.mxu0 0.0
  %2514 = vmatpush1.msra.mxu0 0.0
  %2515 = vmatprep.subr.mxu0 0.0
  %2516 = vmatpush1.msra.mxu0 0.0
  %2517 = vmatprep.subr.mxu0 0.0
  %2518 = vmatpush1.msra.mxu0 0.0
  %2519 = vmatprep.subr.mxu0 0.0
  %2520 = vmatpush1.msra.mxu0 0.0
  %2521 = vmatprep.subr.mxu0 0.0
  %2522 = vmatpush1.msra.mxu0 0.0
  %2523 = vmatprep.subr.mxu0 0.0
  %2524 = vmatpush1.msra.mxu0 0.0
  %2525 = vmatprep.subr.mxu0 0.0
  %2526 = vmatpush1.msra.mxu0 0.0
  %2527 = vmatprep.subr.mxu0 0.0
  %2528 = vmatpush1.msra.mxu0 0.0
  %2529 = vmatprep.subr.mxu0 0.0
  %2530 = vmatpush1.msra.mxu0 0.0
  %2531 = vmatprep.subr.mxu0 0.0
  %2532 = vmatpush1.msra.mxu0 0.0
  %2533 = vmatprep.subr.mxu0 0.0
  %2534 = vmatpush1.msra.mxu0 0.0
  %2535 = vmatprep.subr.mxu0 0.0
  %2536 = vmatpush1.msra.mxu0 0.0
  %2537 = vmatprep.subr.mxu0 0.0
  %2538 = vmatpush1.msra.mxu0 0.0
  %2539 = vmatprep.mubr.f32.mxu0 %v2118
  %2540 = vmatmul.mubr.f32.gmra.mrb[0].mxu0 %v1815
  %v2541 = vpop.f32.mrb[0].mxu0
  %v2542 = vadd.f32 %v2471, %v2541
  %v2543 = vpop.f32.mrb[0].mxu0
  %v2544 = vadd.f32 %v2473, %v2543
  %2545 = vdwg.mxu0
  %2546 = vst [vmem:[%s3] sm:$0xff] %v2258
  %2547 = vst [vmem:[%s3 + $0x8] sm:$0xff] %v2260
  %2548 = vst [vmem:[%s3 + $0x10] sm:$0xff] %v2400
  %2549 = vst [vmem:[%s3 + $0x18] sm:$0xff] %v2402
  %2550 = vst [vmem:[%s3 + $0x20] sm:$0xff] %v2542
  %2551 = vst [vmem:[%s3 + $0x28] sm:$0xff] %v2544
  // Predicated region
  $region14: #{gcn_forward.1} parent=0 // pred_check
    _
  $region15: #{gcn_forward.1} parent=0 // pred_check_branch
    %2553 = sbr.rel (0) target = $region17
  $region16: #{gcn_forward.1} parent=0 // pred_region
    _
  $region17: #{gcn_forward.1} parent=0 // pred_fallthru
    _
  // Predicated region
  $region18: #{gcn_forward.1} parent=0 // pred_check
    _
  $region19: #{gcn_forward.1} parent=0 // pred_check_branch
    %2555 = sbr.rel (0) target = $region21
  $region20: #{gcn_forward.1} parent=0 // pred_region
    _
  $region21: #{gcn_forward.1} parent=0 // pred_fallthru
    _

</llo_original>
